<compile_context>
chip_gen: v7x
topology: tpu7x:2x2x1
jax: 0.10.0
libtpu: 0.0.40
codegen_flags: <defaults>
</compile_context>

<pallas_src>
import math
import functools

import jax
import jax.numpy as jnp
from jax import lax
from jax.experimental import pallas as pl
from jax.experimental.pallas import tpu as pltpu

# Make the XLA reference and in-kernel dots use full f32 matmul passes (tight check).
jax.config.update("jax_default_matmul_precision", "highest")


def _bert_attention_kernel(x_q_ref, x_kv_ref, mask_ref,
                           wq_ref, bq_ref, wkv_ref, bkv_ref,
                           wo_ref, bo_ref, gamma_ref, beta_ref,
                           *refs, num_heads, head_dim, hidden, ln_eps, with_probs):
    # x_q_ref:  (1, tq, H) query-tile rows of hidden_states (also the residual input)
    # x_kv_ref: (1, S,  H) full-sequence hidden_states (for K/V projection)
    # mask_ref: (1, 1, 1, S) additive attention mask (0 / -10000)
    if with_probs:
        out_ref, probs_ref, ctx_ref = refs
    else:
        out_ref, ctx_ref = refs
        probs_ref = None

    x_q = x_q_ref[0]               # (tq, H) f32
    x_kv = x_kv_ref[0]             # (S, H)  f32
    mask = mask_ref[0, 0]          # (1, S)  f32, broadcasts over query rows

    inv_sqrt_d = 1.0 / math.sqrt(head_dim)

    # Q projection for this query tile; fold the 1/sqrt(d) scale into Q (equivalent to
    # dividing the scores, but touches tq*H elements instead of NH*tq*S).
    q = (jnp.dot(x_q, wq_ref[...], preferred_element_type=jnp.float32)
         + bq_ref[...]) * inv_sqrt_d                              # (tq, H)

    # Fused K/V projection for the full sequence: one (S,H) x (H,2H) MXU matmul.
    kv = (jnp.dot(x_kv, wkv_ref[...], preferred_element_type=jnp.float32)
          + bkv_ref[...])                                          # (S, 2H)

    nt = (((1,), (1,)), ((), ()))   # contract last dims: (tq,d).(S,d) -> (tq,S)  (q @ k^T)

    # Static unrolled loop over heads; context of each head is written into the (tq,H)
    # VMEM scratch at its lane offset so the output projection can be one K=H matmul.
    # TODO(synk): pair heads (2*head_dim = 128 lanes) for fully lane-aligned slices/stores.
    for h in range(num_heads):
        lo = h * head_dim
        hi = lo + head_dim
        qh = q[:, lo:hi]                               # (tq, d)
        kh = kv[:, lo:hi]                              # (S, d)
        vh = kv[:, hidden + lo:hidden + hi]            # (S, d)

        scores = lax.dot_general(qh, kh, nt,
                                 preferred_element_type=jnp.float32)   # (tq, S)
        scores = scores + mask

        m = jnp.max(scores, axis=-1, keepdims=True)
        e = jnp.exp(scores - m)
        denom = jnp.sum(e, axis=-1, keepdims=True)
        p = e * pl.reciprocal(denom, approx=False)     # softmax (EUP reciprocal, exact)
        # TODO(synk): nn.Dropout is identity at inference; training-mode dropout not implemented.
        if with_probs:
            probs_ref[0, h, :, :] = p.astype(probs_ref.dtype)

        ctx_ref[:, lo:hi] = jnp.dot(p, vh, preferred_element_type=jnp.float32)

    # Single K=H output projection + bias + residual + TF-style LayerNorm (eps inside sqrt).
    o = jnp.dot(ctx_ref[...], wo_ref[...], preferred_element_type=jnp.float32)  # (tq, H)
    y = o + bo_ref[...] + x_q
    u = jnp.mean(y, axis=-1, keepdims=True)
    d = y - u
    s = jnp.mean(d * d, axis=-1, keepdims=True)
    yn = d * lax.rsqrt(s + ln_eps)
    out_ref[0] = (gamma_ref[...] * yn + beta_ref[...]).astype(out_ref.dtype)


def _choose_q_tile(S):
    # One tile for moderate S; otherwise tile queries at <=256 rows to bound the live set.
    if S <= 256:
        return S
    for tq in (256, 128, 64, 32, 16, 8):
        if S % tq == 0:
            return tq
    return S


def _vmem_limit_bytes(S, H, NH, tq, with_probs):
    f32 = 4
    params = (4 * H * H + 6 * H) * f32                       # resident weights/biases/LN
    stream_in = 2 * (tq * H + S * H + S) * f32               # x_q / x_kv / mask (double-buffered)
    stream_out = 2 * tq * H * f32                            # out block (double-buffered)
    if with_probs:
        stream_out += 2 * NH * tq * S * f32                  # probs block (double-buffered)
    live = (2 * tq * H + 2 * S * H + 3 * tq * S + 4 * tq * H) * f32   # q, kv, scores, LN temps
    est = int((2 * params + stream_in + stream_out + live) * 1.5) + (4 << 20)
    # Floor above v5e's 16 MiB scoped default, cap at v7x's 64 MiB physical VMEM.
    return max(32 << 20, min(est, 64 << 20))


def bert_attention(hidden_states, attention_mask,
                   wq, bq, wk, bk, wv, bv, wo, bo, gamma, beta,
                   *, num_heads, ln_eps=1e-12, return_probs=True):
    """hidden_states: (B, S, H); attention_mask: additive, broadcastable to (B, 1, 1, S);
    weights in PyTorch nn.Linear layout (out_features, in_features).
    Returns (attention_output, attention_probs) — probs is None if return_probs=False."""
    B, S, H = hidden_states.shape
    assert H % num_heads == 0
    head_dim = H // num_heads
    tq = _choose_q_tile(S)
    qt = S // tq

    # One-time wrapper-side layout prep (no per-grid-step in-kernel transposes):
    wq_t = wq.T                                           # (H, H)  (in, out)
    wkv_t = jnp.concatenate([wk.T, wv.T], axis=1)         # (H, 2H) fused K/V weights
    wo_t = wo.T                                           # (H, H)
    bq2 = bq.reshape(1, H)
    bkv2 = jnp.concatenate([bk, bv]).reshape(1, 2 * H)
    bo2 = bo.reshape(1, H)
    gamma2, beta2 = gamma.reshape(1, H), beta.reshape(1, H)
    mask4 = jnp.broadcast_to(attention_mask, (B, 1, 1, S)).astype(jnp.float32)

    kernel = functools.partial(_bert_attention_kernel,
                               num_heads=num_heads, head_dim=head_dim, hidden=H,
                               ln_eps=ln_eps, with_probs=return_probs)

    def resident(shape):
        # Full-array block, constant index_map -> DMA'd once, resident across the grid.
        return pl.BlockSpec(shape, lambda b, qi: (0,) * len(shape))

    in_specs = [
        pl.BlockSpec((1, tq, H), lambda b, qi: (b, qi, 0)),      # hidden_states (query tile)
        pl.BlockSpec((1, S, H), lambda b, qi: (b, 0, 0)),        # hidden_states (full, K/V); qi-constant -> no re-DMA per tile
        pl.BlockSpec((1, 1, 1, S), lambda b, qi: (b, 0, 0, 0)),  # attention mask
        resident((H, H)), resident((1, H)),                      # Wq^T, bq
        resident((H, 2 * H)), resident((1, 2 * H)),              # [Wk^T | Wv^T], [bk | bv]
        resident((H, H)), resident((1, H)),                      # Wo^T, bo
        resident((1, H)), resident((1, H)),                      # gamma, beta
    ]

    out_shape = [jax.ShapeDtypeStruct((B, S, H), hidden_states.dtype)]
    out_specs = [pl.BlockSpec((1, tq, H), lambda b, qi: (b, qi, 0))]
    if return_probs:
        out_shape.append(jax.ShapeDtypeStruct((B, num_heads, S, S), jnp.float32))
        out_specs.append(pl.BlockSpec((1, num_heads, tq, S),
                                      lambda b, qi: (b, 0, qi, 0)))

    results = pl.pallas_call(
        kernel,
        out_shape=tuple(out_shape),
        grid_spec=pltpu.PrefetchScalarGridSpec(
            num_scalar_prefetch=0,
            grid=(B, qt),
            in_specs=in_specs,
            out_specs=tuple(out_specs),
            scratch_shapes=[pltpu.VMEM((tq, H), jnp.float32)],   # per-tile context buffer
        ),
        compiler_params=pltpu.CompilerParams(
            dimension_semantics=("parallel", "parallel"),   # batch x query-tiles across TCs
            vmem_limit_bytes=_vmem_limit_bytes(S, H, num_heads, tq, return_probs),
        ),
    )(hidden_states, hidden_states, mask4,
      wq_t, bq2, wkv_t, bkv2, wo_t, bo2, gamma2, beta2)

    if return_probs:
        out, probs = results
        return out, probs
    (out,) = results
    return out, None


if __name__ == "__main__":
    B, S, H, NH = 2, 8, 32, 4
    HD = H // NH

    key = jax.random.PRNGKey(0)
    ks = jax.random.split(key, 10)
    x = jax.random.normal(ks[0], (B, S, H), dtype=jnp.float32)

    bound = 1.0 / math.sqrt(H)

    def linear_params(kw, kb):
        w = jax.random.uniform(kw, (H, H), minval=-bound, maxval=bound, dtype=jnp.float32)
        b = jax.random.uniform(kb, (H,), minval=-bound, maxval=bound, dtype=jnp.float32)
        return w, b

    wq, bq = linear_params(ks[1], ks[2])
    wk, bk = linear_params(ks[3], ks[4])
    wv, bv = linear_params(ks[5], ks[6])
    wo, bo = linear_params(ks[7], ks[8])
    gamma = jnp.ones((H,), jnp.float32)
    beta = jnp.zeros((H,), jnp.float32)

    # Standard BERT extended additive mask: 0 for valid keys, -10000 for padding.
    lengths = jnp.array([6, 8], dtype=jnp.int32)
    key_pos = jnp.arange(S)[None, :]
    mask2d = jnp.where(key_pos < lengths[:, None], 0.0, -10000.0).astype(jnp.float32)
    attention_mask = mask2d.reshape(B, 1, 1, S)

    out, probs = bert_attention(x, attention_mask,
                                wq, bq, wk, bk, wv, bv, wo, bo, gamma, beta,
                                num_heads=NH)
    out, probs = jax.block_until_ready((out, probs))

    # Fast path: no attention_probs HBM writeback.
    out_np, probs_np = bert_attention(x, attention_mask,
                                      wq, bq, wk, bk, wv, bv, wo, bo, gamma, beta,
                                      num_heads=NH, return_probs=False)
    out_np = jax.block_until_ready(out_np)
    assert probs_np is None

    # Pure-JAX reference mirroring the PyTorch module (eval mode).
    def ref_fn(x, mask4):
        q = x @ wq.T + bq
        k = x @ wk.T + bk
        v = x @ wv.T + bv

        def split(t):
            return t.reshape(B, S, NH, HD).transpose(0, 2, 1, 3)

        qh, kh, vh = split(q), split(k), split(v)
        scores = jnp.einsum("bhqd,bhkd->bhqk", qh, kh) / math.sqrt(HD)
        scores = scores + mask4
        p = jax.nn.softmax(scores, axis=-1)
        ctx = jnp.einsum("bhqk,bhkd->bhqd", p, vh)
        ctx = ctx.transpose(0, 2, 1, 3).reshape(B, S, H)
        o = ctx @ wo.T + bo
        y = o + x
        u = y.mean(-1, keepdims=True)
        s = ((y - u) ** 2).mean(-1, keepdims=True)
        yn = (y - u) / jnp.sqrt(s + 1e-12)
        return gamma * yn + beta, p

    ref_out, ref_probs = ref_fn(x, attention_mask)

    assert out.shape == (B, S, H)
    assert probs.shape == (B, NH, S, S)
    assert jnp.allclose(out, ref_out, atol=1e-4, rtol=1e-4), "attention_output mismatch"
    assert jnp.allclose(out_np, ref_out, atol=1e-4, rtol=1e-4), "no-probs output mismatch"
    assert jnp.allclose(probs, ref_probs, atol=1e-4, rtol=1e-4), "attention_probs mismatch"
    print("KERNEL_OK")
</pallas_src>

<mosaic_0001>
module attributes {stable_mosaic.version = 11 : i64} {
  func.func @_bert_attention_kernel(%arg0: i32, %arg1: i32, %arg2: memref<1x8x32xf32, #tpu.memory_space<vmem>>, %arg3: memref<1x8x32xf32, #tpu.memory_space<vmem>>, %arg4: memref<1x1x1x8xf32, #tpu.memory_space<vmem>>, %arg5: memref<32x32xf32, #tpu.memory_space<vmem>>, %arg6: memref<1x32xf32, #tpu.memory_space<vmem>>, %arg7: memref<32x64xf32, #tpu.memory_space<vmem>>, %arg8: memref<1x64xf32, #tpu.memory_space<vmem>>, %arg9: memref<32x32xf32, #tpu.memory_space<vmem>>, %arg10: memref<1x32xf32, #tpu.memory_space<vmem>>, %arg11: memref<1x32xf32, #tpu.memory_space<vmem>>, %arg12: memref<1x32xf32, #tpu.memory_space<vmem>>, %arg13: memref<1x8x32xf32, #tpu.memory_space<vmem>>, %arg14: memref<1x4x8x8xf32, #tpu.memory_space<vmem>>, %arg15: memref<8x32xf32, #tpu.memory_space<vmem>>) attributes {dimension_semantics = [#tpu.dimension_semantics<parallel>, #tpu.dimension_semantics<parallel>], iteration_bounds = array<i64: 2, 1>, scalar_prefetch = 0 : i64, scratch_operands = 1 : i64, tpu.core_type = #tpu.core_type<tc>, window_params = [{transform_indices = @transform_0, window_bounds = array<i64: 1, 8, 32>}, {transform_indices = @transform_1, window_bounds = array<i64: 1, 8, 32>}, {transform_indices = @transform_2, window_bounds = array<i64: 1, 1, 1, 8>}, {pipeline_mode = #tpu.pipeline_mode<synchronous>, transform_indices = @transform_3, window_bounds = array<i64: 32, 32>}, {pipeline_mode = #tpu.pipeline_mode<synchronous>, transform_indices = @transform_4, window_bounds = array<i64: 1, 32>}, {pipeline_mode = #tpu.pipeline_mode<synchronous>, transform_indices = @transform_5, window_bounds = array<i64: 32, 64>}, {pipeline_mode = #tpu.pipeline_mode<synchronous>, transform_indices = @transform_6, window_bounds = array<i64: 1, 64>}, {pipeline_mode = #tpu.pipeline_mode<synchronous>, transform_indices = @transform_7, window_bounds = array<i64: 32, 32>}, {pipeline_mode = #tpu.pipeline_mode<synchronous>, transform_indices = @transform_8, window_bounds = array<i64: 1, 32>}, {pipeline_mode = #tpu.pipeline_mode<synchronous>, transform_indices = @transform_9, window_bounds = array<i64: 1, 32>}, {pipeline_mode = #tpu.pipeline_mode<synchronous>, transform_indices = @transform_10, window_bounds = array<i64: 1, 32>}, {transform_indices = @transform_11, window_bounds = array<i64: 1, 8, 32>}, {transform_indices = @transform_12, window_bounds = array<i64: 1, 4, 8, 8>}]} {
    %c0 = arith.constant 0 : index
    %c0_0 = arith.constant 0 : index
    %c0_1 = arith.constant 0 : index
    %0 = vector.load %arg2[%c0, %c0_0, %c0_1] : memref<1x8x32xf32, #tpu.memory_space<vmem>>, vector<1x8x32xf32>
    %1 = vector.shape_cast %0 : vector<1x8x32xf32> to vector<8x32xf32>
    %c0_2 = arith.constant 0 : index
    %c0_3 = arith.constant 0 : index
    %c0_4 = arith.constant 0 : index
    %2 = vector.load %arg3[%c0_2, %c0_3, %c0_4] : memref<1x8x32xf32, #tpu.memory_space<vmem>>, vector<1x8x32xf32>
    %3 = vector.shape_cast %2 : vector<1x8x32xf32> to vector<8x32xf32>
    %c0_5 = arith.constant 0 : index
    %c0_6 = arith.constant 0 : index
    %c0_7 = arith.constant 0 : index
    %c0_8 = arith.constant 0 : index
    %4 = vector.load %arg4[%c0_5, %c0_6, %c0_7, %c0_8] : memref<1x1x1x8xf32, #tpu.memory_space<vmem>>, vector<1x1x1x8xf32>
    %5 = vector.shape_cast %4 : vector<1x1x1x8xf32> to vector<1x8xf32>
    %c0_9 = arith.constant 0 : index
    %c0_10 = arith.constant 0 : index
    %6 = vector.load %arg5[%c0_9, %c0_10] : memref<32x32xf32, #tpu.memory_space<vmem>>, vector<32x32xf32>
    %cst = arith.constant dense<0.000000e+00> : vector<8x32xf32>
    %7 = tpu.matmul %1, %6, %cst {dimension_numbers = #tpu.dot_dimension_numbers<[1], [0], [0], [1], [0, 0, 1, 1], [], []>, precision = #tpu.contract_precision<fp32>} : vector<8x32xf32>, vector<32x32xf32>, vector<8x32xf32> -> vector<8x32xf32>
    %c0_11 = arith.constant 0 : index
    %c0_12 = arith.constant 0 : index
    %8 = vector.load %arg6[%c0_11, %c0_12] : memref<1x32xf32, #tpu.memory_space<vmem>>, vector<1x32xf32>
    %9 = vector.broadcast %8 : vector<1x32xf32> to vector<8x32xf32>
    %10 = arith.addf %7, %9 : vector<8x32xf32>
    %cst_13 = arith.constant 0.353553385 : f32
    %11 = vector.broadcast %cst_13 : f32 to vector<8x32xf32>
    %12 = arith.mulf %10, %11 : vector<8x32xf32>
    %c0_14 = arith.constant 0 : index
    %c0_15 = arith.constant 0 : index
    %13 = vector.load %arg7[%c0_14, %c0_15] : memref<32x64xf32, #tpu.memory_space<vmem>>, vector<32x64xf32>
    %cst_16 = arith.constant dense<0.000000e+00> : vector<8x64xf32>
    %14 = tpu.matmul %3, %13, %cst_16 {dimension_numbers = #tpu.dot_dimension_numbers<[1], [0], [0], [1], [0, 0, 1, 1], [], []>, precision = #tpu.contract_precision<fp32>} : vector<8x32xf32>, vector<32x64xf32>, vector<8x64xf32> -> vector<8x64xf32>
    %c0_17 = arith.constant 0 : index
    %c0_18 = arith.constant 0 : index
    %15 = vector.load %arg8[%c0_17, %c0_18] : memref<1x64xf32, #tpu.memory_space<vmem>>, vector<1x64xf32>
    %16 = vector.broadcast %15 : vector<1x64xf32> to vector<8x64xf32>
    %17 = arith.addf %14, %16 : vector<8x64xf32>
    %18 = vector.extract_strided_slice %12 {offsets = [0, 0], sizes = [8, 8], strides = [1, 1]} : vector<8x32xf32> to vector<8x8xf32>
    %19 = vector.extract_strided_slice %17 {offsets = [0, 0], sizes = [8, 8], strides = [1, 1]} : vector<8x64xf32> to vector<8x8xf32>
    %20 = vector.extract_strided_slice %17 {offsets = [0, 32], sizes = [8, 8], strides = [1, 1]} : vector<8x64xf32> to vector<8x8xf32>
    %cst_19 = arith.constant dense<0.000000e+00> : vector<8x8xf32>
    %21 = tpu.matmul %18, %19, %cst_19 {dimension_numbers = #tpu.dot_dimension_numbers<[1], [1], [0], [0], [0, 0, 1, 0], [], []>, precision = #tpu.contract_precision<fp32>} : vector<8x8xf32>, vector<8x8xf32>, vector<8x8xf32> -> vector<8x8xf32>
    %22 = vector.broadcast %5 : vector<1x8xf32> to vector<8x8xf32>
    %23 = arith.addf %21, %22 : vector<8x8xf32>
    %cst_20 = arith.constant dense<0xFF800000> : vector<8xf32>
    %24 = vector.multi_reduction <maximumf>, %23, %cst_20 [1] : vector<8x8xf32> to vector<8xf32>
    %25 = vector.shape_cast %24 : vector<8xf32> to vector<8x1xf32>
    %26 = vector.broadcast %25 : vector<8x1xf32> to vector<8x8xf32>
    %27 = arith.subf %23, %26 : vector<8x8xf32>
    %28 = math.exp %27 : vector<8x8xf32>
    %cst_21 = arith.constant dense<0.000000e+00> : vector<8xf32>
    %29 = vector.multi_reduction <add>, %28, %cst_21 [1] : vector<8x8xf32> to vector<8xf32>
    %30 = vector.shape_cast %29 : vector<8xf32> to vector<8x1xf32>
    %31 = tpu.reciprocal %30 : vector<8x1xf32> -> vector<8x1xf32>
    %32 = vector.broadcast %31 : vector<8x1xf32> to vector<8x8xf32>
    %33 = arith.mulf %28, %32 : vector<8x8xf32>
    %c0_22 = arith.constant 0 : index
    %c0_23 = arith.constant 0 : index
    %c0_24 = arith.constant 0 : index
    %c0_25 = arith.constant 0 : index
    %34 = vector.load %arg14[%c0_22, %c0_23, %c0_24, %c0_25] : memref<1x4x8x8xf32, #tpu.memory_space<vmem>>, vector<1x1x8x8xf32>
    %35 = vector.shape_cast %34 : vector<1x1x8x8xf32> to vector<8x8xf32>
    %36 = vector.shape_cast %33 : vector<8x8xf32> to vector<1x1x8x8xf32>
    tpu.vector_store %arg14[%c0_22, %c0_23, %c0_24, %c0_25], %36 {strides = array<i32>} : memref<1x4x8x8xf32, #tpu.memory_space<vmem>>, vector<1x1x8x8xf32>,
    %cst_26 = arith.constant dense<0.000000e+00> : vector<8x8xf32>
    %37 = tpu.matmul %33, %20, %cst_26 {dimension_numbers = #tpu.dot_dimension_numbers<[1], [0], [0], [1], [0, 0, 1, 1], [], []>, precision = #tpu.contract_precision<fp32>} : vector<8x8xf32>, vector<8x8xf32>, vector<8x8xf32> -> vector<8x8xf32>
    %c0_27 = arith.constant 0 : index
    %c0_28 = arith.constant 0 : index
    %38 = vector.load %arg15[%c0_27, %c0_28] : memref<8x32xf32, #tpu.memory_space<vmem>>, vector<8x8xf32>
    tpu.vector_store %arg15[%c0_27, %c0_28], %37 {strides = array<i32>} : memref<8x32xf32, #tpu.memory_space<vmem>>, vector<8x8xf32>,
    %39 = vector.extract_strided_slice %12 {offsets = [0, 8], sizes = [8, 8], strides = [1, 1]} : vector<8x32xf32> to vector<8x8xf32>
    %40 = vector.extract_strided_slice %17 {offsets = [0, 8], sizes = [8, 8], strides = [1, 1]} : vector<8x64xf32> to vector<8x8xf32>
    %41 = vector.extract_strided_slice %17 {offsets = [0, 40], sizes = [8, 8], strides = [1, 1]} : vector<8x64xf32> to vector<8x8xf32>
    %cst_29 = arith.constant dense<0.000000e+00> : vector<8x8xf32>
    %42 = tpu.matmul %39, %40, %cst_29 {dimension_numbers = #tpu.dot_dimension_numbers<[1], [1], [0], [0], [0, 0, 1, 0], [], []>, precision = #tpu.contract_precision<fp32>} : vector<8x8xf32>, vector<8x8xf32>, vector<8x8xf32> -> vector<8x8xf32>
    %43 = vector.broadcast %5 : vector<1x8xf32> to vector<8x8xf32>
    %44 = arith.addf %42, %43 : vector<8x8xf32>
    %cst_30 = arith.constant dense<0xFF800000> : vector<8xf32>
    %45 = vector.multi_reduction <maximumf>, %44, %cst_30 [1] : vector<8x8xf32> to vector<8xf32>
    %46 = vector.shape_cast %45 : vector<8xf32> to vector<8x1xf32>
    %47 = vector.broadcast %46 : vector<8x1xf32> to vector<8x8xf32>
    %48 = arith.subf %44, %47 : vector<8x8xf32>
    %49 = math.exp %48 : vector<8x8xf32>
    %cst_31 = arith.constant dense<0.000000e+00> : vector<8xf32>
    %50 = vector.multi_reduction <add>, %49, %cst_31 [1] : vector<8x8xf32> to vector<8xf32>
    %51 = vector.shape_cast %50 : vector<8xf32> to vector<8x1xf32>
    %52 = tpu.reciprocal %51 : vector<8x1xf32> -> vector<8x1xf32>
    %53 = vector.broadcast %52 : vector<8x1xf32> to vector<8x8xf32>
    %54 = arith.mulf %49, %53 : vector<8x8xf32>
    %c0_32 = arith.constant 0 : index
    %c1 = arith.constant 1 : index
    %c0_33 = arith.constant 0 : index
    %c0_34 = arith.constant 0 : index
    %55 = vector.load %arg14[%c0_32, %c1, %c0_33, %c0_34] : memref<1x4x8x8xf32, #tpu.memory_space<vmem>>, vector<1x1x8x8xf32>
    %56 = vector.shape_cast %55 : vector<1x1x8x8xf32> to vector<8x8xf32>
    %57 = vector.shape_cast %54 : vector<8x8xf32> to vector<1x1x8x8xf32>
    tpu.vector_store %arg14[%c0_32, %c1, %c0_33, %c0_34], %57 {strides = array<i32>} : memref<1x4x8x8xf32, #tpu.memory_space<vmem>>, vector<1x1x8x8xf32>,
    %cst_35 = arith.constant dense<0.000000e+00> : vector<8x8xf32>
    %58 = tpu.matmul %54, %41, %cst_35 {dimension_numbers = #tpu.dot_dimension_numbers<[1], [0], [0], [1], [0, 0, 1, 1], [], []>, precision = #tpu.contract_precision<fp32>} : vector<8x8xf32>, vector<8x8xf32>, vector<8x8xf32> -> vector<8x8xf32>
    %c0_36 = arith.constant 0 : index
    %c8 = arith.constant 8 : index
    %59 = vector.load %arg15[%c0_36, %c8] : memref<8x32xf32, #tpu.memory_space<vmem>>, vector<8x8xf32>
    tpu.vector_store %arg15[%c0_36, %c8], %58 {strides = array<i32>} : memref<8x32xf32, #tpu.memory_space<vmem>>, vector<8x8xf32>,
    %60 = vector.extract_strided_slice %12 {offsets = [0, 16], sizes = [8, 8], strides = [1, 1]} : vector<8x32xf32> to vector<8x8xf32>
    %61 = vector.extract_strided_slice %17 {offsets = [0, 16], sizes = [8, 8], strides = [1, 1]} : vector<8x64xf32> to vector<8x8xf32>
    %62 = vector.extract_strided_slice %17 {offsets = [0, 48], sizes = [8, 8], strides = [1, 1]} : vector<8x64xf32> to vector<8x8xf32>
    %cst_37 = arith.constant dense<0.000000e+00> : vector<8x8xf32>
    %63 = tpu.matmul %60, %61, %cst_37 {dimension_numbers = #tpu.dot_dimension_numbers<[1], [1], [0], [0], [0, 0, 1, 0], [], []>, precision = #tpu.contract_precision<fp32>} : vector<8x8xf32>, vector<8x8xf32>, vector<8x8xf32> -> vector<8x8xf32>
    %64 = vector.broadcast %5 : vector<1x8xf32> to vector<8x8xf32>
    %65 = arith.addf %63, %64 : vector<8x8xf32>
    %cst_38 = arith.constant dense<0xFF800000> : vector<8xf32>
    %66 = vector.multi_reduction <maximumf>, %65, %cst_38 [1] : vector<8x8xf32> to vector<8xf32>
    %67 = vector.shape_cast %66 : vector<8xf32> to vector<8x1xf32>
    %68 = vector.broadcast %67 : vector<8x1xf32> to vector<8x8xf32>
    %69 = arith.subf %65, %68 : vector<8x8xf32>
    %70 = math.exp %69 : vector<8x8xf32>
    %cst_39 = arith.constant dense<0.000000e+00> : vector<8xf32>
    %71 = vector.multi_reduction <add>, %70, %cst_39 [1] : vector<8x8xf32> to vector<8xf32>
    %72 = vector.shape_cast %71 : vector<8xf32> to vector<8x1xf32>
    %73 = tpu.reciprocal %72 : vector<8x1xf32> -> vector<8x1xf32>
    %74 = vector.broadcast %73 : vector<8x1xf32> to vector<8x8xf32>
    %75 = arith.mulf %70, %74 : vector<8x8xf32>
    %c0_40 = arith.constant 0 : index
    %c2 = arith.constant 2 : index
    %c0_41 = arith.constant 0 : index
    %c0_42 = arith.constant 0 : index
    %76 = vector.load %arg14[%c0_40, %c2, %c0_41, %c0_42] : memref<1x4x8x8xf32, #tpu.memory_space<vmem>>, vector<1x1x8x8xf32>
    %77 = vector.shape_cast %76 : vector<1x1x8x8xf32> to vector<8x8xf32>
    %78 = vector.shape_cast %75 : vector<8x8xf32> to vector<1x1x8x8xf32>
    tpu.vector_store %arg14[%c0_40, %c2, %c0_41, %c0_42], %78 {strides = array<i32>} : memref<1x4x8x8xf32, #tpu.memory_space<vmem>>, vector<1x1x8x8xf32>,
    %cst_43 = arith.constant dense<0.000000e+00> : vector<8x8xf32>
    %79 = tpu.matmul %75, %62, %cst_43 {dimension_numbers = #tpu.dot_dimension_numbers<[1], [0], [0], [1], [0, 0, 1, 1], [], []>, precision = #tpu.contract_precision<fp32>} : vector<8x8xf32>, vector<8x8xf32>, vector<8x8xf32> -> vector<8x8xf32>
    %c0_44 = arith.constant 0 : index
    %c16 = arith.constant 16 : index
    %80 = vector.load %arg15[%c0_44, %c16] : memref<8x32xf32, #tpu.memory_space<vmem>>, vector<8x8xf32>
    tpu.vector_store %arg15[%c0_44, %c16], %79 {strides = array<i32>} : memref<8x32xf32, #tpu.memory_space<vmem>>, vector<8x8xf32>,
    %81 = vector.extract_strided_slice %12 {offsets = [0, 24], sizes = [8, 8], strides = [1, 1]} : vector<8x32xf32> to vector<8x8xf32>
    %82 = vector.extract_strided_slice %17 {offsets = [0, 24], sizes = [8, 8], strides = [1, 1]} : vector<8x64xf32> to vector<8x8xf32>
    %83 = vector.extract_strided_slice %17 {offsets = [0, 56], sizes = [8, 8], strides = [1, 1]} : vector<8x64xf32> to vector<8x8xf32>
    %cst_45 = arith.constant dense<0.000000e+00> : vector<8x8xf32>
    %84 = tpu.matmul %81, %82, %cst_45 {dimension_numbers = #tpu.dot_dimension_numbers<[1], [1], [0], [0], [0, 0, 1, 0], [], []>, precision = #tpu.contract_precision<fp32>} : vector<8x8xf32>, vector<8x8xf32>, vector<8x8xf32> -> vector<8x8xf32>
    %85 = vector.broadcast %5 : vector<1x8xf32> to vector<8x8xf32>
    %86 = arith.addf %84, %85 : vector<8x8xf32>
    %cst_46 = arith.constant dense<0xFF800000> : vector<8xf32>
    %87 = vector.multi_reduction <maximumf>, %86, %cst_46 [1] : vector<8x8xf32> to vector<8xf32>
    %88 = vector.shape_cast %87 : vector<8xf32> to vector<8x1xf32>
    %89 = vector.broadcast %88 : vector<8x1xf32> to vector<8x8xf32>
    %90 = arith.subf %86, %89 : vector<8x8xf32>
    %91 = math.exp %90 : vector<8x8xf32>
    %cst_47 = arith.constant dense<0.000000e+00> : vector<8xf32>
    %92 = vector.multi_reduction <add>, %91, %cst_47 [1] : vector<8x8xf32> to vector<8xf32>
    %93 = vector.shape_cast %92 : vector<8xf32> to vector<8x1xf32>
    %94 = tpu.reciprocal %93 : vector<8x1xf32> -> vector<8x1xf32>
    %95 = vector.broadcast %94 : vector<8x1xf32> to vector<8x8xf32>
    %96 = arith.mulf %91, %95 : vector<8x8xf32>
    %c0_48 = arith.constant 0 : index
    %c3 = arith.constant 3 : index
    %c0_49 = arith.constant 0 : index
    %c0_50 = arith.constant 0 : index
    %97 = vector.load %arg14[%c0_48, %c3, %c0_49, %c0_50] : memref<1x4x8x8xf32, #tpu.memory_space<vmem>>, vector<1x1x8x8xf32>
    %98 = vector.shape_cast %97 : vector<1x1x8x8xf32> to vector<8x8xf32>
    %99 = vector.shape_cast %96 : vector<8x8xf32> to vector<1x1x8x8xf32>
    tpu.vector_store %arg14[%c0_48, %c3, %c0_49, %c0_50], %99 {strides = array<i32>} : memref<1x4x8x8xf32, #tpu.memory_space<vmem>>, vector<1x1x8x8xf32>,
    %cst_51 = arith.constant dense<0.000000e+00> : vector<8x8xf32>
    %100 = tpu.matmul %96, %83, %cst_51 {dimension_numbers = #tpu.dot_dimension_numbers<[1], [0], [0], [1], [0, 0, 1, 1], [], []>, precision = #tpu.contract_precision<fp32>} : vector<8x8xf32>, vector<8x8xf32>, vector<8x8xf32> -> vector<8x8xf32>
    %c0_52 = arith.constant 0 : index
    %c24 = arith.constant 24 : index
    %101 = vector.load %arg15[%c0_52, %c24] : memref<8x32xf32, #tpu.memory_space<vmem>>, vector<8x8xf32>
    tpu.vector_store %arg15[%c0_52, %c24], %100 {strides = array<i32>} : memref<8x32xf32, #tpu.memory_space<vmem>>, vector<8x8xf32>,
    %c0_53 = arith.constant 0 : index
    %c0_54 = arith.constant 0 : index
    %102 = vector.load %arg15[%c0_53, %c0_54] : memref<8x32xf32, #tpu.memory_space<vmem>>, vector<8x32xf32>
    %c0_55 = arith.constant 0 : index
    %c0_56 = arith.constant 0 : index
    %103 = vector.load %arg9[%c0_55, %c0_56] : memref<32x32xf32, #tpu.memory_space<vmem>>, vector<32x32xf32>
    %cst_57 = arith.constant dense<0.000000e+00> : vector<8x32xf32>
    %104 = tpu.matmul %102, %103, %cst_57 {dimension_numbers = #tpu.dot_dimension_numbers<[1], [0], [0], [1], [0, 0, 1, 1], [], []>, precision = #tpu.contract_precision<fp32>} : vector<8x32xf32>, vector<32x32xf32>, vector<8x32xf32> -> vector<8x32xf32>
    %c0_58 = arith.constant 0 : index
    %c0_59 = arith.constant 0 : index
    %105 = vector.load %arg10[%c0_58, %c0_59] : memref<1x32xf32, #tpu.memory_space<vmem>>, vector<1x32xf32>
    %106 = vector.broadcast %105 : vector<1x32xf32> to vector<8x32xf32>
    %107 = arith.addf %104, %106 : vector<8x32xf32>
    %108 = arith.addf %107, %1 : vector<8x32xf32>
    %cst_60 = arith.constant dense<0.000000e+00> : vector<8xf32>
    %109 = vector.multi_reduction <add>, %108, %cst_60 [1] : vector<8x32xf32> to vector<8xf32>
    %110 = vector.shape_cast %109 : vector<8xf32> to vector<8x1xf32>
    %cst_61 = arith.constant 3.200000e+01 : f32
    %111 = vector.broadcast %cst_61 : f32 to vector<8x1xf32>
    %112 = arith.divf %110, %111 : vector<8x1xf32>
    %113 = vector.broadcast %112 : vector<8x1xf32> to vector<8x32xf32>
    %114 = arith.subf %108, %113 : vector<8x32xf32>
    %115 = arith.mulf %114, %114 : vector<8x32xf32>
    %cst_62 = arith.constant dense<0.000000e+00> : vector<8xf32>
    %116 = vector.multi_reduction <add>, %115, %cst_62 [1] : vector<8x32xf32> to vector<8xf32>
    %117 = vector.shape_cast %116 : vector<8xf32> to vector<8x1xf32>
    %cst_63 = arith.constant 3.200000e+01 : f32
    %118 = vector.broadcast %cst_63 : f32 to vector<8x1xf32>
    %119 = arith.divf %117, %118 : vector<8x1xf32>
    %cst_64 = arith.constant 9.99999996E-13 : f32
    %120 = vector.broadcast %cst_64 : f32 to vector<8x1xf32>
    %121 = arith.addf %119, %120 : vector<8x1xf32>
    %122 = math.rsqrt %121 : vector<8x1xf32>
    %123 = vector.broadcast %122 : vector<8x1xf32> to vector<8x32xf32>
    %124 = arith.mulf %114, %123 : vector<8x32xf32>
    %c0_65 = arith.constant 0 : index
    %c0_66 = arith.constant 0 : index
    %125 = vector.load %arg11[%c0_65, %c0_66] : memref<1x32xf32, #tpu.memory_space<vmem>>, vector<1x32xf32>
    %126 = vector.broadcast %125 : vector<1x32xf32> to vector<8x32xf32>
    %127 = arith.mulf %126, %124 : vector<8x32xf32>
    %c0_67 = arith.constant 0 : index
    %c0_68 = arith.constant 0 : index
    %128 = vector.load %arg12[%c0_67, %c0_68] : memref<1x32xf32, #tpu.memory_space<vmem>>, vector<1x32xf32>
    %129 = vector.broadcast %128 : vector<1x32xf32> to vector<8x32xf32>
    %130 = arith.addf %127, %129 : vector<8x32xf32>
    %c0_69 = arith.constant 0 : index
    %c0_70 = arith.constant 0 : index
    %c0_71 = arith.constant 0 : index
    %131 = vector.load %arg13[%c0_69, %c0_70, %c0_71] : memref<1x8x32xf32, #tpu.memory_space<vmem>>, vector<1x8x32xf32>
    %132 = vector.shape_cast %131 : vector<1x8x32xf32> to vector<8x32xf32>
    %133 = vector.shape_cast %130 : vector<8x32xf32> to vector<1x8x32xf32>
    tpu.vector_store %arg13[%c0_69, %c0_70, %c0_71], %133 {strides = array<i32>} : memref<1x8x32xf32, #tpu.memory_space<vmem>>, vector<1x8x32xf32>,
    return
  }
  func.func @transform_0(%arg0: i32, %arg1: i32) -> (i32, i32, i32) {
    %c0_i32 = arith.constant 0 : i32
    %c0_i32_0 = arith.constant 0 : i32
    return %arg0, %arg1, %c0_i32 : i32, i32, i32
  }
  func.func @transform_1(%arg0: i32, %arg1: i32) -> (i32, i32, i32) {
    %c0_i32 = arith.constant 0 : i32
    %c0_i32_0 = arith.constant 0 : i32
    %c0_i32_1 = arith.constant 0 : i32
    return %arg0, %c0_i32, %c0_i32_0 : i32, i32, i32
  }
  func.func @transform_2(%arg0: i32, %arg1: i32) -> (i32, i32, i32, i32) {
    %c0_i32 = arith.constant 0 : i32
    %c0_i32_0 = arith.constant 0 : i32
    %c0_i32_1 = arith.constant 0 : i32
    %c0_i32_2 = arith.constant 0 : i32
    return %arg0, %c0_i32, %c0_i32_0, %c0_i32_1 : i32, i32, i32, i32
  }
  func.func @transform_3(%arg0: i32, %arg1: i32) -> (i32, i32) {
    %c0_i32 = arith.constant 0 : i32
    %c0_i32_0 = arith.constant 0 : i32
    %c0_i32_1 = arith.constant 0 : i32
    return %c0_i32, %c0_i32_0 : i32, i32
  }
  func.func @transform_4(%arg0: i32, %arg1: i32) -> (i32, i32) {
    %c0_i32 = arith.constant 0 : i32
    %c0_i32_0 = arith.constant 0 : i32
    %c0_i32_1 = arith.constant 0 : i32
    return %c0_i32, %c0_i32_0 : i32, i32
  }
  func.func @transform_5(%arg0: i32, %arg1: i32) -> (i32, i32) {
    %c0_i32 = arith.constant 0 : i32
    %c0_i32_0 = arith.constant 0 : i32
    %c0_i32_1 = arith.constant 0 : i32
    return %c0_i32, %c0_i32_0 : i32, i32
  }
  func.func @transform_6(%arg0: i32, %arg1: i32) -> (i32, i32) {
    %c0_i32 = arith.constant 0 : i32
    %c0_i32_0 = arith.constant 0 : i32
    %c0_i32_1 = arith.constant 0 : i32
    return %c0_i32, %c0_i32_0 : i32, i32
  }
  func.func @transform_7(%arg0: i32, %arg1: i32) -> (i32, i32) {
    %c0_i32 = arith.constant 0 : i32
    %c0_i32_0 = arith.constant 0 : i32
    %c0_i32_1 = arith.constant 0 : i32
    return %c0_i32, %c0_i32_0 : i32, i32
  }
  func.func @transform_8(%arg0: i32, %arg1: i32) -> (i32, i32) {
    %c0_i32 = arith.constant 0 : i32
    %c0_i32_0 = arith.constant 0 : i32
    %c0_i32_1 = arith.constant 0 : i32
    return %c0_i32, %c0_i32_0 : i32, i32
  }
  func.func @transform_9(%arg0: i32, %arg1: i32) -> (i32, i32) {
    %c0_i32 = arith.constant 0 : i32
    %c0_i32_0 = arith.constant 0 : i32
    %c0_i32_1 = arith.constant 0 : i32
    return %c0_i32, %c0_i32_0 : i32, i32
  }
  func.func @transform_10(%arg0: i32, %arg1: i32) -> (i32, i32) {
    %c0_i32 = arith.constant 0 : i32
    %c0_i32_0 = arith.constant 0 : i32
    %c0_i32_1 = arith.constant 0 : i32
    return %c0_i32, %c0_i32_0 : i32, i32
  }
  func.func @transform_11(%arg0: i32, %arg1: i32) -> (i32, i32, i32) {
    %c0_i32 = arith.constant 0 : i32
    %c0_i32_0 = arith.constant 0 : i32
    return %arg0, %arg1, %c0_i32 : i32, i32, i32
  }
  func.func @transform_12(%arg0: i32, %arg1: i32) -> (i32, i32, i32, i32) {
    %c0_i32 = arith.constant 0 : i32
    %c0_i32_0 = arith.constant 0 : i32
    %c0_i32_1 = arith.constant 0 : i32
    return %arg0, %c0_i32, %arg1, %c0_i32_0 : i32, i32, i32, i32
  }
}

</mosaic_0001>

<llo_original>
// kernel: tpu_custom_call.1
$region0: #{tpu_custom_call.1}
  #allocation0 [shape = 'u32[]', space=smem, size = 0x4, offset = 0x4, fixed_abs, tag = 'smem constant byte address 0x4 - core index']
  #allocation1 [shape = 'u32[144,128]{1,0:T(1,128)}', space=vmem, size = 0x12000, scoped, tag = 'internal scratch']
  #allocation2 [shape = 'f32[8,32]{1,0:T(8,128)}', space=vmem, size = 0x1000, scoped, tag = 'scratch operand']
  %s0 = inlined_call_operand.hbm [shape: f32[2,8,32], index: 0, kind: input, shape index: {}]
  %s1 = inlined_call_operand.hbm [shape: f32[2,8,32], index: 1, kind: input, shape index: {}]
  %s2 = inlined_call_operand.vmem [shape: f32[2,1,1,8], index: 2, kind: input, shape index: {}]
  %s3 = inlined_call_operand.hbm [shape: f32[32,32], index: 3, kind: input, shape index: {}]
  %s4 = inlined_call_operand.vmem [shape: f32[1,32], index: 4, kind: input, shape index: {}]
  %s5 = inlined_call_operand.hbm [shape: f32[32,64], index: 5, kind: input, shape index: {}]
  %s6 = inlined_call_operand.vmem [shape: f32[1,64], index: 6, kind: input, shape index: {}]
  %s7 = inlined_call_operand.hbm [shape: f32[32,32], index: 7, kind: input, shape index: {}]
  %s8 = inlined_call_operand.vmem [shape: f32[1,32], index: 8, kind: input, shape index: {}]
  %s9 = inlined_call_operand.vmem [shape: f32[1,32], index: 9, kind: input, shape index: {}]
  %s10 = inlined_call_operand.vmem [shape: f32[1,32], index: 10, kind: input, shape index: {}]
  %s11 = inlined_call_operand.hbm [shape: f32[2,8,32], index: 11, kind: output, shape index: {0}]
  %s12 = inlined_call_operand.hbm [shape: f32[2,4,8,8], index: 12, kind: output, shape index: {1}]
  %13 = xla_tuple %s11, %s12
  %s14 = sld [smem:[#allocation0]]
  $region105: #{tpu_custom_call.1} parent=0
    _
  %s16 = ssub.s32 1, %s14
  %s17 = scalar_select 0, %s16, %s14
  $region1: #{tpu_custom_call.1} parent=0
    #allocation3 [shape = 'u8[8192]{0}', space=vmem, size = 0x2000, scoped, tag = 'input window, operand 0']
    #allocation4 [shape = 's32[2]{0}', space=sflag, size = 0x8, scoped, tag = 'scoped memory for tpu_custom_call.1']
    #allocation5 [shape = 's32[2]{0}', space=sflag, size = 0x8, scoped, tag = 'scoped memory for tpu_custom_call.1']
    #allocation6 [shape = 'u8[8192]{0}', space=vmem, size = 0x2000, scoped, tag = 'input window, operand 1']
    #allocation7 [shape = 's32[2]{0}', space=sflag, size = 0x8, scoped, tag = 'scoped memory for tpu_custom_call.1']
    #allocation8 [shape = 'u8[16384]{0}', space=vmem, size = 0x4000, scoped, tag = 'input window, operand 3, single buffered']
    #allocation9 [shape = 'u8[16384]{0}', space=vmem, size = 0x4000, scoped, tag = 'input window, operand 5, single buffered']
    #allocation10 [shape = 's32[1]{0}', space=sflag, size = 0x4, scoped, tag = 'scoped memory for tpu_custom_call.1']
    #allocation11 [shape = 'u8[16384]{0}', space=vmem, size = 0x4000, scoped, tag = 'input window, operand 7, single buffered']
    #allocation12 [shape = 'u8[8192]{0}', space=vmem, size = 0x2000, scoped, tag = 'output window, operand 0']
    #allocation13 [shape = 'u8[32768]{0}', space=vmem, size = 0x8000, scoped, tag = 'output window, operand 1']
    #allocation14 [shape = 's32[2]{0}', space=sflag, size = 0x8, scoped, tag = 'scoped memory for tpu_custom_call.1']
    %18 = vsyncpa [#allocation4], 0
    %s19 = scalar_lea.sflag [#allocation4], 1
    %20 = vsyncpa %s19, 0
    %21 = vsyncpa [#allocation7], 0
    %s22 = scalar_lea.sflag [#allocation7], 1
    %23 = vsyncpa %s22, 0
    %24 = vsyncpa [#allocation10], 0
    %25 = vsyncpa [#allocation5], 0
    %s26 = scalar_lea.sflag [#allocation5], 1
    %27 = vsyncpa %s26, 0
    %28 = vsyncpa [#allocation14], 0
    %s29 = scalar_lea.sflag [#allocation14], 1
    %30 = vsyncpa %s29, 0
    loop: start=0, step=1, limit=4
    $region2: #{tpu_custom_call.1} parent=1 // loop_pre_header
      _
    $region3: #{tpu_custom_call.1} parent=1 // loop_header
      %s32 = sphi 0, %s36
      %p33 = scmp.ge.s32.totalorder %s32, 4
      %s39 = sphi 0, %s51
      %s40 = sphi 0, %s47
      %s41 = sphi 0, %s39
      %s42 = sphi 0, %s40
      %s43 = sphi 0, %s41
      %s44 = sphi 0, %s42
      %s56 = sphi 0, %s58
      %s59 = sphi 0, %s56
      %s60 = sphi 0, %s59
      %s76 = sphi 0, %s60
      %s82 = sphi 0, %s84
      %s85 = sphi 0, %s82
      %s86 = sphi 0, %s85
      %s102 = sphi 0, %s86
      %s108 = sphi 0, %s110
      %s111 = sphi 0, %s108
      %s112 = sphi 0, %s111
      %s128 = sphi 0, %s112
      %s132 = sphi 0, %s132
      %s134 = sphi 0, %s132
      %s135 = sphi 0, %s134
      %s149 = sphi 0, %s135
      %s153 = sphi 0, %s153
      %s155 = sphi 0, %s153
      %s156 = sphi 0, %s155
      %s170 = sphi 0, %s156
      %s174 = sphi 0, %s174
      %s176 = sphi 0, %s174
      %s177 = sphi 0, %s176
      %s191 = sphi 0, %s177
      %s195 = sphi 0, %s195
      %s197 = sphi 0, %s195
      %s198 = sphi 0, %s197
      %s212 = sphi 0, %s198
      %s216 = sphi 0, %s216
      %s218 = sphi 0, %s216
      %s219 = sphi 0, %s218
      %s233 = sphi 0, %s219
      %s237 = sphi 0, %s237
      %s239 = sphi 0, %s237
      %s240 = sphi 0, %s239
      %s254 = sphi 0, %s240
      %s258 = sphi 0, %s258
      %s260 = sphi 0, %s258
      %s261 = sphi 0, %s260
      %s275 = sphi 0, %s261
      %s279 = sphi 0, %s279
      %s281 = sphi 0, %s279
      %s282 = sphi 0, %s281
      %s296 = sphi 0, %s282
      %s304 = sphi 0, %s306
      %s307 = sphi 0, %s304
      %s308 = sphi 0, %s307
      %s324 = sphi 0, %s308
      %s332 = sphi 0, %s334
      %s335 = sphi 0, %s332
      %s336 = sphi 0, %s335
      %s352 = sphi 0, %s336
    $region4: #{tpu_custom_call.1} parent=1 // loop_header_branch
      %35 = sbr.rel (%p33) target = $region8
    $region5: #{tpu_custom_call.1} parent=1 // loop_body
      %s37 = ssub.s32 %s32, 1
      %s38 = ssub.s32 %s32, 2
      %s45 = sadd.s32 1, %s40
      %p46 = scmp.ge.s32.totalorder %s45, 1
      %s47 = scalar_select %p46, 0, %s45
      %s48 = sadd.s32 1, %s39
      %s49 = scalar_select %p46, %s48, %s39
      %p50 = scmp.ge.s32.totalorder %s49, 2
      %s51 = scalar_select %p50, 0, %s49
      %s52 = ssub.s32 %s39, %s51
      %s53 = ssub.s32 %s40, %s47
      %s54 = sor.u32 %s52, %s53
      %p55 = scmp.eq.s32.totalorder %s54, 0
      %s57 = sadd.s32 %s56, 1
      %s58 = scalar_select %p55, %s56, %s57
      %p61 = pneg %p55
      %p62 = scmp.eq.s32.totalorder %s32, 1
      %p63 = por %p61, %p62
      %p64 = scmp.ne.s32.totalorder %s56, %s59
      %p65 = scmp.eq.s32.totalorder %s32, 0
      %p66 = por %p64, %p65
      %p67 = scmp.ne.s32.totalorder %s56, %s59
      %p68 = scmp.eq.s32.totalorder %s37, 1
      %p69 = por %p67, %p68
      %p70 = scmp.ne.s32.totalorder %s59, %s60
      %p71 = scmp.eq.s32.totalorder %s37, 0
      %p72 = por %p70, %p71
      %p73 = scmp.ne.s32.totalorder %s59, %s60
      %p74 = scmp.eq.s32.totalorder %s38, 1
      %p75 = por %p73, %p74
      %p77 = scmp.ne.s32.totalorder %s60, %s76
      %p78 = scmp.eq.s32.totalorder %s38, 0
      %p79 = por %p77, %p78
      %s80 = ssub.s32 %s39, %s51
      %p81 = scmp.eq.s32.totalorder %s80, 0
      %s83 = sadd.s32 %s82, 1
      %s84 = scalar_select %p81, %s82, %s83
      %p87 = pneg %p81
      %p88 = scmp.eq.s32.totalorder %s32, 1
      %p89 = por %p87, %p88
      %p90 = scmp.ne.s32.totalorder %s82, %s85
      %p91 = scmp.eq.s32.totalorder %s32, 0
      %p92 = por %p90, %p91
      %p93 = scmp.ne.s32.totalorder %s82, %s85
      %p94 = scmp.eq.s32.totalorder %s37, 1
      %p95 = por %p93, %p94
      %p96 = scmp.ne.s32.totalorder %s85, %s86
      %p97 = scmp.eq.s32.totalorder %s37, 0
      %p98 = por %p96, %p97
      %p99 = scmp.ne.s32.totalorder %s85, %s86
      %p100 = scmp.eq.s32.totalorder %s38, 1
      %p101 = por %p99, %p100
      %p103 = scmp.ne.s32.totalorder %s86, %s102
      %p104 = scmp.eq.s32.totalorder %s38, 0
      %p105 = por %p103, %p104
      %s106 = ssub.s32 %s39, %s51
      %p107 = scmp.eq.s32.totalorder %s106, 0
      %s109 = sadd.s32 %s108, 1
      %s110 = scalar_select %p107, %s108, %s109
      %p113 = pneg %p107
      %p114 = scmp.eq.s32.totalorder %s32, 1
      %p115 = por %p113, %p114
      %p116 = scmp.ne.s32.totalorder %s108, %s111
      %p117 = scmp.eq.s32.totalorder %s32, 0
      %p118 = por %p116, %p117
      %p119 = scmp.ne.s32.totalorder %s108, %s111
      %p120 = scmp.eq.s32.totalorder %s37, 1
      %p121 = por %p119, %p120
      %p122 = scmp.ne.s32.totalorder %s111, %s112
      %p123 = scmp.eq.s32.totalorder %s37, 0
      %p124 = por %p122, %p123
      %p125 = scmp.ne.s32.totalorder %s111, %s112
      %p126 = scmp.eq.s32.totalorder %s38, 1
      %p127 = por %p125, %p126
      %p129 = scmp.ne.s32.totalorder %s112, %s128
      %p130 = scmp.eq.s32.totalorder %s38, 0
      %p131 = por %p129, %p130
      %s133 = sadd.s32 %s132, 1
      %p136 = scmp.eq.s32.totalorder %s32, 1
      %p137 = scmp.ne.s32.totalorder %s132, %s134
      %p138 = scmp.eq.s32.totalorder %s32, 0
      %p139 = por %p137, %p138
      %p140 = scmp.ne.s32.totalorder %s132, %s134
      %p141 = scmp.eq.s32.totalorder %s37, 1
      %p142 = por %p140, %p141
      %p143 = scmp.ne.s32.totalorder %s134, %s135
      %p144 = scmp.eq.s32.totalorder %s37, 0
      %p145 = por %p143, %p144
      %p146 = scmp.ne.s32.totalorder %s134, %s135
      %p147 = scmp.eq.s32.totalorder %s38, 1
      %p148 = por %p146, %p147
      %p150 = scmp.ne.s32.totalorder %s135, %s149
      %p151 = scmp.eq.s32.totalorder %s38, 0
      %p152 = por %p150, %p151
      %s154 = sadd.s32 %s153, 1
      %p157 = scmp.eq.s32.totalorder %s32, 1
      %p158 = scmp.ne.s32.totalorder %s153, %s155
      %p159 = scmp.eq.s32.totalorder %s32, 0
      %p160 = por %p158, %p159
      %p161 = scmp.ne.s32.totalorder %s153, %s155
      %p162 = scmp.eq.s32.totalorder %s37, 1
      %p163 = por %p161, %p162
      %p164 = scmp.ne.s32.totalorder %s155, %s156
      %p165 = scmp.eq.s32.totalorder %s37, 0
      %p166 = por %p164, %p165
      %p167 = scmp.ne.s32.totalorder %s155, %s156
      %p168 = scmp.eq.s32.totalorder %s38, 1
      %p169 = por %p167, %p168
      %p171 = scmp.ne.s32.totalorder %s156, %s170
      %p172 = scmp.eq.s32.totalorder %s38, 0
      %p173 = por %p171, %p172
      %s175 = sadd.s32 %s174, 1
      %p178 = scmp.eq.s32.totalorder %s32, 1
      %p179 = scmp.ne.s32.totalorder %s174, %s176
      %p180 = scmp.eq.s32.totalorder %s32, 0
      %p181 = por %p179, %p180
      %p182 = scmp.ne.s32.totalorder %s174, %s176
      %p183 = scmp.eq.s32.totalorder %s37, 1
      %p184 = por %p182, %p183
      %p185 = scmp.ne.s32.totalorder %s176, %s177
      %p186 = scmp.eq.s32.totalorder %s37, 0
      %p187 = por %p185, %p186
      %p188 = scmp.ne.s32.totalorder %s176, %s177
      %p189 = scmp.eq.s32.totalorder %s38, 1
      %p190 = por %p188, %p189
      %p192 = scmp.ne.s32.totalorder %s177, %s191
      %p193 = scmp.eq.s32.totalorder %s38, 0
      %p194 = por %p192, %p193
      %s196 = sadd.s32 %s195, 1
      %p199 = scmp.eq.s32.totalorder %s32, 1
      %p200 = scmp.ne.s32.totalorder %s195, %s197
      %p201 = scmp.eq.s32.totalorder %s32, 0
      %p202 = por %p200, %p201
      %p203 = scmp.ne.s32.totalorder %s195, %s197
      %p204 = scmp.eq.s32.totalorder %s37, 1
      %p205 = por %p203, %p204
      %p206 = scmp.ne.s32.totalorder %s197, %s198
      %p207 = scmp.eq.s32.totalorder %s37, 0
      %p208 = por %p206, %p207
      %p209 = scmp.ne.s32.totalorder %s197, %s198
      %p210 = scmp.eq.s32.totalorder %s38, 1
      %p211 = por %p209, %p210
      %p213 = scmp.ne.s32.totalorder %s198, %s212
      %p214 = scmp.eq.s32.totalorder %s38, 0
      %p215 = por %p213, %p214
      %s217 = sadd.s32 %s216, 1
      %p220 = scmp.eq.s32.totalorder %s32, 1
      %p221 = scmp.ne.s32.totalorder %s216, %s218
      %p222 = scmp.eq.s32.totalorder %s32, 0
      %p223 = por %p221, %p222
      %p224 = scmp.ne.s32.totalorder %s216, %s218
      %p225 = scmp.eq.s32.totalorder %s37, 1
      %p226 = por %p224, %p225
      %p227 = scmp.ne.s32.totalorder %s218, %s219
      %p228 = scmp.eq.s32.totalorder %s37, 0
      %p229 = por %p227, %p228
      %p230 = scmp.ne.s32.totalorder %s218, %s219
      %p231 = scmp.eq.s32.totalorder %s38, 1
      %p232 = por %p230, %p231
      %p234 = scmp.ne.s32.totalorder %s219, %s233
      %p235 = scmp.eq.s32.totalorder %s38, 0
      %p236 = por %p234, %p235
      %s238 = sadd.s32 %s237, 1
      %p241 = scmp.eq.s32.totalorder %s32, 1
      %p242 = scmp.ne.s32.totalorder %s237, %s239
      %p243 = scmp.eq.s32.totalorder %s32, 0
      %p244 = por %p242, %p243
      %p245 = scmp.ne.s32.totalorder %s237, %s239
      %p246 = scmp.eq.s32.totalorder %s37, 1
      %p247 = por %p245, %p246
      %p248 = scmp.ne.s32.totalorder %s239, %s240
      %p249 = scmp.eq.s32.totalorder %s37, 0
      %p250 = por %p248, %p249
      %p251 = scmp.ne.s32.totalorder %s239, %s240
      %p252 = scmp.eq.s32.totalorder %s38, 1
      %p253 = por %p251, %p252
      %p255 = scmp.ne.s32.totalorder %s240, %s254
      %p256 = scmp.eq.s32.totalorder %s38, 0
      %p257 = por %p255, %p256
      %s259 = sadd.s32 %s258, 1
      %p262 = scmp.eq.s32.totalorder %s32, 1
      %p263 = scmp.ne.s32.totalorder %s258, %s260
      %p264 = scmp.eq.s32.totalorder %s32, 0
      %p265 = por %p263, %p264
      %p266 = scmp.ne.s32.totalorder %s258, %s260
      %p267 = scmp.eq.s32.totalorder %s37, 1
      %p268 = por %p266, %p267
      %p269 = scmp.ne.s32.totalorder %s260, %s261
      %p270 = scmp.eq.s32.totalorder %s37, 0
      %p271 = por %p269, %p270
      %p272 = scmp.ne.s32.totalorder %s260, %s261
      %p273 = scmp.eq.s32.totalorder %s38, 1
      %p274 = por %p272, %p273
      %p276 = scmp.ne.s32.totalorder %s261, %s275
      %p277 = scmp.eq.s32.totalorder %s38, 0
      %p278 = por %p276, %p277
      %s280 = sadd.s32 %s279, 1
      %p283 = scmp.eq.s32.totalorder %s32, 1
      %p284 = scmp.ne.s32.totalorder %s279, %s281
      %p285 = scmp.eq.s32.totalorder %s32, 0
      %p286 = por %p284, %p285
      %p287 = scmp.ne.s32.totalorder %s279, %s281
      %p288 = scmp.eq.s32.totalorder %s37, 1
      %p289 = por %p287, %p288
      %p290 = scmp.ne.s32.totalorder %s281, %s282
      %p291 = scmp.eq.s32.totalorder %s37, 0
      %p292 = por %p290, %p291
      %p293 = scmp.ne.s32.totalorder %s281, %s282
      %p294 = scmp.eq.s32.totalorder %s38, 1
      %p295 = por %p293, %p294
      %p297 = scmp.ne.s32.totalorder %s282, %s296
      %p298 = scmp.eq.s32.totalorder %s38, 0
      %p299 = por %p297, %p298
      %s300 = ssub.s32 %s39, %s51
      %s301 = ssub.s32 %s40, %s47
      %s302 = sor.u32 %s300, %s301
      %p303 = scmp.eq.s32.totalorder %s302, 0
      %s305 = sadd.s32 %s304, 1
      %s306 = scalar_select %p303, %s304, %s305
      %p309 = pneg %p303
      %p310 = scmp.eq.s32.totalorder %s32, 1
      %p311 = por %p309, %p310
      %p312 = scmp.ne.s32.totalorder %s304, %s307
      %p313 = scmp.eq.s32.totalorder %s32, 0
      %p314 = por %p312, %p313
      %p315 = scmp.ne.s32.totalorder %s304, %s307
      %p316 = scmp.eq.s32.totalorder %s37, 1
      %p317 = por %p315, %p316
      %p318 = scmp.ne.s32.totalorder %s307, %s308
      %p319 = scmp.eq.s32.totalorder %s37, 0
      %p320 = por %p318, %p319
      %p321 = scmp.ne.s32.totalorder %s307, %s308
      %p322 = scmp.eq.s32.totalorder %s38, 1
      %p323 = por %p321, %p322
      %p325 = scmp.ne.s32.totalorder %s308, %s324
      %p326 = scmp.eq.s32.totalorder %s38, 0
      %p327 = por %p325, %p326
      %s328 = ssub.s32 %s39, %s51
      %s329 = ssub.s32 %s40, %s47
      %s330 = sor.u32 %s328, %s329
      %p331 = scmp.eq.s32.totalorder %s330, 0
      %s333 = sadd.s32 %s332, 1
      %s334 = scalar_select %p331, %s332, %s333
      %p337 = pneg %p331
      %p338 = scmp.eq.s32.totalorder %s32, 1
      %p339 = por %p337, %p338
      %p340 = scmp.ne.s32.totalorder %s332, %s335
      %p341 = scmp.eq.s32.totalorder %s32, 0
      %p342 = por %p340, %p341
      %p343 = scmp.ne.s32.totalorder %s332, %s335
      %p344 = scmp.eq.s32.totalorder %s37, 1
      %p345 = por %p343, %p344
      %p346 = scmp.ne.s32.totalorder %s335, %s336
      %p347 = scmp.eq.s32.totalorder %s37, 0
      %p348 = por %p346, %p347
      %p349 = scmp.ne.s32.totalorder %s335, %s336
      %p350 = scmp.eq.s32.totalorder %s38, 1
      %p351 = por %p349, %p350
      %p353 = scmp.ne.s32.totalorder %s336, %s352
      %p354 = scmp.eq.s32.totalorder %s38, 0
      %p355 = por %p353, %p354
      %p356 = scmp.le.s32.totalorder 1, %s32
      %p357 = scmp.lt.s32.totalorder %s32, 3
      %p358 = pnand %p356, %p357
      %p359 = pneg %p358
      // Predicated region
      $region9: #{tpu_custom_call.1} parent=5 // pred_check
        _
      $region10: #{tpu_custom_call.1} parent=5 // pred_check_branch
        %361 = sbr.rel (%p358) target = $region12
      $region11: #{tpu_custom_call.1} parent=5 // pred_region
        %s362 = ssub.s32 %s32, 1
        // Predicated region
        $region13: #{tpu_custom_call.1} parent=11 // pred_check
          %p363 = pneg %p145
        $region14: #{tpu_custom_call.1} parent=11 // pred_check_branch
          %365 = sbr.rel (%p363) target = $region16
        $region15: #{tpu_custom_call.1} parent=11 // pred_region
          %s367 = ssub.s32 512, 512
          %368 = vsyncadd [#allocation7], %s367
          %s369 = sshll.u32 [#allocation8], 4
          %s370 = int_to_ptr.vmem [resolvable:$true] %s369
          %375 = dma.hbm_to_vmem [thread:$0]  %s3, 512, %s370, [#allocation7], 128, 128, 8
        $region16: #{tpu_custom_call.1} parent=11 // pred_fallthru
          _
        // Predicated region
        $region17: #{tpu_custom_call.1} parent=11 // pred_check
          %p376 = pneg %p166
        $region18: #{tpu_custom_call.1} parent=11 // pred_check_branch
          %378 = sbr.rel (%p376) target = $region20
        $region19: #{tpu_custom_call.1} parent=11 // pred_region
          _
        $region20: #{tpu_custom_call.1} parent=11 // pred_fallthru
          _
        // Predicated region
        $region21: #{tpu_custom_call.1} parent=11 // pred_check
          %p379 = pneg %p187
        $region22: #{tpu_custom_call.1} parent=11 // pred_check_branch
          %381 = sbr.rel (%p379) target = $region24
        $region23: #{tpu_custom_call.1} parent=11 // pred_region
          %s383 = ssub.s32 512, 512
          %384 = vsyncadd [#allocation10], %s383
          %s385 = sshll.u32 [#allocation9], 4
          %s386 = int_to_ptr.vmem [resolvable:$true] %s385
          %391 = dma.hbm_to_vmem [thread:$0]  %s5, 512, %s386, [#allocation10], 128, 128, 8
        $region24: #{tpu_custom_call.1} parent=11 // pred_fallthru
          _
        // Predicated region
        $region25: #{tpu_custom_call.1} parent=11 // pred_check
          %p392 = pneg %p208
        $region26: #{tpu_custom_call.1} parent=11 // pred_check_branch
          %394 = sbr.rel (%p392) target = $region28
        $region27: #{tpu_custom_call.1} parent=11 // pred_region
          _
        $region28: #{tpu_custom_call.1} parent=11 // pred_fallthru
          _
        // Predicated region
        $region29: #{tpu_custom_call.1} parent=11 // pred_check
          %p395 = pneg %p229
        $region30: #{tpu_custom_call.1} parent=11 // pred_check_branch
          %397 = sbr.rel (%p395) target = $region32
        $region31: #{tpu_custom_call.1} parent=11 // pred_region
          %s399 = ssub.s32 512, 512
          %400 = vsyncadd [#allocation10], %s399
          %s401 = sshll.u32 [#allocation11], 4
          %s402 = int_to_ptr.vmem [resolvable:$true] %s401
          %407 = dma.hbm_to_vmem [thread:$0]  %s7, 512, %s402, [#allocation10], 128, 128, 8
        $region32: #{tpu_custom_call.1} parent=11 // pred_fallthru
          _
        // Predicated region
        $region33: #{tpu_custom_call.1} parent=11 // pred_check
          %p408 = pneg %p250
        $region34: #{tpu_custom_call.1} parent=11 // pred_check_branch
          %410 = sbr.rel (%p408) target = $region36
        $region35: #{tpu_custom_call.1} parent=11 // pred_region
          _
        $region36: #{tpu_custom_call.1} parent=11 // pred_fallthru
          _
        // Predicated region
        $region37: #{tpu_custom_call.1} parent=11 // pred_check
          %p411 = pneg %p271
        $region38: #{tpu_custom_call.1} parent=11 // pred_check_branch
          %413 = sbr.rel (%p411) target = $region40
        $region39: #{tpu_custom_call.1} parent=11 // pred_region
          _
        $region40: #{tpu_custom_call.1} parent=11 // pred_fallthru
          _
        // Predicated region
        $region41: #{tpu_custom_call.1} parent=11 // pred_check
          %p414 = pneg %p292
        $region42: #{tpu_custom_call.1} parent=11 // pred_check_branch
          %416 = sbr.rel (%p414) target = $region44
        $region43: #{tpu_custom_call.1} parent=11 // pred_region
          _
        $region44: #{tpu_custom_call.1} parent=11 // pred_fallthru
          _
      $region12: #{tpu_custom_call.1} parent=5 // pred_fallthru
        _
      %p417 = scmp.lt.s32.totalorder %s32, 2
      // Predicated region
      $region45: #{tpu_custom_call.1} parent=5 // pred_check
        %p418 = pneg %p417
      $region46: #{tpu_custom_call.1} parent=5 // pred_check_branch
        %420 = sbr.rel (%p418) target = $region48
      $region47: #{tpu_custom_call.1} parent=5 // pred_region
        // Predicated region
        $region49: #{tpu_custom_call.1} parent=47 // pred_check
          %p421 = pneg %p66
        $region50: #{tpu_custom_call.1} parent=47 // pred_check_branch
          %423 = sbr.rel (%p421) target = $region52
        $region51: #{tpu_custom_call.1} parent=47 // pred_region
          %s424 = sand.u32 %s56, 1
          %s425 = scalar_lea.sflag [#allocation4], %s424
          %s426 = sand.u32 %s56, 1
          %s427 = smul.addr %s426, 8
          %s428 = scalar_lea.vmem [#allocation3], %s427
          %s430 = ssub.s32 128, 128
          %431 = vsyncadd %s425, %s430
          %s432 = sadd.s32 %s40, %s39
          %s433 = smul.addr %s432, 128
          %s434 = scalar_lea.hbm %s0, %s433
          %s436 = sshll.u32 %s428, 4
          %s437 = int_to_ptr.vmem [resolvable:$true] %s436
          %439 = dma.hbm_to_vmem [thread:$0]  %s434, 128, %s437, %s425
        $region52: #{tpu_custom_call.1} parent=47 // pred_fallthru
          _
        // Predicated region
        $region53: #{tpu_custom_call.1} parent=47 // pred_check
          %p440 = pneg %p92
        $region54: #{tpu_custom_call.1} parent=47 // pred_check_branch
          %442 = sbr.rel (%p440) target = $region56
        $region55: #{tpu_custom_call.1} parent=47 // pred_region
          %s443 = sand.u32 %s32, 1
          %s444 = scalar_lea.sflag [#allocation7], %s443
          %s445 = sand.u32 %s82, 1
          %s446 = smul.addr %s445, 8
          %s447 = scalar_lea.vmem [#allocation6], %s446
          %s449 = ssub.s32 128, 128
          %450 = vsyncadd %s444, %s449
          %s451 = smul.addr %s39, 128
          %s452 = scalar_lea.hbm %s1, %s451
          %s454 = sshll.u32 %s447, 4
          %s455 = int_to_ptr.vmem [resolvable:$true] %s454
          %457 = dma.hbm_to_vmem [thread:$0]  %s452, 128, %s455, %s444
        $region56: #{tpu_custom_call.1} parent=47 // pred_fallthru
          _
        // Predicated region
        $region57: #{tpu_custom_call.1} parent=47 // pred_check
          %p458 = pneg %p118
        $region58: #{tpu_custom_call.1} parent=47 // pred_check_branch
          %460 = sbr.rel (%p458) target = $region60
        $region59: #{tpu_custom_call.1} parent=47 // pred_region
          %p461 = scmp.lt.s32.totalorder %s39, 1
          %s462 = scalar_select %p461, %s39, 1
          %s463 = scalar_lea.vmem %s2, %s462
        $region60: #{tpu_custom_call.1} parent=47 // pred_fallthru
          _
      $region48: #{tpu_custom_call.1} parent=5 // pred_fallthru
        _
      %p464 = scmp.le.s32.totalorder 1, %s32
      %p465 = scmp.lt.s32.totalorder %s32, 3
      %p466 = pnand %p464, %p465
      %p467 = pneg %p466
      // Predicated region
      $region61: #{tpu_custom_call.1} parent=5 // pred_check
        _
      $region62: #{tpu_custom_call.1} parent=5 // pred_check_branch
        %469 = sbr.rel (%p466) target = $region64
      $region63: #{tpu_custom_call.1} parent=5 // pred_region
        %s470 = ssub.s32 %s32, 1
        %s471 = sand.u32 %s59, 1
        %s472 = scalar_lea.sflag [#allocation4], %s471
        %s473 = sand.u32 %s59, 1
        %s474 = smul.addr %s473, 8
        %s475 = scalar_lea.vmem [#allocation3], %s474
        // Predicated region
        $region65: #{tpu_custom_call.1} parent=63 // pred_check
          %p476 = pneg %p72
        $region66: #{tpu_custom_call.1} parent=63 // pred_check_branch
          %478 = sbr.rel (%p476) target = $region68
        $region67: #{tpu_custom_call.1} parent=63 // pred_region
          %479 = dma.done %s472, 128
        $region68: #{tpu_custom_call.1} parent=63 // pred_fallthru
          _
        %s480 = sand.u32 %s37, 1
        %s481 = scalar_lea.sflag [#allocation7], %s480
        %s482 = sand.u32 %s85, 1
        %s483 = smul.addr %s482, 8
        %s484 = scalar_lea.vmem [#allocation6], %s483
        // Predicated region
        $region69: #{tpu_custom_call.1} parent=63 // pred_check
          %p485 = pneg %p98
        $region70: #{tpu_custom_call.1} parent=63 // pred_check_branch
          %487 = sbr.rel (%p485) target = $region72
        $region71: #{tpu_custom_call.1} parent=63 // pred_region
          %488 = dma.done %s481, 128
        $region72: #{tpu_custom_call.1} parent=63 // pred_fallthru
          _
        // Predicated region
        $region73: #{tpu_custom_call.1} parent=63 // pred_check
          %p489 = pneg %p145
        $region74: #{tpu_custom_call.1} parent=63 // pred_check_branch
          %491 = sbr.rel (%p489) target = $region76
        $region75: #{tpu_custom_call.1} parent=63 // pred_region
          %492 = dma.done [#allocation7], 512
        $region76: #{tpu_custom_call.1} parent=63 // pred_fallthru
          _
        // Predicated region
        $region77: #{tpu_custom_call.1} parent=63 // pred_check
          %p493 = pneg %p187
        $region78: #{tpu_custom_call.1} parent=63 // pred_check_branch
          %495 = sbr.rel (%p493) target = $region80
        $region79: #{tpu_custom_call.1} parent=63 // pred_region
          %496 = dma.done [#allocation10], 512
        $region80: #{tpu_custom_call.1} parent=63 // pred_fallthru
          _
        // Predicated region
        $region81: #{tpu_custom_call.1} parent=63 // pred_check
          %p497 = pneg %p229
        $region82: #{tpu_custom_call.1} parent=63 // pred_check_branch
          %499 = sbr.rel (%p497) target = $region84
        $region83: #{tpu_custom_call.1} parent=63 // pred_region
          %500 = dma.done [#allocation10], 512
        $region84: #{tpu_custom_call.1} parent=63 // pred_fallthru
          _
        %s501 = sand.u32 %s59, 1
        %s502 = scalar_lea.sflag [#allocation4], %s501
        %s503 = sand.u32 %s59, 1
        %s504 = smul.addr %s503, 8
        %s505 = scalar_lea.vmem [#allocation3], %s504
        %p506 = pneg %p72
        %p507 = pneg %p69
        %s508 = sand.u32 %s37, 1
        %s509 = scalar_lea.sflag [#allocation7], %s508
        %s510 = sand.u32 %s85, 1
        %s511 = smul.addr %s510, 8
        %s512 = scalar_lea.vmem [#allocation6], %s511
        %p513 = pneg %p98
        %p514 = pneg %p95
        %p515 = scmp.lt.s32.totalorder %s41, 1
        %s516 = scalar_select %p515, %s41, 1
        %s517 = scalar_lea.vmem %s2, %s516
        %p518 = pneg %p124
        %p519 = pneg %p121
        %p520 = pneg %p145
        %p521 = pneg %p142
        %p522 = pneg %p166
        %p523 = pneg %p163
        %p524 = pneg %p187
        %p525 = pneg %p184
        %p526 = pneg %p208
        %p527 = pneg %p205
        %p528 = pneg %p229
        %p529 = pneg %p226
        %p530 = pneg %p250
        %p531 = pneg %p247
        %p532 = pneg %p271
        %p533 = pneg %p268
        %p534 = pneg %p292
        %p535 = pneg %p289
        %p536 = pneg %p320
        %p537 = pneg %p317
        %s538 = sand.u32 %s307, 1
        %s539 = scalar_lea.sflag [#allocation5], %s538
        %s540 = sand.u32 %s307, 1
        %s541 = smul.addr %s540, 8
        %s542 = scalar_lea.vmem [#allocation12], %s541
        %p543 = pneg %p348
        %p544 = pneg %p345
        %s545 = sand.u32 %s335, 1
        %s546 = scalar_lea.sflag [#allocation14], %s545
        %s547 = sand.u32 %s335, 1
        %s548 = smul.addr %s547, 32
        %s549 = scalar_lea.vmem [#allocation13], %s548
        %p550 = scmp.lt.s32.totalorder %s41, 1
        %s551 = scalar_select %p550, %s41, 1
        %s552 = scalar_lea.vmem %s2, %s551
        %v553 = vld [vmem:[%s475] sm:$0xff]
        %v554 = vld [vmem:[%s484] sm:$0xff]
        %v555 = vld [vmem:[%s552] sm:$0x1]
        %v556 = vld [vmem:[#allocation8] sm:$0xff]
        %v557 = vld [vmem:[#allocation8 + $0x8] sm:$0xff]
        %v558 = vld [vmem:[#allocation8 + $0x10] sm:$0xff]
        %v559 = vld [vmem:[#allocation8 + $0x18] sm:$0xff]
        %v560 = vld [vmem:[%s4] sm:$0x1]
        %v562 = vlaneseq
        %v563 = vshrl.u32 %v562, 7
        %v564 = vsub.s32 0, %v563
        %v565 = vrot.slane %v560, %v564
        %vm567 = vcmask 261120
        %v569 = vsel %vm567, %v553, 0
        %571 = vmatprep.subr.mxu0 0.0
        %v572 = vand.u32 %v556, 4294901760
        %573 = vmatpush1.msra.mxu0 %v572
        %574 = vmatprep.subr.mxu0 0.0
        %v575 = vand.u32 %v557, 4294901760
        %576 = vmatpush1.msra.mxu0 %v575
        %577 = vmatprep.subr.mxu0 0.0
        %v578 = vand.u32 %v558, 4294901760
        %579 = vmatpush1.msra.mxu0 %v578
        %580 = vmatprep.subr.mxu0 0.0
        %v581 = vand.u32 %v559, 4294901760
        %582 = vmatpush1.msra.mxu0 %v581
        %583 = vmatprep.subr.mxu0 0.0
        %584 = vmatpush1.msra.mxu0 0.0
        %585 = vmatprep.subr.mxu0 0.0
        %586 = vmatpush1.msra.mxu0 0.0
        %587 = vmatprep.subr.mxu0 0.0
        %588 = vmatpush1.msra.mxu0 0.0
        %589 = vmatprep.subr.mxu0 0.0
        %590 = vmatpush1.msra.mxu0 0.0
        %591 = vmatprep.subr.mxu0 0.0
        %592 = vmatpush1.msra.mxu0 0.0
        %593 = vmatprep.subr.mxu0 0.0
        %594 = vmatpush1.msra.mxu0 0.0
        %595 = vmatprep.subr.mxu0 0.0
        %596 = vmatpush1.msra.mxu0 0.0
        %597 = vmatprep.subr.mxu0 0.0
        %598 = vmatpush1.msra.mxu0 0.0
        %599 = vmatprep.subr.mxu0 0.0
        %600 = vmatpush1.msra.mxu0 0.0
        %601 = vmatprep.subr.mxu0 0.0
        %602 = vmatpush1.msra.mxu0 0.0
        %603 = vmatprep.subr.mxu0 0.0
        %604 = vmatpush1.msra.mxu0 0.0
        %605 = vmatprep.subr.mxu0 0.0
        %606 = vmatpush1.msra.mxu0 0.0
        %607 = vmatprep.subr.mxu0 0.0
        %608 = vmatpush1.msra.mxu0 0.0
        %609 = vmatprep.subr.mxu0 0.0
        %610 = vmatpush1.msra.mxu0 0.0
        %611 = vmatprep.subr.mxu0 0.0
        %612 = vmatpush1.msra.mxu0 0.0
        %613 = vmatprep.subr.mxu0 0.0
        %614 = vmatpush1.msra.mxu0 0.0
        %615 = vmatprep.subr.mxu0 0.0
        %616 = vmatpush1.msra.mxu0 0.0
        %617 = vmatprep.subr.mxu0 0.0
        %618 = vmatpush1.msra.mxu0 0.0
        %619 = vmatprep.subr.mxu0 0.0
        %620 = vmatpush1.msra.mxu0 0.0
        %621 = vmatprep.subr.mxu0 0.0
        %622 = vmatpush1.msra.mxu0 0.0
        %623 = vmatprep.subr.mxu0 0.0
        %624 = vmatpush1.msra.mxu0 0.0
        %625 = vmatprep.subr.mxu0 0.0
        %626 = vmatpush1.msra.mxu0 0.0
        %627 = vmatprep.subr.mxu0 0.0
        %628 = vmatpush1.msra.mxu0 0.0
        %629 = vmatprep.subr.mxu0 0.0
        %630 = vmatpush1.msra.mxu0 0.0
        %631 = vmatprep.subr.mxu0 0.0
        %632 = vmatpush1.msra.mxu0 0.0
        %633 = vmatprep.subr.mxu0 0.0
        %634 = vmatpush1.msra.mxu0 0.0
        %635 = vmatprep.subr.mxu0 0.0
        %636 = vmatpush1.msra.mxu0 0.0
        %637 = vmatprep.subr.mxu0 0.0
        %638 = vmatpush1.msra.mxu0 0.0
        %639 = vmatprep.mubr.f32.mxu0 0.0
        %v640 = vand.u32 %v569, 4294901760
        %v641 = vsub.f32 %v569, %v640
        %v642 = vand.u32 %v641, 4294901760
        %v643 = vsub.f32 %v641, %v642
        %v644 = vand.u32 %v643, 4294901760
        %645 = vmatmul.mubr.f32.gmra.mrb[0].mxu0 %v644
        %v646 = vpop.f32.mrb[0].mxu0
        %v647 = vadd.f32 %v565, %v646
        %v648 = vpop.f32.mrb[0].mxu0
        %649 = vdwg.mxu0
        %650 = vmatprep.subr.mxu0 0.0
        %v651 = vand.u32 %v556, 4294901760
        %v652 = vsub.f32 %v556, %v651
        %v653 = vand.u32 %v652, 4294901760
        %v654 = vsub.f32 %v652, %v653
        %v655 = vand.u32 %v654, 4294901760
        %656 = vmatpush1.msra.mxu0 %v655
        %657 = vmatprep.subr.mxu0 0.0
        %v658 = vand.u32 %v557, 4294901760
        %v659 = vsub.f32 %v557, %v658
        %v660 = vand.u32 %v659, 4294901760
        %v661 = vsub.f32 %v659, %v660
        %v662 = vand.u32 %v661, 4294901760
        %663 = vmatpush1.msra.mxu0 %v662
        %664 = vmatprep.subr.mxu0 0.0
        %v665 = vand.u32 %v558, 4294901760
        %v666 = vsub.f32 %v558, %v665
        %v667 = vand.u32 %v666, 4294901760
        %v668 = vsub.f32 %v666, %v667
        %v669 = vand.u32 %v668, 4294901760
        %670 = vmatpush1.msra.mxu0 %v669
        %671 = vmatprep.subr.mxu0 0.0
        %v672 = vand.u32 %v559, 4294901760
        %v673 = vsub.f32 %v559, %v672
        %v674 = vand.u32 %v673, 4294901760
        %v675 = vsub.f32 %v673, %v674
        %v676 = vand.u32 %v675, 4294901760
        %677 = vmatpush1.msra.mxu0 %v676
        %678 = vmatprep.subr.mxu0 0.0
        %679 = vmatpush1.msra.mxu0 0.0
        %680 = vmatprep.subr.mxu0 0.0
        %681 = vmatpush1.msra.mxu0 0.0
        %682 = vmatprep.subr.mxu0 0.0
        %683 = vmatpush1.msra.mxu0 0.0
        %684 = vmatprep.subr.mxu0 0.0
        %685 = vmatpush1.msra.mxu0 0.0
        %686 = vmatprep.subr.mxu0 0.0
        %687 = vmatpush1.msra.mxu0 0.0
        %688 = vmatprep.subr.mxu0 0.0
        %689 = vmatpush1.msra.mxu0 0.0
        %690 = vmatprep.subr.mxu0 0.0
        %691 = vmatpush1.msra.mxu0 0.0
        %692 = vmatprep.subr.mxu0 0.0
        %693 = vmatpush1.msra.mxu0 0.0
        %694 = vmatprep.subr.mxu0 0.0
        %695 = vmatpush1.msra.mxu0 0.0
        %696 = vmatprep.subr.mxu0 0.0
        %697 = vmatpush1.msra.mxu0 0.0
        %698 = vmatprep.subr.mxu0 0.0
        %699 = vmatpush1.msra.mxu0 0.0
        %700 = vmatprep.subr.mxu0 0.0
        %701 = vmatpush1.msra.mxu0 0.0
        %702 = vmatprep.subr.mxu0 0.0
        %703 = vmatpush1.msra.mxu0 0.0
        %704 = vmatprep.subr.mxu0 0.0
        %705 = vmatpush1.msra.mxu0 0.0
        %706 = vmatprep.subr.mxu0 0.0
        %707 = vmatpush1.msra.mxu0 0.0
        %708 = vmatprep.subr.mxu0 0.0
        %709 = vmatpush1.msra.mxu0 0.0
        %710 = vmatprep.subr.mxu0 0.0
        %711 = vmatpush1.msra.mxu0 0.0
        %712 = vmatprep.subr.mxu0 0.0
        %713 = vmatpush1.msra.mxu0 0.0
        %714 = vmatprep.subr.mxu0 0.0
        %715 = vmatpush1.msra.mxu0 0.0
        %716 = vmatprep.subr.mxu0 0.0
        %717 = vmatpush1.msra.mxu0 0.0
        %718 = vmatprep.subr.mxu0 0.0
        %719 = vmatpush1.msra.mxu0 0.0
        %720 = vmatprep.subr.mxu0 0.0
        %721 = vmatpush1.msra.mxu0 0.0
        %722 = vmatprep.subr.mxu0 0.0
        %723 = vmatpush1.msra.mxu0 0.0
        %724 = vmatprep.subr.mxu0 0.0
        %725 = vmatpush1.msra.mxu0 0.0
        %726 = vmatprep.subr.mxu0 0.0
        %727 = vmatpush1.msra.mxu0 0.0
        %728 = vmatprep.subr.mxu0 0.0
        %729 = vmatpush1.msra.mxu0 0.0
        %730 = vmatprep.subr.mxu0 0.0
        %731 = vmatpush1.msra.mxu0 0.0
        %732 = vmatprep.subr.mxu0 0.0
        %733 = vmatpush1.msra.mxu0 0.0
        %734 = vmatprep.mubr.f32.mxu0 0.0
        %v735 = vand.u32 %v569, 4294901760
        %736 = vmatmul.mubr.f32.gmra.mrb[0].mxu0 %v735
        %v737 = vpop.f32.mrb[0].mxu0
        %v738 = vadd.f32 %v647, %v737
        %v739 = vpop.f32.mrb[0].mxu0
        %740 = vdwg.mxu0
        %741 = vmatprep.subr.mxu0 0.0
        %v742 = vand.u32 %v556, 4294901760
        %v743 = vsub.f32 %v556, %v742
        %744 = vmatpush1.msra.mxu0 %v743
        %745 = vmatprep.subr.mxu0 0.0
        %v746 = vand.u32 %v557, 4294901760
        %v747 = vsub.f32 %v557, %v746
        %748 = vmatpush1.msra.mxu0 %v747
        %749 = vmatprep.subr.mxu0 0.0
        %v750 = vand.u32 %v558, 4294901760
        %v751 = vsub.f32 %v558, %v750
        %752 = vmatpush1.msra.mxu0 %v751
        %753 = vmatprep.subr.mxu0 0.0
        %v754 = vand.u32 %v559, 4294901760
        %v755 = vsub.f32 %v559, %v754
        %756 = vmatpush1.msra.mxu0 %v755
        %757 = vmatprep.subr.mxu0 0.0
        %758 = vmatpush1.msra.mxu0 0.0
        %759 = vmatprep.subr.mxu0 0.0
        %760 = vmatpush1.msra.mxu0 0.0
        %761 = vmatprep.subr.mxu0 0.0
        %762 = vmatpush1.msra.mxu0 0.0
        %763 = vmatprep.subr.mxu0 0.0
        %764 = vmatpush1.msra.mxu0 0.0
        %765 = vmatprep.subr.mxu0 0.0
        %766 = vmatpush1.msra.mxu0 0.0
        %767 = vmatprep.subr.mxu0 0.0
        %768 = vmatpush1.msra.mxu0 0.0
        %769 = vmatprep.subr.mxu0 0.0
        %770 = vmatpush1.msra.mxu0 0.0
        %771 = vmatprep.subr.mxu0 0.0
        %772 = vmatpush1.msra.mxu0 0.0
        %773 = vmatprep.subr.mxu0 0.0
        %774 = vmatpush1.msra.mxu0 0.0
        %775 = vmatprep.subr.mxu0 0.0
        %776 = vmatpush1.msra.mxu0 0.0
        %777 = vmatprep.subr.mxu0 0.0
        %778 = vmatpush1.msra.mxu0 0.0
        %779 = vmatprep.subr.mxu0 0.0
        %780 = vmatpush1.msra.mxu0 0.0
        %781 = vmatprep.subr.mxu0 0.0
        %782 = vmatpush1.msra.mxu0 0.0
        %783 = vmatprep.subr.mxu0 0.0
        %784 = vmatpush1.msra.mxu0 0.0
        %785 = vmatprep.subr.mxu0 0.0
        %786 = vmatpush1.msra.mxu0 0.0
        %787 = vmatprep.subr.mxu0 0.0
        %788 = vmatpush1.msra.mxu0 0.0
        %789 = vmatprep.subr.mxu0 0.0
        %790 = vmatpush1.msra.mxu0 0.0
        %791 = vmatprep.subr.mxu0 0.0
        %792 = vmatpush1.msra.mxu0 0.0
        %793 = vmatprep.subr.mxu0 0.0
        %794 = vmatpush1.msra.mxu0 0.0
        %795 = vmatprep.subr.mxu0 0.0
        %796 = vmatpush1.msra.mxu0 0.0
        %797 = vmatprep.subr.mxu0 0.0
        %798 = vmatpush1.msra.mxu0 0.0
        %799 = vmatprep.subr.mxu0 0.0
        %800 = vmatpush1.msra.mxu0 0.0
        %801 = vmatprep.subr.mxu0 0.0
        %802 = vmatpush1.msra.mxu0 0.0
        %803 = vmatprep.subr.mxu0 0.0
        %804 = vmatpush1.msra.mxu0 0.0
        %805 = vmatprep.subr.mxu0 0.0
        %806 = vmatpush1.msra.mxu0 0.0
        %807 = vmatprep.subr.mxu0 0.0
        %808 = vmatpush1.msra.mxu0 0.0
        %809 = vmatprep.subr.mxu0 0.0
        %810 = vmatpush1.msra.mxu0 0.0
        %811 = vmatprep.subr.mxu0 0.0
        %812 = vmatpush1.msra.mxu0 0.0
        %813 = vmatprep.mubr.f32.mxu0 0.0
        %v814 = vand.u32 %v569, 4294901760
        %v815 = vsub.f32 %v569, %v814
        %816 = vmatmul.mubr.f32.gmra.mrb[0].mxu0 %v815
        %v817 = vpop.f32.mrb[0].mxu0
        %v818 = vadd.f32 %v738, %v817
        %v819 = vpop.f32.mrb[0].mxu0
        %820 = vdwg.mxu0
        %821 = vmatprep.subr.mxu0 0.0
        %v822 = vand.u32 %v556, 4294901760
        %823 = vmatpush1.msra.mxu0 %v822
        %824 = vmatprep.subr.mxu0 0.0
        %v825 = vand.u32 %v557, 4294901760
        %826 = vmatpush1.msra.mxu0 %v825
        %827 = vmatprep.subr.mxu0 0.0
        %v828 = vand.u32 %v558, 4294901760
        %829 = vmatpush1.msra.mxu0 %v828
        %830 = vmatprep.subr.mxu0 0.0
        %v831 = vand.u32 %v559, 4294901760
        %832 = vmatpush1.msra.mxu0 %v831
        %833 = vmatprep.subr.mxu0 0.0
        %834 = vmatpush1.msra.mxu0 0.0
        %835 = vmatprep.subr.mxu0 0.0
        %836 = vmatpush1.msra.mxu0 0.0
        %837 = vmatprep.subr.mxu0 0.0
        %838 = vmatpush1.msra.mxu0 0.0
        %839 = vmatprep.subr.mxu0 0.0
        %840 = vmatpush1.msra.mxu0 0.0
        %841 = vmatprep.subr.mxu0 0.0
        %842 = vmatpush1.msra.mxu0 0.0
        %843 = vmatprep.subr.mxu0 0.0
        %844 = vmatpush1.msra.mxu0 0.0
        %845 = vmatprep.subr.mxu0 0.0
        %846 = vmatpush1.msra.mxu0 0.0
        %847 = vmatprep.subr.mxu0 0.0
        %848 = vmatpush1.msra.mxu0 0.0
        %849 = vmatprep.subr.mxu0 0.0
        %850 = vmatpush1.msra.mxu0 0.0
        %851 = vmatprep.subr.mxu0 0.0
        %852 = vmatpush1.msra.mxu0 0.0
        %853 = vmatprep.subr.mxu0 0.0
        %854 = vmatpush1.msra.mxu0 0.0
        %855 = vmatprep.subr.mxu0 0.0
        %856 = vmatpush1.msra.mxu0 0.0
        %857 = vmatprep.subr.mxu0 0.0
        %858 = vmatpush1.msra.mxu0 0.0
        %859 = vmatprep.subr.mxu0 0.0
        %860 = vmatpush1.msra.mxu0 0.0
        %861 = vmatprep.subr.mxu0 0.0
        %862 = vmatpush1.msra.mxu0 0.0
        %863 = vmatprep.subr.mxu0 0.0
        %864 = vmatpush1.msra.mxu0 0.0
        %865 = vmatprep.subr.mxu0 0.0
        %866 = vmatpush1.msra.mxu0 0.0
        %867 = vmatprep.subr.mxu0 0.0
        %868 = vmatpush1.msra.mxu0 0.0
        %869 = vmatprep.subr.mxu0 0.0
        %870 = vmatpush1.msra.mxu0 0.0
        %871 = vmatprep.subr.mxu0 0.0
        %872 = vmatpush1.msra.mxu0 0.0
        %873 = vmatprep.subr.mxu0 0.0
        %874 = vmatpush1.msra.mxu0 0.0
        %875 = vmatprep.subr.mxu0 0.0
        %876 = vmatpush1.msra.mxu0 0.0
        %877 = vmatprep.subr.mxu0 0.0
        %878 = vmatpush1.msra.mxu0 0.0
        %879 = vmatprep.subr.mxu0 0.0
        %880 = vmatpush1.msra.mxu0 0.0
        %881 = vmatprep.subr.mxu0 0.0
        %882 = vmatpush1.msra.mxu0 0.0
        %883 = vmatprep.subr.mxu0 0.0
        %884 = vmatpush1.msra.mxu0 0.0
        %885 = vmatprep.subr.mxu0 0.0
        %886 = vmatpush1.msra.mxu0 0.0
        %887 = vmatprep.subr.mxu0 0.0
        %888 = vmatpush1.msra.mxu0 0.0
        %889 = vmatprep.mubr.f32.mxu0 0.0
        %v890 = vand.u32 %v569, 4294901760
        %v891 = vsub.f32 %v569, %v890
        %v892 = vand.u32 %v891, 4294901760
        %893 = vmatmul.mubr.f32.gmra.mrb[0].mxu0 %v892
        %v894 = vpop.f32.mrb[0].mxu0
        %v895 = vadd.f32 %v818, %v894
        %v896 = vpop.f32.mrb[0].mxu0
        %897 = vdwg.mxu0
        %898 = vmatprep.subr.mxu0 0.0
        %v899 = vand.u32 %v556, 4294901760
        %v900 = vsub.f32 %v556, %v899
        %v901 = vand.u32 %v900, 4294901760
        %902 = vmatpush1.msra.mxu0 %v901
        %903 = vmatprep.subr.mxu0 0.0
        %v904 = vand.u32 %v557, 4294901760
        %v905 = vsub.f32 %v557, %v904
        %v906 = vand.u32 %v905, 4294901760
        %907 = vmatpush1.msra.mxu0 %v906
        %908 = vmatprep.subr.mxu0 0.0
        %v909 = vand.u32 %v558, 4294901760
        %v910 = vsub.f32 %v558, %v909
        %v911 = vand.u32 %v910, 4294901760
        %912 = vmatpush1.msra.mxu0 %v911
        %913 = vmatprep.subr.mxu0 0.0
        %v914 = vand.u32 %v559, 4294901760
        %v915 = vsub.f32 %v559, %v914
        %v916 = vand.u32 %v915, 4294901760
        %917 = vmatpush1.msra.mxu0 %v916
        %918 = vmatprep.subr.mxu0 0.0
        %919 = vmatpush1.msra.mxu0 0.0
        %920 = vmatprep.subr.mxu0 0.0
        %921 = vmatpush1.msra.mxu0 0.0
        %922 = vmatprep.subr.mxu0 0.0
        %923 = vmatpush1.msra.mxu0 0.0
        %924 = vmatprep.subr.mxu0 0.0
        %925 = vmatpush1.msra.mxu0 0.0
        %926 = vmatprep.subr.mxu0 0.0
        %927 = vmatpush1.msra.mxu0 0.0
        %928 = vmatprep.subr.mxu0 0.0
        %929 = vmatpush1.msra.mxu0 0.0
        %930 = vmatprep.subr.mxu0 0.0
        %931 = vmatpush1.msra.mxu0 0.0
        %932 = vmatprep.subr.mxu0 0.0
        %933 = vmatpush1.msra.mxu0 0.0
        %934 = vmatprep.subr.mxu0 0.0
        %935 = vmatpush1.msra.mxu0 0.0
        %936 = vmatprep.subr.mxu0 0.0
        %937 = vmatpush1.msra.mxu0 0.0
        %938 = vmatprep.subr.mxu0 0.0
        %939 = vmatpush1.msra.mxu0 0.0
        %940 = vmatprep.subr.mxu0 0.0
        %941 = vmatpush1.msra.mxu0 0.0
        %942 = vmatprep.subr.mxu0 0.0
        %943 = vmatpush1.msra.mxu0 0.0
        %944 = vmatprep.subr.mxu0 0.0
        %945 = vmatpush1.msra.mxu0 0.0
        %946 = vmatprep.subr.mxu0 0.0
        %947 = vmatpush1.msra.mxu0 0.0
        %948 = vmatprep.subr.mxu0 0.0
        %949 = vmatpush1.msra.mxu0 0.0
        %950 = vmatprep.subr.mxu0 0.0
        %951 = vmatpush1.msra.mxu0 0.0
        %952 = vmatprep.subr.mxu0 0.0
        %953 = vmatpush1.msra.mxu0 0.0
        %954 = vmatprep.subr.mxu0 0.0
        %955 = vmatpush1.msra.mxu0 0.0
        %956 = vmatprep.subr.mxu0 0.0
        %957 = vmatpush1.msra.mxu0 0.0
        %958 = vmatprep.subr.mxu0 0.0
        %959 = vmatpush1.msra.mxu0 0.0
        %960 = vmatprep.subr.mxu0 0.0
        %961 = vmatpush1.msra.mxu0 0.0
        %962 = vmatprep.subr.mxu0 0.0
        %963 = vmatpush1.msra.mxu0 0.0
        %964 = vmatprep.subr.mxu0 0.0
        %965 = vmatpush1.msra.mxu0 0.0
        %966 = vmatprep.subr.mxu0 0.0
        %967 = vmatpush1.msra.mxu0 0.0
        %968 = vmatprep.subr.mxu0 0.0
        %969 = vmatpush1.msra.mxu0 0.0
        %970 = vmatprep.subr.mxu0 0.0
        %971 = vmatpush1.msra.mxu0 0.0
        %972 = vmatprep.subr.mxu0 0.0
        %973 = vmatpush1.msra.mxu0 0.0
        %974 = vmatprep.mubr.f32.mxu0 0.0
        %v975 = vand.u32 %v569, 4294901760
        %976 = vmatmul.mubr.f32.gmra.mrb[0].mxu0 %v975
        %v977 = vpop.f32.mrb[0].mxu0
        %v978 = vadd.f32 %v895, %v977
        %v979 = vpop.f32.mrb[0].mxu0
        %980 = vdwg.mxu0
        %981 = vmatprep.subr.mxu0 0.0
        %v982 = vand.u32 %v556, 4294901760
        %983 = vmatpush1.msra.mxu0 %v982
        %984 = vmatprep.subr.mxu0 0.0
        %v985 = vand.u32 %v557, 4294901760
        %986 = vmatpush1.msra.mxu0 %v985
        %987 = vmatprep.subr.mxu0 0.0
        %v988 = vand.u32 %v558, 4294901760
        %989 = vmatpush1.msra.mxu0 %v988
        %990 = vmatprep.subr.mxu0 0.0
        %v991 = vand.u32 %v559, 4294901760
        %992 = vmatpush1.msra.mxu0 %v991
        %993 = vmatprep.subr.mxu0 0.0
        %994 = vmatpush1.msra.mxu0 0.0
        %995 = vmatprep.subr.mxu0 0.0
        %996 = vmatpush1.msra.mxu0 0.0
        %997 = vmatprep.subr.mxu0 0.0
        %998 = vmatpush1.msra.mxu0 0.0
        %999 = vmatprep.subr.mxu0 0.0
        %1000 = vmatpush1.msra.mxu0 0.0
        %1001 = vmatprep.subr.mxu0 0.0
        %1002 = vmatpush1.msra.mxu0 0.0
        %1003 = vmatprep.subr.mxu0 0.0
        %1004 = vmatpush1.msra.mxu0 0.0
        %1005 = vmatprep.subr.mxu0 0.0
        %1006 = vmatpush1.msra.mxu0 0.0
        %1007 = vmatprep.subr.mxu0 0.0
        %1008 = vmatpush1.msra.mxu0 0.0
        %1009 = vmatprep.subr.mxu0 0.0
        %1010 = vmatpush1.msra.mxu0 0.0
        %1011 = vmatprep.subr.mxu0 0.0
        %1012 = vmatpush1.msra.mxu0 0.0
        %1013 = vmatprep.subr.mxu0 0.0
        %1014 = vmatpush1.msra.mxu0 0.0
        %1015 = vmatprep.subr.mxu0 0.0
        %1016 = vmatpush1.msra.mxu0 0.0
        %1017 = vmatprep.subr.mxu0 0.0
        %1018 = vmatpush1.msra.mxu0 0.0
        %1019 = vmatprep.subr.mxu0 0.0
        %1020 = vmatpush1.msra.mxu0 0.0
        %1021 = vmatprep.subr.mxu0 0.0
        %1022 = vmatpush1.msra.mxu0 0.0
        %1023 = vmatprep.subr.mxu0 0.0
        %1024 = vmatpush1.msra.mxu0 0.0
        %1025 = vmatprep.subr.mxu0 0.0
        %1026 = vmatpush1.msra.mxu0 0.0
        %1027 = vmatprep.subr.mxu0 0.0
        %1028 = vmatpush1.msra.mxu0 0.0
        %1029 = vmatprep.subr.mxu0 0.0
        %1030 = vmatpush1.msra.mxu0 0.0
        %1031 = vmatprep.subr.mxu0 0.0
        %1032 = vmatpush1.msra.mxu0 0.0
        %1033 = vmatprep.subr.mxu0 0.0
        %1034 = vmatpush1.msra.mxu0 0.0
        %1035 = vmatprep.subr.mxu0 0.0
        %1036 = vmatpush1.msra.mxu0 0.0
        %1037 = vmatprep.subr.mxu0 0.0
        %1038 = vmatpush1.msra.mxu0 0.0
        %1039 = vmatprep.subr.mxu0 0.0
        %1040 = vmatpush1.msra.mxu0 0.0
        %1041 = vmatprep.subr.mxu0 0.0
        %1042 = vmatpush1.msra.mxu0 0.0
        %1043 = vmatprep.subr.mxu0 0.0
        %1044 = vmatpush1.msra.mxu0 0.0
        %1045 = vmatprep.subr.mxu0 0.0
        %1046 = vmatpush1.msra.mxu0 0.0
        %1047 = vmatprep.subr.mxu0 0.0
        %1048 = vmatpush1.msra.mxu0 0.0
        %1049 = vmatprep.mubr.f32.mxu0 0.0
        %v1050 = vand.u32 %v569, 4294901760
        %1051 = vmatmul.mubr.f32.gmra.mrb[0].mxu0 %v1050
        %v1052 = vpop.f32.mrb[0].mxu0
        %v1053 = vadd.f32 %v978, %v1052
        %v1054 = vpop.f32.mrb[0].mxu0
        %1055 = vdwg.mxu0
        %v1056 = vmul.f32 %v1053, 0.35355338
        %v1057 = vld [vmem:[#allocation9] sm:$0xff]
        %v1058 = vld [vmem:[#allocation9 + $0x8] sm:$0xff]
        %v1059 = vld [vmem:[#allocation9 + $0x10] sm:$0xff]
        %v1060 = vld [vmem:[#allocation9 + $0x18] sm:$0xff]
        %v1061 = vld [vmem:[%s6] sm:$0x1]
        %v1063 = vlaneseq
        %v1064 = vshrl.u32 %v1063, 7
        %v1065 = vsub.s32 0, %v1064
        %v1066 = vrot.slane %v1061, %v1065
        %v1069 = vsel %vm567, %v554, 0
        %1071 = vmatprep.subr.mxu0 0.0
        %v1072 = vand.u32 %v1057, 4294901760
        %1073 = vmatpush1.msra.mxu0 %v1072
        %1074 = vmatprep.subr.mxu0 0.0
        %v1075 = vand.u32 %v1058, 4294901760
        %1076 = vmatpush1.msra.mxu0 %v1075
        %1077 = vmatprep.subr.mxu0 0.0
        %v1078 = vand.u32 %v1059, 4294901760
        %1079 = vmatpush1.msra.mxu0 %v1078
        %1080 = vmatprep.subr.mxu0 0.0
        %v1081 = vand.u32 %v1060, 4294901760
        %1082 = vmatpush1.msra.mxu0 %v1081
        %1083 = vmatprep.subr.mxu0 0.0
        %1084 = vmatpush1.msra.mxu0 0.0
        %1085 = vmatprep.subr.mxu0 0.0
        %1086 = vmatpush1.msra.mxu0 0.0
        %1087 = vmatprep.subr.mxu0 0.0
        %1088 = vmatpush1.msra.mxu0 0.0
        %1089 = vmatprep.subr.mxu0 0.0
        %1090 = vmatpush1.msra.mxu0 0.0
        %1091 = vmatprep.subr.mxu0 0.0
        %1092 = vmatpush1.msra.mxu0 0.0
        %1093 = vmatprep.subr.mxu0 0.0
        %1094 = vmatpush1.msra.mxu0 0.0
        %1095 = vmatprep.subr.mxu0 0.0
        %1096 = vmatpush1.msra.mxu0 0.0
        %1097 = vmatprep.subr.mxu0 0.0
        %1098 = vmatpush1.msra.mxu0 0.0
        %1099 = vmatprep.subr.mxu0 0.0
        %1100 = vmatpush1.msra.mxu0 0.0
        %1101 = vmatprep.subr.mxu0 0.0
        %1102 = vmatpush1.msra.mxu0 0.0
        %1103 = vmatprep.subr.mxu0 0.0
        %1104 = vmatpush1.msra.mxu0 0.0
        %1105 = vmatprep.subr.mxu0 0.0
        %1106 = vmatpush1.msra.mxu0 0.0
        %1107 = vmatprep.subr.mxu0 0.0
        %1108 = vmatpush1.msra.mxu0 0.0
        %1109 = vmatprep.subr.mxu0 0.0
        %1110 = vmatpush1.msra.mxu0 0.0
        %1111 = vmatprep.subr.mxu0 0.0
        %1112 = vmatpush1.msra.mxu0 0.0
        %1113 = vmatprep.subr.mxu0 0.0
        %1114 = vmatpush1.msra.mxu0 0.0
        %1115 = vmatprep.subr.mxu0 0.0
        %1116 = vmatpush1.msra.mxu0 0.0
        %1117 = vmatprep.subr.mxu0 0.0
        %1118 = vmatpush1.msra.mxu0 0.0
        %1119 = vmatprep.subr.mxu0 0.0
        %1120 = vmatpush1.msra.mxu0 0.0
        %1121 = vmatprep.subr.mxu0 0.0
        %1122 = vmatpush1.msra.mxu0 0.0
        %1123 = vmatprep.subr.mxu0 0.0
        %1124 = vmatpush1.msra.mxu0 0.0
        %1125 = vmatprep.subr.mxu0 0.0
        %1126 = vmatpush1.msra.mxu0 0.0
        %1127 = vmatprep.subr.mxu0 0.0
        %1128 = vmatpush1.msra.mxu0 0.0
        %1129 = vmatprep.subr.mxu0 0.0
        %1130 = vmatpush1.msra.mxu0 0.0
        %1131 = vmatprep.subr.mxu0 0.0
        %1132 = vmatpush1.msra.mxu0 0.0
        %1133 = vmatprep.subr.mxu0 0.0
        %1134 = vmatpush1.msra.mxu0 0.0
        %1135 = vmatprep.subr.mxu0 0.0
        %1136 = vmatpush1.msra.mxu0 0.0
        %1137 = vmatprep.subr.mxu0 0.0
        %1138 = vmatpush1.msra.mxu0 0.0
        %1139 = vmatprep.mubr.f32.mxu0 0.0
        %v1140 = vand.u32 %v1069, 4294901760
        %v1141 = vsub.f32 %v1069, %v1140
        %v1142 = vand.u32 %v1141, 4294901760
        %v1143 = vsub.f32 %v1141, %v1142
        %v1144 = vand.u32 %v1143, 4294901760
        %1145 = vmatmul.mubr.f32.gmra.mrb[0].mxu0 %v1144
        %v1146 = vpop.f32.mrb[0].mxu0
        %v1147 = vadd.f32 %v1066, %v1146
        %v1148 = vpop.f32.mrb[0].mxu0
        %1149 = vdwg.mxu0
        %1150 = vmatprep.subr.mxu0 0.0
        %v1151 = vand.u32 %v1057, 4294901760
        %v1152 = vsub.f32 %v1057, %v1151
        %v1153 = vand.u32 %v1152, 4294901760
        %v1154 = vsub.f32 %v1152, %v1153
        %v1155 = vand.u32 %v1154, 4294901760
        %1156 = vmatpush1.msra.mxu0 %v1155
        %1157 = vmatprep.subr.mxu0 0.0
        %v1158 = vand.u32 %v1058, 4294901760
        %v1159 = vsub.f32 %v1058, %v1158
        %v1160 = vand.u32 %v1159, 4294901760
        %v1161 = vsub.f32 %v1159, %v1160
        %v1162 = vand.u32 %v1161, 4294901760
        %1163 = vmatpush1.msra.mxu0 %v1162
        %1164 = vmatprep.subr.mxu0 0.0
        %v1165 = vand.u32 %v1059, 4294901760
        %v1166 = vsub.f32 %v1059, %v1165
        %v1167 = vand.u32 %v1166, 4294901760
        %v1168 = vsub.f32 %v1166, %v1167
        %v1169 = vand.u32 %v1168, 4294901760
        %1170 = vmatpush1.msra.mxu0 %v1169
        %1171 = vmatprep.subr.mxu0 0.0
        %v1172 = vand.u32 %v1060, 4294901760
        %v1173 = vsub.f32 %v1060, %v1172
        %v1174 = vand.u32 %v1173, 4294901760
        %v1175 = vsub.f32 %v1173, %v1174
        %v1176 = vand.u32 %v1175, 4294901760
        %1177 = vmatpush1.msra.mxu0 %v1176
        %1178 = vmatprep.subr.mxu0 0.0
        %1179 = vmatpush1.msra.mxu0 0.0
        %1180 = vmatprep.subr.mxu0 0.0
        %1181 = vmatpush1.msra.mxu0 0.0
        %1182 = vmatprep.subr.mxu0 0.0
        %1183 = vmatpush1.msra.mxu0 0.0
        %1184 = vmatprep.subr.mxu0 0.0
        %1185 = vmatpush1.msra.mxu0 0.0
        %1186 = vmatprep.subr.mxu0 0.0
        %1187 = vmatpush1.msra.mxu0 0.0
        %1188 = vmatprep.subr.mxu0 0.0
        %1189 = vmatpush1.msra.mxu0 0.0
        %1190 = vmatprep.subr.mxu0 0.0
        %1191 = vmatpush1.msra.mxu0 0.0
        %1192 = vmatprep.subr.mxu0 0.0
        %1193 = vmatpush1.msra.mxu0 0.0
        %1194 = vmatprep.subr.mxu0 0.0
        %1195 = vmatpush1.msra.mxu0 0.0
        %1196 = vmatprep.subr.mxu0 0.0
        %1197 = vmatpush1.msra.mxu0 0.0
        %1198 = vmatprep.subr.mxu0 0.0
        %1199 = vmatpush1.msra.mxu0 0.0
        %1200 = vmatprep.subr.mxu0 0.0
        %1201 = vmatpush1.msra.mxu0 0.0
        %1202 = vmatprep.subr.mxu0 0.0
        %1203 = vmatpush1.msra.mxu0 0.0
        %1204 = vmatprep.subr.mxu0 0.0
        %1205 = vmatpush1.msra.mxu0 0.0
        %1206 = vmatprep.subr.mxu0 0.0
        %1207 = vmatpush1.msra.mxu0 0.0
        %1208 = vmatprep.subr.mxu0 0.0
        %1209 = vmatpush1.msra.mxu0 0.0
        %1210 = vmatprep.subr.mxu0 0.0
        %1211 = vmatpush1.msra.mxu0 0.0
        %1212 = vmatprep.subr.mxu0 0.0
        %1213 = vmatpush1.msra.mxu0 0.0
        %1214 = vmatprep.subr.mxu0 0.0
        %1215 = vmatpush1.msra.mxu0 0.0
        %1216 = vmatprep.subr.mxu0 0.0
        %1217 = vmatpush1.msra.mxu0 0.0
        %1218 = vmatprep.subr.mxu0 0.0
        %1219 = vmatpush1.msra.mxu0 0.0
        %1220 = vmatprep.subr.mxu0 0.0
        %1221 = vmatpush1.msra.mxu0 0.0
        %1222 = vmatprep.subr.mxu0 0.0
        %1223 = vmatpush1.msra.mxu0 0.0
        %1224 = vmatprep.subr.mxu0 0.0
        %1225 = vmatpush1.msra.mxu0 0.0
        %1226 = vmatprep.subr.mxu0 0.0
        %1227 = vmatpush1.msra.mxu0 0.0
        %1228 = vmatprep.subr.mxu0 0.0
        %1229 = vmatpush1.msra.mxu0 0.0
        %1230 = vmatprep.subr.mxu0 0.0
        %1231 = vmatpush1.msra.mxu0 0.0
        %1232 = vmatprep.subr.mxu0 0.0
        %1233 = vmatpush1.msra.mxu0 0.0
        %1234 = vmatprep.mubr.f32.mxu0 0.0
        %v1235 = vand.u32 %v1069, 4294901760
        %1236 = vmatmul.mubr.f32.gmra.mrb[0].mxu0 %v1235
        %v1237 = vpop.f32.mrb[0].mxu0
        %v1238 = vadd.f32 %v1147, %v1237
        %v1239 = vpop.f32.mrb[0].mxu0
        %1240 = vdwg.mxu0
        %1241 = vmatprep.subr.mxu0 0.0
        %v1242 = vand.u32 %v1057, 4294901760
        %v1243 = vsub.f32 %v1057, %v1242
        %1244 = vmatpush1.msra.mxu0 %v1243
        %1245 = vmatprep.subr.mxu0 0.0
        %v1246 = vand.u32 %v1058, 4294901760
        %v1247 = vsub.f32 %v1058, %v1246
        %1248 = vmatpush1.msra.mxu0 %v1247
        %1249 = vmatprep.subr.mxu0 0.0
        %v1250 = vand.u32 %v1059, 4294901760
        %v1251 = vsub.f32 %v1059, %v1250
        %1252 = vmatpush1.msra.mxu0 %v1251
        %1253 = vmatprep.subr.mxu0 0.0
        %v1254 = vand.u32 %v1060, 4294901760
        %v1255 = vsub.f32 %v1060, %v1254
        %1256 = vmatpush1.msra.mxu0 %v1255
        %1257 = vmatprep.subr.mxu0 0.0
        %1258 = vmatpush1.msra.mxu0 0.0
        %1259 = vmatprep.subr.mxu0 0.0
        %1260 = vmatpush1.msra.mxu0 0.0
        %1261 = vmatprep.subr.mxu0 0.0
        %1262 = vmatpush1.msra.mxu0 0.0
        %1263 = vmatprep.subr.mxu0 0.0
        %1264 = vmatpush1.msra.mxu0 0.0
        %1265 = vmatprep.subr.mxu0 0.0
        %1266 = vmatpush1.msra.mxu0 0.0
        %1267 = vmatprep.subr.mxu0 0.0
        %1268 = vmatpush1.msra.mxu0 0.0
        %1269 = vmatprep.subr.mxu0 0.0
        %1270 = vmatpush1.msra.mxu0 0.0
        %1271 = vmatprep.subr.mxu0 0.0
        %1272 = vmatpush1.msra.mxu0 0.0
        %1273 = vmatprep.subr.mxu0 0.0
        %1274 = vmatpush1.msra.mxu0 0.0
        %1275 = vmatprep.subr.mxu0 0.0
        %1276 = vmatpush1.msra.mxu0 0.0
        %1277 = vmatprep.subr.mxu0 0.0
        %1278 = vmatpush1.msra.mxu0 0.0
        %1279 = vmatprep.subr.mxu0 0.0
        %1280 = vmatpush1.msra.mxu0 0.0
        %1281 = vmatprep.subr.mxu0 0.0
        %1282 = vmatpush1.msra.mxu0 0.0
        %1283 = vmatprep.subr.mxu0 0.0
        %1284 = vmatpush1.msra.mxu0 0.0
        %1285 = vmatprep.subr.mxu0 0.0
        %1286 = vmatpush1.msra.mxu0 0.0
        %1287 = vmatprep.subr.mxu0 0.0
        %1288 = vmatpush1.msra.mxu0 0.0
        %1289 = vmatprep.subr.mxu0 0.0
        %1290 = vmatpush1.msra.mxu0 0.0
        %1291 = vmatprep.subr.mxu0 0.0
        %1292 = vmatpush1.msra.mxu0 0.0
        %1293 = vmatprep.subr.mxu0 0.0
        %1294 = vmatpush1.msra.mxu0 0.0
        %1295 = vmatprep.subr.mxu0 0.0
        %1296 = vmatpush1.msra.mxu0 0.0
        %1297 = vmatprep.subr.mxu0 0.0
        %1298 = vmatpush1.msra.mxu0 0.0
        %1299 = vmatprep.subr.mxu0 0.0
        %1300 = vmatpush1.msra.mxu0 0.0
        %1301 = vmatprep.subr.mxu0 0.0
        %1302 = vmatpush1.msra.mxu0 0.0
        %1303 = vmatprep.subr.mxu0 0.0
        %1304 = vmatpush1.msra.mxu0 0.0
        %1305 = vmatprep.subr.mxu0 0.0
        %1306 = vmatpush1.msra.mxu0 0.0
        %1307 = vmatprep.subr.mxu0 0.0
        %1308 = vmatpush1.msra.mxu0 0.0
        %1309 = vmatprep.subr.mxu0 0.0
        %1310 = vmatpush1.msra.mxu0 0.0
        %1311 = vmatprep.subr.mxu0 0.0
        %1312 = vmatpush1.msra.mxu0 0.0
        %1313 = vmatprep.mubr.f32.mxu0 0.0
        %v1314 = vand.u32 %v1069, 4294901760
        %v1315 = vsub.f32 %v1069, %v1314
        %1316 = vmatmul.mubr.f32.gmra.mrb[0].mxu0 %v1315
        %v1317 = vpop.f32.mrb[0].mxu0
        %v1318 = vadd.f32 %v1238, %v1317
        %v1319 = vpop.f32.mrb[0].mxu0
        %1320 = vdwg.mxu0
        %1321 = vmatprep.subr.mxu0 0.0
        %v1322 = vand.u32 %v1057, 4294901760
        %1323 = vmatpush1.msra.mxu0 %v1322
        %1324 = vmatprep.subr.mxu0 0.0
        %v1325 = vand.u32 %v1058, 4294901760
        %1326 = vmatpush1.msra.mxu0 %v1325
        %1327 = vmatprep.subr.mxu0 0.0
        %v1328 = vand.u32 %v1059, 4294901760
        %1329 = vmatpush1.msra.mxu0 %v1328
        %1330 = vmatprep.subr.mxu0 0.0
        %v1331 = vand.u32 %v1060, 4294901760
        %1332 = vmatpush1.msra.mxu0 %v1331
        %1333 = vmatprep.subr.mxu0 0.0
        %1334 = vmatpush1.msra.mxu0 0.0
        %1335 = vmatprep.subr.mxu0 0.0
        %1336 = vmatpush1.msra.mxu0 0.0
        %1337 = vmatprep.subr.mxu0 0.0
        %1338 = vmatpush1.msra.mxu0 0.0
        %1339 = vmatprep.subr.mxu0 0.0
        %1340 = vmatpush1.msra.mxu0 0.0
        %1341 = vmatprep.subr.mxu0 0.0
        %1342 = vmatpush1.msra.mxu0 0.0
        %1343 = vmatprep.subr.mxu0 0.0
        %1344 = vmatpush1.msra.mxu0 0.0
        %1345 = vmatprep.subr.mxu0 0.0
        %1346 = vmatpush1.msra.mxu0 0.0
        %1347 = vmatprep.subr.mxu0 0.0
        %1348 = vmatpush1.msra.mxu0 0.0
        %1349 = vmatprep.subr.mxu0 0.0
        %1350 = vmatpush1.msra.mxu0 0.0
        %1351 = vmatprep.subr.mxu0 0.0
        %1352 = vmatpush1.msra.mxu0 0.0
        %1353 = vmatprep.subr.mxu0 0.0
        %1354 = vmatpush1.msra.mxu0 0.0
        %1355 = vmatprep.subr.mxu0 0.0
        %1356 = vmatpush1.msra.mxu0 0.0
        %1357 = vmatprep.subr.mxu0 0.0
        %1358 = vmatpush1.msra.mxu0 0.0
        %1359 = vmatprep.subr.mxu0 0.0
        %1360 = vmatpush1.msra.mxu0 0.0
        %1361 = vmatprep.subr.mxu0 0.0
        %1362 = vmatpush1.msra.mxu0 0.0
        %1363 = vmatprep.subr.mxu0 0.0
        %1364 = vmatpush1.msra.mxu0 0.0
        %1365 = vmatprep.subr.mxu0 0.0
        %1366 = vmatpush1.msra.mxu0 0.0
        %1367 = vmatprep.subr.mxu0 0.0
        %1368 = vmatpush1.msra.mxu0 0.0
        %1369 = vmatprep.subr.mxu0 0.0
        %1370 = vmatpush1.msra.mxu0 0.0
        %1371 = vmatprep.subr.mxu0 0.0
        %1372 = vmatpush1.msra.mxu0 0.0
        %1373 = vmatprep.subr.mxu0 0.0
        %1374 = vmatpush1.msra.mxu0 0.0
        %1375 = vmatprep.subr.mxu0 0.0
        %1376 = vmatpush1.msra.mxu0 0.0
        %1377 = vmatprep.subr.mxu0 0.0
        %1378 = vmatpush1.msra.mxu0 0.0
        %1379 = vmatprep.subr.mxu0 0.0
        %1380 = vmatpush1.msra.mxu0 0.0
        %1381 = vmatprep.subr.mxu0 0.0
        %1382 = vmatpush1.msra.mxu0 0.0
        %1383 = vmatprep.subr.mxu0 0.0
        %1384 = vmatpush1.msra.mxu0 0.0
        %1385 = vmatprep.subr.mxu0 0.0
        %1386 = vmatpush1.msra.mxu0 0.0
        %1387 = vmatprep.subr.mxu0 0.0
        %1388 = vmatpush1.msra.mxu0 0.0
        %1389 = vmatprep.mubr.f32.mxu0 0.0
        %v1390 = vand.u32 %v1069, 4294901760
        %v1391 = vsub.f32 %v1069, %v1390
        %v1392 = vand.u32 %v1391, 4294901760
        %1393 = vmatmul.mubr.f32.gmra.mrb[0].mxu0 %v1392
        %v1394 = vpop.f32.mrb[0].mxu0
        %v1395 = vadd.f32 %v1318, %v1394
        %v1396 = vpop.f32.mrb[0].mxu0
        %1397 = vdwg.mxu0
        %1398 = vmatprep.subr.mxu0 0.0
        %v1399 = vand.u32 %v1057, 4294901760
        %v1400 = vsub.f32 %v1057, %v1399
        %v1401 = vand.u32 %v1400, 4294901760
        %1402 = vmatpush1.msra.mxu0 %v1401
        %1403 = vmatprep.subr.mxu0 0.0
        %v1404 = vand.u32 %v1058, 4294901760
        %v1405 = vsub.f32 %v1058, %v1404
        %v1406 = vand.u32 %v1405, 4294901760
        %1407 = vmatpush1.msra.mxu0 %v1406
        %1408 = vmatprep.subr.mxu0 0.0
        %v1409 = vand.u32 %v1059, 4294901760
        %v1410 = vsub.f32 %v1059, %v1409
        %v1411 = vand.u32 %v1410, 4294901760
        %1412 = vmatpush1.msra.mxu0 %v1411
        %1413 = vmatprep.subr.mxu0 0.0
        %v1414 = vand.u32 %v1060, 4294901760
        %v1415 = vsub.f32 %v1060, %v1414
        %v1416 = vand.u32 %v1415, 4294901760
        %1417 = vmatpush1.msra.mxu0 %v1416
        %1418 = vmatprep.subr.mxu0 0.0
        %1419 = vmatpush1.msra.mxu0 0.0
        %1420 = vmatprep.subr.mxu0 0.0
        %1421 = vmatpush1.msra.mxu0 0.0
        %1422 = vmatprep.subr.mxu0 0.0
        %1423 = vmatpush1.msra.mxu0 0.0
        %1424 = vmatprep.subr.mxu0 0.0
        %1425 = vmatpush1.msra.mxu0 0.0
        %1426 = vmatprep.subr.mxu0 0.0
        %1427 = vmatpush1.msra.mxu0 0.0
        %1428 = vmatprep.subr.mxu0 0.0
        %1429 = vmatpush1.msra.mxu0 0.0
        %1430 = vmatprep.subr.mxu0 0.0
        %1431 = vmatpush1.msra.mxu0 0.0
        %1432 = vmatprep.subr.mxu0 0.0
        %1433 = vmatpush1.msra.mxu0 0.0
        %1434 = vmatprep.subr.mxu0 0.0
        %1435 = vmatpush1.msra.mxu0 0.0
        %1436 = vmatprep.subr.mxu0 0.0
        %1437 = vmatpush1.msra.mxu0 0.0
        %1438 = vmatprep.subr.mxu0 0.0
        %1439 = vmatpush1.msra.mxu0 0.0
        %1440 = vmatprep.subr.mxu0 0.0
        %1441 = vmatpush1.msra.mxu0 0.0
        %1442 = vmatprep.subr.mxu0 0.0
        %1443 = vmatpush1.msra.mxu0 0.0
        %1444 = vmatprep.subr.mxu0 0.0
        %1445 = vmatpush1.msra.mxu0 0.0
        %1446 = vmatprep.subr.mxu0 0.0
        %1447 = vmatpush1.msra.mxu0 0.0
        %1448 = vmatprep.subr.mxu0 0.0
        %1449 = vmatpush1.msra.mxu0 0.0
        %1450 = vmatprep.subr.mxu0 0.0
        %1451 = vmatpush1.msra.mxu0 0.0
        %1452 = vmatprep.subr.mxu0 0.0
        %1453 = vmatpush1.msra.mxu0 0.0
        %1454 = vmatprep.subr.mxu0 0.0
        %1455 = vmatpush1.msra.mxu0 0.0
        %1456 = vmatprep.subr.mxu0 0.0
        %1457 = vmatpush1.msra.mxu0 0.0
        %1458 = vmatprep.subr.mxu0 0.0
        %1459 = vmatpush1.msra.mxu0 0.0
        %1460 = vmatprep.subr.mxu0 0.0
        %1461 = vmatpush1.msra.mxu0 0.0
        %1462 = vmatprep.subr.mxu0 0.0
        %1463 = vmatpush1.msra.mxu0 0.0
        %1464 = vmatprep.subr.mxu0 0.0
        %1465 = vmatpush1.msra.mxu0 0.0
        %1466 = vmatprep.subr.mxu0 0.0
        %1467 = vmatpush1.msra.mxu0 0.0
        %1468 = vmatprep.subr.mxu0 0.0
        %1469 = vmatpush1.msra.mxu0 0.0
        %1470 = vmatprep.subr.mxu0 0.0
        %1471 = vmatpush1.msra.mxu0 0.0
        %1472 = vmatprep.subr.mxu0 0.0
        %1473 = vmatpush1.msra.mxu0 0.0
        %1474 = vmatprep.mubr.f32.mxu0 0.0
        %v1475 = vand.u32 %v1069, 4294901760
        %1476 = vmatmul.mubr.f32.gmra.mrb[0].mxu0 %v1475
        %v1477 = vpop.f32.mrb[0].mxu0
        %v1478 = vadd.f32 %v1395, %v1477
        %v1479 = vpop.f32.mrb[0].mxu0
        %1480 = vdwg.mxu0
        %1481 = vmatprep.subr.mxu0 0.0
        %v1482 = vand.u32 %v1057, 4294901760
        %1483 = vmatpush1.msra.mxu0 %v1482
        %1484 = vmatprep.subr.mxu0 0.0
        %v1485 = vand.u32 %v1058, 4294901760
        %1486 = vmatpush1.msra.mxu0 %v1485
        %1487 = vmatprep.subr.mxu0 0.0
        %v1488 = vand.u32 %v1059, 4294901760
        %1489 = vmatpush1.msra.mxu0 %v1488
        %1490 = vmatprep.subr.mxu0 0.0
        %v1491 = vand.u32 %v1060, 4294901760
        %1492 = vmatpush1.msra.mxu0 %v1491
        %1493 = vmatprep.subr.mxu0 0.0
        %1494 = vmatpush1.msra.mxu0 0.0
        %1495 = vmatprep.subr.mxu0 0.0
        %1496 = vmatpush1.msra.mxu0 0.0
        %1497 = vmatprep.subr.mxu0 0.0
        %1498 = vmatpush1.msra.mxu0 0.0
        %1499 = vmatprep.subr.mxu0 0.0
        %1500 = vmatpush1.msra.mxu0 0.0
        %1501 = vmatprep.subr.mxu0 0.0
        %1502 = vmatpush1.msra.mxu0 0.0
        %1503 = vmatprep.subr.mxu0 0.0
        %1504 = vmatpush1.msra.mxu0 0.0
        %1505 = vmatprep.subr.mxu0 0.0
        %1506 = vmatpush1.msra.mxu0 0.0
        %1507 = vmatprep.subr.mxu0 0.0
        %1508 = vmatpush1.msra.mxu0 0.0
        %1509 = vmatprep.subr.mxu0 0.0
        %1510 = vmatpush1.msra.mxu0 0.0
        %1511 = vmatprep.subr.mxu0 0.0
        %1512 = vmatpush1.msra.mxu0 0.0
        %1513 = vmatprep.subr.mxu0 0.0
        %1514 = vmatpush1.msra.mxu0 0.0
        %1515 = vmatprep.subr.mxu0 0.0
        %1516 = vmatpush1.msra.mxu0 0.0
        %1517 = vmatprep.subr.mxu0 0.0
        %1518 = vmatpush1.msra.mxu0 0.0
        %1519 = vmatprep.subr.mxu0 0.0
        %1520 = vmatpush1.msra.mxu0 0.0
        %1521 = vmatprep.subr.mxu0 0.0
        %1522 = vmatpush1.msra.mxu0 0.0
        %1523 = vmatprep.subr.mxu0 0.0
        %1524 = vmatpush1.msra.mxu0 0.0
        %1525 = vmatprep.subr.mxu0 0.0
        %1526 = vmatpush1.msra.mxu0 0.0
        %1527 = vmatprep.subr.mxu0 0.0
        %1528 = vmatpush1.msra.mxu0 0.0
        %1529 = vmatprep.subr.mxu0 0.0
        %1530 = vmatpush1.msra.mxu0 0.0
        %1531 = vmatprep.subr.mxu0 0.0
        %1532 = vmatpush1.msra.mxu0 0.0
        %1533 = vmatprep.subr.mxu0 0.0
        %1534 = vmatpush1.msra.mxu0 0.0
        %1535 = vmatprep.subr.mxu0 0.0
        %1536 = vmatpush1.msra.mxu0 0.0
        %1537 = vmatprep.subr.mxu0 0.0
        %1538 = vmatpush1.msra.mxu0 0.0
        %1539 = vmatprep.subr.mxu0 0.0
        %1540 = vmatpush1.msra.mxu0 0.0
        %1541 = vmatprep.subr.mxu0 0.0
        %1542 = vmatpush1.msra.mxu0 0.0
        %1543 = vmatprep.subr.mxu0 0.0
        %1544 = vmatpush1.msra.mxu0 0.0
        %1545 = vmatprep.subr.mxu0 0.0
        %1546 = vmatpush1.msra.mxu0 0.0
        %1547 = vmatprep.subr.mxu0 0.0
        %1548 = vmatpush1.msra.mxu0 0.0
        %1549 = vmatprep.mubr.f32.mxu0 0.0
        %v1550 = vand.u32 %v1069, 4294901760
        %1551 = vmatmul.mubr.f32.gmra.mrb[0].mxu0 %v1550
        %v1552 = vpop.f32.mrb[0].mxu0
        %v1553 = vadd.f32 %v1478, %v1552
        %v1554 = vpop.f32.mrb[0].mxu0
        %1555 = vdwg.mxu0
        %v1557 = vlaneseq
        %v1558 = vshrl.u32 %v1557, 7
        %v1559 = vsub.s32 0, %v1558
        %v1560 = vrot.slane %v555, %v1559
        %vm1562 = vcmask 64512
        %v1564 = vsel %vm1562, %v1056, 0
        %v1567 = vsel %vm1562, %v1553, 0
        %1569 = vmatprep.subr.mxu0 0.0
        %v1570 = vand.u32 %v1567, 4294901760
        %1571 = vmatpush1.xpose.msra.mxu0 %v1570
        %1572 = vmatprep.subr.mxu0 0.0
        %1573 = vmatpush1.xpose.msra.mxu0 0.0
        %1574 = vmatprep.subr.mxu0 0.0
        %1575 = vmatpush1.xpose.msra.mxu0 0.0
        %1576 = vmatprep.subr.mxu0 0.0
        %1577 = vmatpush1.xpose.msra.mxu0 0.0
        %1578 = vmatprep.subr.mxu0 0.0
        %1579 = vmatpush1.xpose.msra.mxu0 0.0
        %1580 = vmatprep.subr.mxu0 0.0
        %1581 = vmatpush1.xpose.msra.mxu0 0.0
        %1582 = vmatprep.subr.mxu0 0.0
        %1583 = vmatpush1.xpose.msra.mxu0 0.0
        %1584 = vmatprep.subr.mxu0 0.0
        %1585 = vmatpush1.xpose.msra.mxu0 0.0
        %1586 = vmatprep.subr.mxu0 0.0
        %1587 = vmatpush1.xpose.msra.mxu0 0.0
        %1588 = vmatprep.subr.mxu0 0.0
        %1589 = vmatpush1.xpose.msra.mxu0 0.0
        %1590 = vmatprep.subr.mxu0 0.0
        %1591 = vmatpush1.xpose.msra.mxu0 0.0
        %1592 = vmatprep.subr.mxu0 0.0
        %1593 = vmatpush1.xpose.msra.mxu0 0.0
        %1594 = vmatprep.subr.mxu0 0.0
        %1595 = vmatpush1.xpose.msra.mxu0 0.0
        %1596 = vmatprep.subr.mxu0 0.0
        %1597 = vmatpush1.xpose.msra.mxu0 0.0
        %1598 = vmatprep.subr.mxu0 0.0
        %1599 = vmatpush1.xpose.msra.mxu0 0.0
        %1600 = vmatprep.subr.mxu0 0.0
        %1601 = vmatpush1.xpose.msra.mxu0 0.0
        %1602 = vmatprep.subr.mxu0 0.0
        %1603 = vmatpush1.xpose.msra.mxu0 0.0
        %1604 = vmatprep.subr.mxu0 0.0
        %1605 = vmatpush1.xpose.msra.mxu0 0.0
        %1606 = vmatprep.subr.mxu0 0.0
        %1607 = vmatpush1.xpose.msra.mxu0 0.0
        %1608 = vmatprep.subr.mxu0 0.0
        %1609 = vmatpush1.xpose.msra.mxu0 0.0
        %1610 = vmatprep.subr.mxu0 0.0
        %1611 = vmatpush1.xpose.msra.mxu0 0.0
        %1612 = vmatprep.subr.mxu0 0.0
        %1613 = vmatpush1.xpose.msra.mxu0 0.0
        %1614 = vmatprep.subr.mxu0 0.0
        %1615 = vmatpush1.xpose.msra.mxu0 0.0
        %1616 = vmatprep.subr.mxu0 0.0
        %1617 = vmatpush1.xpose.msra.mxu0 0.0
        %1618 = vmatprep.subr.mxu0 0.0
        %1619 = vmatpush1.xpose.msra.mxu0 0.0
        %1620 = vmatprep.subr.mxu0 0.0
        %1621 = vmatpush1.xpose.msra.mxu0 0.0
        %1622 = vmatprep.subr.mxu0 0.0
        %1623 = vmatpush1.xpose.msra.mxu0 0.0
        %1624 = vmatprep.subr.mxu0 0.0
        %1625 = vmatpush1.xpose.msra.mxu0 0.0
        %1626 = vmatprep.subr.mxu0 0.0
        %1627 = vmatpush1.xpose.msra.mxu0 0.0
        %1628 = vmatprep.subr.mxu0 0.0
        %1629 = vmatpush1.xpose.msra.mxu0 0.0
        %1630 = vmatprep.subr.mxu0 0.0
        %1631 = vmatpush1.xpose.msra.mxu0 0.0
        %1632 = vmatprep.subr.mxu0 0.0
        %1633 = vmatpush1.xpose.msra.mxu0 0.0
        %1634 = vmatprep.mubr.f32.mxu0 0.0
        %v1635 = vand.u32 %v1564, 4294901760
        %v1636 = vsub.f32 %v1564, %v1635
        %v1637 = vand.u32 %v1636, 4294901760
        %v1638 = vsub.f32 %v1636, %v1637
        %v1639 = vand.u32 %v1638, 4294901760
        %1640 = vmatmul.mubr.f32.gmra.mrb[0].mxu0 %v1639
        %v1641 = vpop.f32.mrb[0].mxu0
        %v1642 = vadd.f32 %v1560, %v1641
        %v1643 = vpop.f32.mrb[0].mxu0
        %1644 = vdwg.mxu0
        %1645 = vmatprep.subr.mxu0 0.0
        %v1646 = vand.u32 %v1567, 4294901760
        %v1647 = vsub.f32 %v1567, %v1646
        %v1648 = vand.u32 %v1647, 4294901760
        %v1649 = vsub.f32 %v1647, %v1648
        %v1650 = vand.u32 %v1649, 4294901760
        %1651 = vmatpush1.xpose.msra.mxu0 %v1650
        %1652 = vmatprep.subr.mxu0 0.0
        %1653 = vmatpush1.xpose.msra.mxu0 0.0
        %1654 = vmatprep.subr.mxu0 0.0
        %1655 = vmatpush1.xpose.msra.mxu0 0.0
        %1656 = vmatprep.subr.mxu0 0.0
        %1657 = vmatpush1.xpose.msra.mxu0 0.0
        %1658 = vmatprep.subr.mxu0 0.0
        %1659 = vmatpush1.xpose.msra.mxu0 0.0
        %1660 = vmatprep.subr.mxu0 0.0
        %1661 = vmatpush1.xpose.msra.mxu0 0.0
        %1662 = vmatprep.subr.mxu0 0.0
        %1663 = vmatpush1.xpose.msra.mxu0 0.0
        %1664 = vmatprep.subr.mxu0 0.0
        %1665 = vmatpush1.xpose.msra.mxu0 0.0
        %1666 = vmatprep.subr.mxu0 0.0
        %1667 = vmatpush1.xpose.msra.mxu0 0.0
        %1668 = vmatprep.subr.mxu0 0.0
        %1669 = vmatpush1.xpose.msra.mxu0 0.0
        %1670 = vmatprep.subr.mxu0 0.0
        %1671 = vmatpush1.xpose.msra.mxu0 0.0
        %1672 = vmatprep.subr.mxu0 0.0
        %1673 = vmatpush1.xpose.msra.mxu0 0.0
        %1674 = vmatprep.subr.mxu0 0.0
        %1675 = vmatpush1.xpose.msra.mxu0 0.0
        %1676 = vmatprep.subr.mxu0 0.0
        %1677 = vmatpush1.xpose.msra.mxu0 0.0
        %1678 = vmatprep.subr.mxu0 0.0
        %1679 = vmatpush1.xpose.msra.mxu0 0.0
        %1680 = vmatprep.subr.mxu0 0.0
        %1681 = vmatpush1.xpose.msra.mxu0 0.0
        %1682 = vmatprep.subr.mxu0 0.0
        %1683 = vmatpush1.xpose.msra.mxu0 0.0
        %1684 = vmatprep.subr.mxu0 0.0
        %1685 = vmatpush1.xpose.msra.mxu0 0.0
        %1686 = vmatprep.subr.mxu0 0.0
        %1687 = vmatpush1.xpose.msra.mxu0 0.0
        %1688 = vmatprep.subr.mxu0 0.0
        %1689 = vmatpush1.xpose.msra.mxu0 0.0
        %1690 = vmatprep.subr.mxu0 0.0
        %1691 = vmatpush1.xpose.msra.mxu0 0.0
        %1692 = vmatprep.subr.mxu0 0.0
        %1693 = vmatpush1.xpose.msra.mxu0 0.0
        %1694 = vmatprep.subr.mxu0 0.0
        %1695 = vmatpush1.xpose.msra.mxu0 0.0
        %1696 = vmatprep.subr.mxu0 0.0
        %1697 = vmatpush1.xpose.msra.mxu0 0.0
        %1698 = vmatprep.subr.mxu0 0.0
        %1699 = vmatpush1.xpose.msra.mxu0 0.0
        %1700 = vmatprep.subr.mxu0 0.0
        %1701 = vmatpush1.xpose.msra.mxu0 0.0
        %1702 = vmatprep.subr.mxu0 0.0
        %1703 = vmatpush1.xpose.msra.mxu0 0.0
        %1704 = vmatprep.subr.mxu0 0.0
        %1705 = vmatpush1.xpose.msra.mxu0 0.0
        %1706 = vmatprep.subr.mxu0 0.0
        %1707 = vmatpush1.xpose.msra.mxu0 0.0
        %1708 = vmatprep.subr.mxu0 0.0
        %1709 = vmatpush1.xpose.msra.mxu0 0.0
        %1710 = vmatprep.subr.mxu0 0.0
        %1711 = vmatpush1.xpose.msra.mxu0 0.0
        %1712 = vmatprep.subr.mxu0 0.0
        %1713 = vmatpush1.xpose.msra.mxu0 0.0
        %1714 = vmatprep.mubr.f32.mxu0 0.0
        %v1715 = vand.u32 %v1564, 4294901760
        %1716 = vmatmul.mubr.f32.gmra.mrb[0].mxu0 %v1715
        %v1717 = vpop.f32.mrb[0].mxu0
        %v1718 = vadd.f32 %v1642, %v1717
        %v1719 = vpop.f32.mrb[0].mxu0
        %1720 = vdwg.mxu0
        %1721 = vmatprep.subr.mxu0 0.0
        %v1722 = vand.u32 %v1567, 4294901760
        %v1723 = vsub.f32 %v1567, %v1722
        %1724 = vmatpush1.xpose.msra.mxu0 %v1723
        %1725 = vmatprep.subr.mxu0 0.0
        %1726 = vmatpush1.xpose.msra.mxu0 0.0
        %1727 = vmatprep.subr.mxu0 0.0
        %1728 = vmatpush1.xpose.msra.mxu0 0.0
        %1729 = vmatprep.subr.mxu0 0.0
        %1730 = vmatpush1.xpose.msra.mxu0 0.0
        %1731 = vmatprep.subr.mxu0 0.0
        %1732 = vmatpush1.xpose.msra.mxu0 0.0
        %1733 = vmatprep.subr.mxu0 0.0
        %1734 = vmatpush1.xpose.msra.mxu0 0.0
        %1735 = vmatprep.subr.mxu0 0.0
        %1736 = vmatpush1.xpose.msra.mxu0 0.0
        %1737 = vmatprep.subr.mxu0 0.0
        %1738 = vmatpush1.xpose.msra.mxu0 0.0
        %1739 = vmatprep.subr.mxu0 0.0
        %1740 = vmatpush1.xpose.msra.mxu0 0.0
        %1741 = vmatprep.subr.mxu0 0.0
        %1742 = vmatpush1.xpose.msra.mxu0 0.0
        %1743 = vmatprep.subr.mxu0 0.0
        %1744 = vmatpush1.xpose.msra.mxu0 0.0
        %1745 = vmatprep.subr.mxu0 0.0
        %1746 = vmatpush1.xpose.msra.mxu0 0.0
        %1747 = vmatprep.subr.mxu0 0.0
        %1748 = vmatpush1.xpose.msra.mxu0 0.0
        %1749 = vmatprep.subr.mxu0 0.0
        %1750 = vmatpush1.xpose.msra.mxu0 0.0
        %1751 = vmatprep.subr.mxu0 0.0
        %1752 = vmatpush1.xpose.msra.mxu0 0.0
        %1753 = vmatprep.subr.mxu0 0.0
        %1754 = vmatpush1.xpose.msra.mxu0 0.0
        %1755 = vmatprep.subr.mxu0 0.0
        %1756 = vmatpush1.xpose.msra.mxu0 0.0
        %1757 = vmatprep.subr.mxu0 0.0
        %1758 = vmatpush1.xpose.msra.mxu0 0.0
        %1759 = vmatprep.subr.mxu0 0.0
        %1760 = vmatpush1.xpose.msra.mxu0 0.0
        %1761 = vmatprep.subr.mxu0 0.0
        %1762 = vmatpush1.xpose.msra.mxu0 0.0
        %1763 = vmatprep.subr.mxu0 0.0
        %1764 = vmatpush1.xpose.msra.mxu0 0.0
        %1765 = vmatprep.subr.mxu0 0.0
        %1766 = vmatpush1.xpose.msra.mxu0 0.0
        %1767 = vmatprep.subr.mxu0 0.0
        %1768 = vmatpush1.xpose.msra.mxu0 0.0
        %1769 = vmatprep.subr.mxu0 0.0
        %1770 = vmatpush1.xpose.msra.mxu0 0.0
        %1771 = vmatprep.subr.mxu0 0.0
        %1772 = vmatpush1.xpose.msra.mxu0 0.0
        %1773 = vmatprep.subr.mxu0 0.0
        %1774 = vmatpush1.xpose.msra.mxu0 0.0
        %1775 = vmatprep.subr.mxu0 0.0
        %1776 = vmatpush1.xpose.msra.mxu0 0.0
        %1777 = vmatprep.subr.mxu0 0.0
        %1778 = vmatpush1.xpose.msra.mxu0 0.0
        %1779 = vmatprep.subr.mxu0 0.0
        %1780 = vmatpush1.xpose.msra.mxu0 0.0
        %1781 = vmatprep.subr.mxu0 0.0
        %1782 = vmatpush1.xpose.msra.mxu0 0.0
        %1783 = vmatprep.subr.mxu0 0.0
        %1784 = vmatpush1.xpose.msra.mxu0 0.0
        %1785 = vmatprep.subr.mxu0 0.0
        %1786 = vmatpush1.xpose.msra.mxu0 0.0
        %1787 = vmatprep.mubr.f32.mxu0 0.0
        %v1788 = vand.u32 %v1564, 4294901760
        %v1789 = vsub.f32 %v1564, %v1788
        %1790 = vmatmul.mubr.f32.gmra.mrb[0].mxu0 %v1789
        %v1791 = vpop.f32.mrb[0].mxu0
        %v1792 = vadd.f32 %v1718, %v1791
        %v1793 = vpop.f32.mrb[0].mxu0
        %1794 = vdwg.mxu0
        %1795 = vmatprep.subr.mxu0 0.0
        %v1796 = vand.u32 %v1567, 4294901760
        %1797 = vmatpush1.xpose.msra.mxu0 %v1796
        %1798 = vmatprep.subr.mxu0 0.0
        %1799 = vmatpush1.xpose.msra.mxu0 0.0
        %1800 = vmatprep.subr.mxu0 0.0
        %1801 = vmatpush1.xpose.msra.mxu0 0.0
        %1802 = vmatprep.subr.mxu0 0.0
        %1803 = vmatpush1.xpose.msra.mxu0 0.0
        %1804 = vmatprep.subr.mxu0 0.0
        %1805 = vmatpush1.xpose.msra.mxu0 0.0
        %1806 = vmatprep.subr.mxu0 0.0
        %1807 = vmatpush1.xpose.msra.mxu0 0.0
        %1808 = vmatprep.subr.mxu0 0.0
        %1809 = vmatpush1.xpose.msra.mxu0 0.0
        %1810 = vmatprep.subr.mxu0 0.0
        %1811 = vmatpush1.xpose.msra.mxu0 0.0
        %1812 = vmatprep.subr.mxu0 0.0
        %1813 = vmatpush1.xpose.msra.mxu0 0.0
        %1814 = vmatprep.subr.mxu0 0.0
        %1815 = vmatpush1.xpose.msra.mxu0 0.0
        %1816 = vmatprep.subr.mxu0 0.0
        %1817 = vmatpush1.xpose.msra.mxu0 0.0
        %1818 = vmatprep.subr.mxu0 0.0
        %1819 = vmatpush1.xpose.msra.mxu0 0.0
        %1820 = vmatprep.subr.mxu0 0.0
        %1821 = vmatpush1.xpose.msra.mxu0 0.0
        %1822 = vmatprep.subr.mxu0 0.0
        %1823 = vmatpush1.xpose.msra.mxu0 0.0
        %1824 = vmatprep.subr.mxu0 0.0
        %1825 = vmatpush1.xpose.msra.mxu0 0.0
        %1826 = vmatprep.subr.mxu0 0.0
        %1827 = vmatpush1.xpose.msra.mxu0 0.0
        %1828 = vmatprep.subr.mxu0 0.0
        %1829 = vmatpush1.xpose.msra.mxu0 0.0
        %1830 = vmatprep.subr.mxu0 0.0
        %1831 = vmatpush1.xpose.msra.mxu0 0.0
        %1832 = vmatprep.subr.mxu0 0.0
        %1833 = vmatpush1.xpose.msra.mxu0 0.0
        %1834 = vmatprep.subr.mxu0 0.0
        %1835 = vmatpush1.xpose.msra.mxu0 0.0
        %1836 = vmatprep.subr.mxu0 0.0
        %1837 = vmatpush1.xpose.msra.mxu0 0.0
        %1838 = vmatprep.subr.mxu0 0.0
        %1839 = vmatpush1.xpose.msra.mxu0 0.0
        %1840 = vmatprep.subr.mxu0 0.0
        %1841 = vmatpush1.xpose.msra.mxu0 0.0
        %1842 = vmatprep.subr.mxu0 0.0
        %1843 = vmatpush1.xpose.msra.mxu0 0.0
        %1844 = vmatprep.subr.mxu0 0.0
        %1845 = vmatpush1.xpose.msra.mxu0 0.0
        %1846 = vmatprep.subr.mxu0 0.0
        %1847 = vmatpush1.xpose.msra.mxu0 0.0
        %1848 = vmatprep.subr.mxu0 0.0
        %1849 = vmatpush1.xpose.msra.mxu0 0.0
        %1850 = vmatprep.subr.mxu0 0.0
        %1851 = vmatpush1.xpose.msra.mxu0 0.0
        %1852 = vmatprep.subr.mxu0 0.0
        %1853 = vmatpush1.xpose.msra.mxu0 0.0
        %1854 = vmatprep.subr.mxu0 0.0
        %1855 = vmatpush1.xpose.msra.mxu0 0.0
        %1856 = vmatprep.subr.mxu0 0.0
        %1857 = vmatpush1.xpose.msra.mxu0 0.0
        %1858 = vmatprep.subr.mxu0 0.0
        %1859 = vmatpush1.xpose.msra.mxu0 0.0
        %1860 = vmatprep.mubr.f32.mxu0 0.0
        %v1861 = vand.u32 %v1564, 4294901760
        %v1862 = vsub.f32 %v1564, %v1861
        %v1863 = vand.u32 %v1862, 4294901760
        %1864 = vmatmul.mubr.f32.gmra.mrb[0].mxu0 %v1863
        %v1865 = vpop.f32.mrb[0].mxu0
        %v1866 = vadd.f32 %v1792, %v1865
        %v1867 = vpop.f32.mrb[0].mxu0
        %1868 = vdwg.mxu0
        %1869 = vmatprep.subr.mxu0 0.0
        %v1870 = vand.u32 %v1567, 4294901760
        %v1871 = vsub.f32 %v1567, %v1870
        %v1872 = vand.u32 %v1871, 4294901760
        %1873 = vmatpush1.xpose.msra.mxu0 %v1872
        %1874 = vmatprep.subr.mxu0 0.0
        %1875 = vmatpush1.xpose.msra.mxu0 0.0
        %1876 = vmatprep.subr.mxu0 0.0
        %1877 = vmatpush1.xpose.msra.mxu0 0.0
        %1878 = vmatprep.subr.mxu0 0.0
        %1879 = vmatpush1.xpose.msra.mxu0 0.0
        %1880 = vmatprep.subr.mxu0 0.0
        %1881 = vmatpush1.xpose.msra.mxu0 0.0
        %1882 = vmatprep.subr.mxu0 0.0
        %1883 = vmatpush1.xpose.msra.mxu0 0.0
        %1884 = vmatprep.subr.mxu0 0.0
        %1885 = vmatpush1.xpose.msra.mxu0 0.0
        %1886 = vmatprep.subr.mxu0 0.0
        %1887 = vmatpush1.xpose.msra.mxu0 0.0
        %1888 = vmatprep.subr.mxu0 0.0
        %1889 = vmatpush1.xpose.msra.mxu0 0.0
        %1890 = vmatprep.subr.mxu0 0.0
        %1891 = vmatpush1.xpose.msra.mxu0 0.0
        %1892 = vmatprep.subr.mxu0 0.0
        %1893 = vmatpush1.xpose.msra.mxu0 0.0
        %1894 = vmatprep.subr.mxu0 0.0
        %1895 = vmatpush1.xpose.msra.mxu0 0.0
        %1896 = vmatprep.subr.mxu0 0.0
        %1897 = vmatpush1.xpose.msra.mxu0 0.0
        %1898 = vmatprep.subr.mxu0 0.0
        %1899 = vmatpush1.xpose.msra.mxu0 0.0
        %1900 = vmatprep.subr.mxu0 0.0
        %1901 = vmatpush1.xpose.msra.mxu0 0.0
        %1902 = vmatprep.subr.mxu0 0.0
        %1903 = vmatpush1.xpose.msra.mxu0 0.0
        %1904 = vmatprep.subr.mxu0 0.0
        %1905 = vmatpush1.xpose.msra.mxu0 0.0
        %1906 = vmatprep.subr.mxu0 0.0
        %1907 = vmatpush1.xpose.msra.mxu0 0.0
        %1908 = vmatprep.subr.mxu0 0.0
        %1909 = vmatpush1.xpose.msra.mxu0 0.0
        %1910 = vmatprep.subr.mxu0 0.0
        %1911 = vmatpush1.xpose.msra.mxu0 0.0
        %1912 = vmatprep.subr.mxu0 0.0
        %1913 = vmatpush1.xpose.msra.mxu0 0.0
        %1914 = vmatprep.subr.mxu0 0.0
        %1915 = vmatpush1.xpose.msra.mxu0 0.0
        %1916 = vmatprep.subr.mxu0 0.0
        %1917 = vmatpush1.xpose.msra.mxu0 0.0
        %1918 = vmatprep.subr.mxu0 0.0
        %1919 = vmatpush1.xpose.msra.mxu0 0.0
        %1920 = vmatprep.subr.mxu0 0.0
        %1921 = vmatpush1.xpose.msra.mxu0 0.0
        %1922 = vmatprep.subr.mxu0 0.0
        %1923 = vmatpush1.xpose.msra.mxu0 0.0
        %1924 = vmatprep.subr.mxu0 0.0
        %1925 = vmatpush1.xpose.msra.mxu0 0.0
        %1926 = vmatprep.subr.mxu0 0.0
        %1927 = vmatpush1.xpose.msra.mxu0 0.0
        %1928 = vmatprep.subr.mxu0 0.0
        %1929 = vmatpush1.xpose.msra.mxu0 0.0
        %1930 = vmatprep.subr.mxu0 0.0
        %1931 = vmatpush1.xpose.msra.mxu0 0.0
        %1932 = vmatprep.subr.mxu0 0.0
        %1933 = vmatpush1.xpose.msra.mxu0 0.0
        %1934 = vmatprep.subr.mxu0 0.0
        %1935 = vmatpush1.xpose.msra.mxu0 0.0
        %1936 = vmatprep.mubr.f32.mxu0 0.0
        %v1937 = vand.u32 %v1564, 4294901760
        %1938 = vmatmul.mubr.f32.gmra.mrb[0].mxu0 %v1937
        %v1939 = vpop.f32.mrb[0].mxu0
        %v1940 = vadd.f32 %v1866, %v1939
        %v1941 = vpop.f32.mrb[0].mxu0
        %1942 = vdwg.mxu0
        %1943 = vmatprep.subr.mxu0 0.0
        %v1944 = vand.u32 %v1567, 4294901760
        %1945 = vmatpush1.xpose.msra.mxu0 %v1944
        %1946 = vmatprep.subr.mxu0 0.0
        %1947 = vmatpush1.xpose.msra.mxu0 0.0
        %1948 = vmatprep.subr.mxu0 0.0
        %1949 = vmatpush1.xpose.msra.mxu0 0.0
        %1950 = vmatprep.subr.mxu0 0.0
        %1951 = vmatpush1.xpose.msra.mxu0 0.0
        %1952 = vmatprep.subr.mxu0 0.0
        %1953 = vmatpush1.xpose.msra.mxu0 0.0
        %1954 = vmatprep.subr.mxu0 0.0
        %1955 = vmatpush1.xpose.msra.mxu0 0.0
        %1956 = vmatprep.subr.mxu0 0.0
        %1957 = vmatpush1.xpose.msra.mxu0 0.0
        %1958 = vmatprep.subr.mxu0 0.0
        %1959 = vmatpush1.xpose.msra.mxu0 0.0
        %1960 = vmatprep.subr.mxu0 0.0
        %1961 = vmatpush1.xpose.msra.mxu0 0.0
        %1962 = vmatprep.subr.mxu0 0.0
        %1963 = vmatpush1.xpose.msra.mxu0 0.0
        %1964 = vmatprep.subr.mxu0 0.0
        %1965 = vmatpush1.xpose.msra.mxu0 0.0
        %1966 = vmatprep.subr.mxu0 0.0
        %1967 = vmatpush1.xpose.msra.mxu0 0.0
        %1968 = vmatprep.subr.mxu0 0.0
        %1969 = vmatpush1.xpose.msra.mxu0 0.0
        %1970 = vmatprep.subr.mxu0 0.0
        %1971 = vmatpush1.xpose.msra.mxu0 0.0
        %1972 = vmatprep.subr.mxu0 0.0
        %1973 = vmatpush1.xpose.msra.mxu0 0.0
        %1974 = vmatprep.subr.mxu0 0.0
        %1975 = vmatpush1.xpose.msra.mxu0 0.0
        %1976 = vmatprep.subr.mxu0 0.0
        %1977 = vmatpush1.xpose.msra.mxu0 0.0
        %1978 = vmatprep.subr.mxu0 0.0
        %1979 = vmatpush1.xpose.msra.mxu0 0.0
        %1980 = vmatprep.subr.mxu0 0.0
        %1981 = vmatpush1.xpose.msra.mxu0 0.0
        %1982 = vmatprep.subr.mxu0 0.0
        %1983 = vmatpush1.xpose.msra.mxu0 0.0
        %1984 = vmatprep.subr.mxu0 0.0
        %1985 = vmatpush1.xpose.msra.mxu0 0.0
        %1986 = vmatprep.subr.mxu0 0.0
        %1987 = vmatpush1.xpose.msra.mxu0 0.0
        %1988 = vmatprep.subr.mxu0 0.0
        %1989 = vmatpush1.xpose.msra.mxu0 0.0
        %1990 = vmatprep.subr.mxu0 0.0
        %1991 = vmatpush1.xpose.msra.mxu0 0.0
        %1992 = vmatprep.subr.mxu0 0.0
        %1993 = vmatpush1.xpose.msra.mxu0 0.0
        %1994 = vmatprep.subr.mxu0 0.0
        %1995 = vmatpush1.xpose.msra.mxu0 0.0
        %1996 = vmatprep.subr.mxu0 0.0
        %1997 = vmatpush1.xpose.msra.mxu0 0.0
        %1998 = vmatprep.subr.mxu0 0.0
        %1999 = vmatpush1.xpose.msra.mxu0 0.0
        %2000 = vmatprep.subr.mxu0 0.0
        %2001 = vmatpush1.xpose.msra.mxu0 0.0
        %2002 = vmatprep.subr.mxu0 0.0
        %2003 = vmatpush1.xpose.msra.mxu0 0.0
        %2004 = vmatprep.subr.mxu0 0.0
        %2005 = vmatpush1.xpose.msra.mxu0 0.0
        %2006 = vmatprep.subr.mxu0 0.0
        %2007 = vmatpush1.xpose.msra.mxu0 0.0
        %2008 = vmatprep.mubr.f32.mxu0 0.0
        %v2009 = vand.u32 %v1564, 4294901760
        %2010 = vmatmul.mubr.f32.gmra.mrb[0].mxu0 %v2009
        %v2011 = vpop.f32.mrb[0].mxu0
        %v2012 = vadd.f32 %v1940, %v2011
        %v2013 = vpop.f32.mrb[0].mxu0
        %2014 = vdwg.mxu0
        %v2015 = vsel %vm1562, %v2012, -inf
        %2016 = vmax.xlane.f32.xlu0 %v2015
        %v2017 = vpop.xlane.xlu0 %2016
        %v2018 = vsub.f32 %v2012, %v2017
        %v2019 = vmul.f32 %v2018, 1.442695
        %v2020 = vpow.pop %v2019
        %v2021 = vsel %vm1562, %v2020, 0.0
        %2022 = vadd.xlane.f32.xlu0 %v2021
        %v2023 = vpop.xlane.xlu0 %2022
        %v2024 = vrcp.pop %v2023
        %v2025 = vmul.f32 %v2020, %v2024
        %2026 = vst.msk [vmem:[%s549] sm:$0xff] %vm1562, %v2025
        %2027 = vrot.lane.b32.xlu0 %v1553, 96
        %v2028 = vpop.permute.xlu0 %2027
        %v2031 = vsel %vm1562, %v2025, 0
        %2033 = vmatprep.subr.mxu0 0.0
        %v2034 = vand.u32 %v2028, 4294901760
        %2035 = vmatpush1.msra.mxu0 %v2034
        %2036 = vmatprep.subr.mxu0 0.0
        %2037 = vmatpush1.msra.mxu0 0.0
        %2038 = vmatprep.subr.mxu0 0.0
        %2039 = vmatpush1.msra.mxu0 0.0
        %2040 = vmatprep.subr.mxu0 0.0
        %2041 = vmatpush1.msra.mxu0 0.0
        %2042 = vmatprep.subr.mxu0 0.0
        %2043 = vmatpush1.msra.mxu0 0.0
        %2044 = vmatprep.subr.mxu0 0.0
        %2045 = vmatpush1.msra.mxu0 0.0
        %2046 = vmatprep.subr.mxu0 0.0
        %2047 = vmatpush1.msra.mxu0 0.0
        %2048 = vmatprep.subr.mxu0 0.0
        %2049 = vmatpush1.msra.mxu0 0.0
        %2050 = vmatprep.subr.mxu0 0.0
        %2051 = vmatpush1.msra.mxu0 0.0
        %2052 = vmatprep.subr.mxu0 0.0
        %2053 = vmatpush1.msra.mxu0 0.0
        %2054 = vmatprep.subr.mxu0 0.0
        %2055 = vmatpush1.msra.mxu0 0.0
        %2056 = vmatprep.subr.mxu0 0.0
        %2057 = vmatpush1.msra.mxu0 0.0
        %2058 = vmatprep.subr.mxu0 0.0
        %2059 = vmatpush1.msra.mxu0 0.0
        %2060 = vmatprep.subr.mxu0 0.0
        %2061 = vmatpush1.msra.mxu0 0.0
        %2062 = vmatprep.subr.mxu0 0.0
        %2063 = vmatpush1.msra.mxu0 0.0
        %2064 = vmatprep.subr.mxu0 0.0
        %2065 = vmatpush1.msra.mxu0 0.0
        %2066 = vmatprep.subr.mxu0 0.0
        %2067 = vmatpush1.msra.mxu0 0.0
        %2068 = vmatprep.subr.mxu0 0.0
        %2069 = vmatpush1.msra.mxu0 0.0
        %2070 = vmatprep.subr.mxu0 0.0
        %2071 = vmatpush1.msra.mxu0 0.0
        %2072 = vmatprep.subr.mxu0 0.0
        %2073 = vmatpush1.msra.mxu0 0.0
        %2074 = vmatprep.subr.mxu0 0.0
        %2075 = vmatpush1.msra.mxu0 0.0
        %2076 = vmatprep.subr.mxu0 0.0
        %2077 = vmatpush1.msra.mxu0 0.0
        %2078 = vmatprep.subr.mxu0 0.0
        %2079 = vmatpush1.msra.mxu0 0.0
        %2080 = vmatprep.subr.mxu0 0.0
        %2081 = vmatpush1.msra.mxu0 0.0
        %2082 = vmatprep.subr.mxu0 0.0
        %2083 = vmatpush1.msra.mxu0 0.0
        %2084 = vmatprep.subr.mxu0 0.0
        %2085 = vmatpush1.msra.mxu0 0.0
        %2086 = vmatprep.subr.mxu0 0.0
        %2087 = vmatpush1.msra.mxu0 0.0
        %2088 = vmatprep.subr.mxu0 0.0
        %2089 = vmatpush1.msra.mxu0 0.0
        %2090 = vmatprep.subr.mxu0 0.0
        %2091 = vmatpush1.msra.mxu0 0.0
        %2092 = vmatprep.subr.mxu0 0.0
        %2093 = vmatpush1.msra.mxu0 0.0
        %2094 = vmatprep.subr.mxu0 0.0
        %2095 = vmatpush1.msra.mxu0 0.0
        %2096 = vmatprep.subr.mxu0 0.0
        %2097 = vmatpush1.msra.mxu0 0.0
        %2098 = vmatprep.mubr.f32.mxu0 0.0
        %v2099 = vand.u32 %v2031, 4294901760
        %v2100 = vsub.f32 %v2031, %v2099
        %v2101 = vand.u32 %v2100, 4294901760
        %v2102 = vsub.f32 %v2100, %v2101
        %v2103 = vand.u32 %v2102, 4294901760
        %2104 = vmatmul.mubr.f32.gmra.mrb[0].mxu0 %v2103
        %v2105 = vpop.f32.mrb[0].mxu0
        %v2106 = vadd.f32 0.0, %v2105
        %v2107 = vpop.f32.mrb[0].mxu0
        %2108 = vdwg.mxu0
        %2109 = vmatprep.subr.mxu0 0.0
        %v2110 = vand.u32 %v2028, 4294901760
        %v2111 = vsub.f32 %v2028, %v2110
        %v2112 = vand.u32 %v2111, 4294901760
        %v2113 = vsub.f32 %v2111, %v2112
        %v2114 = vand.u32 %v2113, 4294901760
        %2115 = vmatpush1.msra.mxu0 %v2114
        %2116 = vmatprep.subr.mxu0 0.0
        %2117 = vmatpush1.msra.mxu0 0.0
        %2118 = vmatprep.subr.mxu0 0.0
        %2119 = vmatpush1.msra.mxu0 0.0
        %2120 = vmatprep.subr.mxu0 0.0
        %2121 = vmatpush1.msra.mxu0 0.0
        %2122 = vmatprep.subr.mxu0 0.0
        %2123 = vmatpush1.msra.mxu0 0.0
        %2124 = vmatprep.subr.mxu0 0.0
        %2125 = vmatpush1.msra.mxu0 0.0
        %2126 = vmatprep.subr.mxu0 0.0
        %2127 = vmatpush1.msra.mxu0 0.0
        %2128 = vmatprep.subr.mxu0 0.0
        %2129 = vmatpush1.msra.mxu0 0.0
        %2130 = vmatprep.subr.mxu0 0.0
        %2131 = vmatpush1.msra.mxu0 0.0
        %2132 = vmatprep.subr.mxu0 0.0
        %2133 = vmatpush1.msra.mxu0 0.0
        %2134 = vmatprep.subr.mxu0 0.0
        %2135 = vmatpush1.msra.mxu0 0.0
        %2136 = vmatprep.subr.mxu0 0.0
        %2137 = vmatpush1.msra.mxu0 0.0
        %2138 = vmatprep.subr.mxu0 0.0
        %2139 = vmatpush1.msra.mxu0 0.0
        %2140 = vmatprep.subr.mxu0 0.0
        %2141 = vmatpush1.msra.mxu0 0.0
        %2142 = vmatprep.subr.mxu0 0.0
        %2143 = vmatpush1.msra.mxu0 0.0
        %2144 = vmatprep.subr.mxu0 0.0
        %2145 = vmatpush1.msra.mxu0 0.0
        %2146 = vmatprep.subr.mxu0 0.0
        %2147 = vmatpush1.msra.mxu0 0.0
        %2148 = vmatprep.subr.mxu0 0.0
        %2149 = vmatpush1.msra.mxu0 0.0
        %2150 = vmatprep.subr.mxu0 0.0
        %2151 = vmatpush1.msra.mxu0 0.0
        %2152 = vmatprep.subr.mxu0 0.0
        %2153 = vmatpush1.msra.mxu0 0.0
        %2154 = vmatprep.subr.mxu0 0.0
        %2155 = vmatpush1.msra.mxu0 0.0
        %2156 = vmatprep.subr.mxu0 0.0
        %2157 = vmatpush1.msra.mxu0 0.0
        %2158 = vmatprep.subr.mxu0 0.0
        %2159 = vmatpush1.msra.mxu0 0.0
        %2160 = vmatprep.subr.mxu0 0.0
        %2161 = vmatpush1.msra.mxu0 0.0
        %2162 = vmatprep.subr.mxu0 0.0
        %2163 = vmatpush1.msra.mxu0 0.0
        %2164 = vmatprep.subr.mxu0 0.0
        %2165 = vmatpush1.msra.mxu0 0.0
        %2166 = vmatprep.subr.mxu0 0.0
        %2167 = vmatpush1.msra.mxu0 0.0
        %2168 = vmatprep.subr.mxu0 0.0
        %2169 = vmatpush1.msra.mxu0 0.0
        %2170 = vmatprep.subr.mxu0 0.0
        %2171 = vmatpush1.msra.mxu0 0.0
        %2172 = vmatprep.subr.mxu0 0.0
        %2173 = vmatpush1.msra.mxu0 0.0
        %2174 = vmatprep.subr.mxu0 0.0
        %2175 = vmatpush1.msra.mxu0 0.0
        %2176 = vmatprep.subr.mxu0 0.0
        %2177 = vmatpush1.msra.mxu0 0.0
        %2178 = vmatprep.mubr.f32.mxu0 0.0
        %v2179 = vand.u32 %v2031, 4294901760
        %2180 = vmatmul.mubr.f32.gmra.mrb[0].mxu0 %v2179
        %v2181 = vpop.f32.mrb[0].mxu0
        %v2182 = vadd.f32 %v2106, %v2181
        %v2183 = vpop.f32.mrb[0].mxu0
        %2184 = vdwg.mxu0
        %2185 = vmatprep.subr.mxu0 0.0
        %v2186 = vand.u32 %v2028, 4294901760
        %v2187 = vsub.f32 %v2028, %v2186
        %2188 = vmatpush1.msra.mxu0 %v2187
        %2189 = vmatprep.subr.mxu0 0.0
        %2190 = vmatpush1.msra.mxu0 0.0
        %2191 = vmatprep.subr.mxu0 0.0
        %2192 = vmatpush1.msra.mxu0 0.0
        %2193 = vmatprep.subr.mxu0 0.0
        %2194 = vmatpush1.msra.mxu0 0.0
        %2195 = vmatprep.subr.mxu0 0.0
        %2196 = vmatpush1.msra.mxu0 0.0
        %2197 = vmatprep.subr.mxu0 0.0
        %2198 = vmatpush1.msra.mxu0 0.0
        %2199 = vmatprep.subr.mxu0 0.0
        %2200 = vmatpush1.msra.mxu0 0.0
        %2201 = vmatprep.subr.mxu0 0.0
        %2202 = vmatpush1.msra.mxu0 0.0
        %2203 = vmatprep.subr.mxu0 0.0
        %2204 = vmatpush1.msra.mxu0 0.0
        %2205 = vmatprep.subr.mxu0 0.0
        %2206 = vmatpush1.msra.mxu0 0.0
        %2207 = vmatprep.subr.mxu0 0.0
        %2208 = vmatpush1.msra.mxu0 0.0
        %2209 = vmatprep.subr.mxu0 0.0
        %2210 = vmatpush1.msra.mxu0 0.0
        %2211 = vmatprep.subr.mxu0 0.0
        %2212 = vmatpush1.msra.mxu0 0.0
        %2213 = vmatprep.subr.mxu0 0.0
        %2214 = vmatpush1.msra.mxu0 0.0
        %2215 = vmatprep.subr.mxu0 0.0
        %2216 = vmatpush1.msra.mxu0 0.0
        %2217 = vmatprep.subr.mxu0 0.0
        %2218 = vmatpush1.msra.mxu0 0.0
        %2219 = vmatprep.subr.mxu0 0.0
        %2220 = vmatpush1.msra.mxu0 0.0
        %2221 = vmatprep.subr.mxu0 0.0
        %2222 = vmatpush1.msra.mxu0 0.0
        %2223 = vmatprep.subr.mxu0 0.0
        %2224 = vmatpush1.msra.mxu0 0.0
        %2225 = vmatprep.subr.mxu0 0.0
        %2226 = vmatpush1.msra.mxu0 0.0
        %2227 = vmatprep.subr.mxu0 0.0
        %2228 = vmatpush1.msra.mxu0 0.0
        %2229 = vmatprep.subr.mxu0 0.0
        %2230 = vmatpush1.msra.mxu0 0.0
        %2231 = vmatprep.subr.mxu0 0.0
        %2232 = vmatpush1.msra.mxu0 0.0
        %2233 = vmatprep.subr.mxu0 0.0
        %2234 = vmatpush1.msra.mxu0 0.0
        %2235 = vmatprep.subr.mxu0 0.0
        %2236 = vmatpush1.msra.mxu0 0.0
        %2237 = vmatprep.subr.mxu0 0.0
        %2238 = vmatpush1.msra.mxu0 0.0
        %2239 = vmatprep.subr.mxu0 0.0
        %2240 = vmatpush1.msra.mxu0 0.0
        %2241 = vmatprep.subr.mxu0 0.0
        %2242 = vmatpush1.msra.mxu0 0.0
        %2243 = vmatprep.subr.mxu0 0.0
        %2244 = vmatpush1.msra.mxu0 0.0
        %2245 = vmatprep.subr.mxu0 0.0
        %2246 = vmatpush1.msra.mxu0 0.0
        %2247 = vmatprep.subr.mxu0 0.0
        %2248 = vmatpush1.msra.mxu0 0.0
        %2249 = vmatprep.subr.mxu0 0.0
        %2250 = vmatpush1.msra.mxu0 0.0
        %2251 = vmatprep.mubr.f32.mxu0 0.0
        %v2252 = vand.u32 %v2031, 4294901760
        %v2253 = vsub.f32 %v2031, %v2252
        %2254 = vmatmul.mubr.f32.gmra.mrb[0].mxu0 %v2253
        %v2255 = vpop.f32.mrb[0].mxu0
        %v2256 = vadd.f32 %v2182, %v2255
        %v2257 = vpop.f32.mrb[0].mxu0
        %2258 = vdwg.mxu0
        %2259 = vmatprep.subr.mxu0 0.0
        %v2260 = vand.u32 %v2028, 4294901760
        %2261 = vmatpush1.msra.mxu0 %v2260
        %2262 = vmatprep.subr.mxu0 0.0
        %2263 = vmatpush1.msra.mxu0 0.0
        %2264 = vmatprep.subr.mxu0 0.0
        %2265 = vmatpush1.msra.mxu0 0.0
        %2266 = vmatprep.subr.mxu0 0.0
        %2267 = vmatpush1.msra.mxu0 0.0
        %2268 = vmatprep.subr.mxu0 0.0
        %2269 = vmatpush1.msra.mxu0 0.0
        %2270 = vmatprep.subr.mxu0 0.0
        %2271 = vmatpush1.msra.mxu0 0.0
        %2272 = vmatprep.subr.mxu0 0.0
        %2273 = vmatpush1.msra.mxu0 0.0
        %2274 = vmatprep.subr.mxu0 0.0
        %2275 = vmatpush1.msra.mxu0 0.0
        %2276 = vmatprep.subr.mxu0 0.0
        %2277 = vmatpush1.msra.mxu0 0.0
        %2278 = vmatprep.subr.mxu0 0.0
        %2279 = vmatpush1.msra.mxu0 0.0
        %2280 = vmatprep.subr.mxu0 0.0
        %2281 = vmatpush1.msra.mxu0 0.0
        %2282 = vmatprep.subr.mxu0 0.0
        %2283 = vmatpush1.msra.mxu0 0.0
        %2284 = vmatprep.subr.mxu0 0.0
        %2285 = vmatpush1.msra.mxu0 0.0
        %2286 = vmatprep.subr.mxu0 0.0
        %2287 = vmatpush1.msra.mxu0 0.0
        %2288 = vmatprep.subr.mxu0 0.0
        %2289 = vmatpush1.msra.mxu0 0.0
        %2290 = vmatprep.subr.mxu0 0.0
        %2291 = vmatpush1.msra.mxu0 0.0
        %2292 = vmatprep.subr.mxu0 0.0
        %2293 = vmatpush1.msra.mxu0 0.0
        %2294 = vmatprep.subr.mxu0 0.0
        %2295 = vmatpush1.msra.mxu0 0.0
        %2296 = vmatprep.subr.mxu0 0.0
        %2297 = vmatpush1.msra.mxu0 0.0
        %2298 = vmatprep.subr.mxu0 0.0
        %2299 = vmatpush1.msra.mxu0 0.0
        %2300 = vmatprep.subr.mxu0 0.0
        %2301 = vmatpush1.msra.mxu0 0.0
        %2302 = vmatprep.subr.mxu0 0.0
        %2303 = vmatpush1.msra.mxu0 0.0
        %2304 = vmatprep.subr.mxu0 0.0
        %2305 = vmatpush1.msra.mxu0 0.0
        %2306 = vmatprep.subr.mxu0 0.0
        %2307 = vmatpush1.msra.mxu0 0.0
        %2308 = vmatprep.subr.mxu0 0.0
        %2309 = vmatpush1.msra.mxu0 0.0
        %2310 = vmatprep.subr.mxu0 0.0
        %2311 = vmatpush1.msra.mxu0 0.0
        %2312 = vmatprep.subr.mxu0 0.0
        %2313 = vmatpush1.msra.mxu0 0.0
        %2314 = vmatprep.subr.mxu0 0.0
        %2315 = vmatpush1.msra.mxu0 0.0
        %2316 = vmatprep.subr.mxu0 0.0
        %2317 = vmatpush1.msra.mxu0 0.0
        %2318 = vmatprep.subr.mxu0 0.0
        %2319 = vmatpush1.msra.mxu0 0.0
        %2320 = vmatprep.subr.mxu0 0.0
        %2321 = vmatpush1.msra.mxu0 0.0
        %2322 = vmatprep.subr.mxu0 0.0
        %2323 = vmatpush1.msra.mxu0 0.0
        %2324 = vmatprep.mubr.f32.mxu0 0.0
        %v2325 = vand.u32 %v2031, 4294901760
        %v2326 = vsub.f32 %v2031, %v2325
        %v2327 = vand.u32 %v2326, 4294901760
        %2328 = vmatmul.mubr.f32.gmra.mrb[0].mxu0 %v2327
        %v2329 = vpop.f32.mrb[0].mxu0
        %v2330 = vadd.f32 %v2256, %v2329
        %v2331 = vpop.f32.mrb[0].mxu0
        %2332 = vdwg.mxu0
        %2333 = vmatprep.subr.mxu0 0.0
        %v2334 = vand.u32 %v2028, 4294901760
        %v2335 = vsub.f32 %v2028, %v2334
        %v2336 = vand.u32 %v2335, 4294901760
        %2337 = vmatpush1.msra.mxu0 %v2336
        %2338 = vmatprep.subr.mxu0 0.0
        %2339 = vmatpush1.msra.mxu0 0.0
        %2340 = vmatprep.subr.mxu0 0.0
        %2341 = vmatpush1.msra.mxu0 0.0
        %2342 = vmatprep.subr.mxu0 0.0
        %2343 = vmatpush1.msra.mxu0 0.0
        %2344 = vmatprep.subr.mxu0 0.0
        %2345 = vmatpush1.msra.mxu0 0.0
        %2346 = vmatprep.subr.mxu0 0.0
        %2347 = vmatpush1.msra.mxu0 0.0
        %2348 = vmatprep.subr.mxu0 0.0
        %2349 = vmatpush1.msra.mxu0 0.0
        %2350 = vmatprep.subr.mxu0 0.0
        %2351 = vmatpush1.msra.mxu0 0.0
        %2352 = vmatprep.subr.mxu0 0.0
        %2353 = vmatpush1.msra.mxu0 0.0
        %2354 = vmatprep.subr.mxu0 0.0
        %2355 = vmatpush1.msra.mxu0 0.0
        %2356 = vmatprep.subr.mxu0 0.0
        %2357 = vmatpush1.msra.mxu0 0.0
        %2358 = vmatprep.subr.mxu0 0.0
        %2359 = vmatpush1.msra.mxu0 0.0
        %2360 = vmatprep.subr.mxu0 0.0
        %2361 = vmatpush1.msra.mxu0 0.0
        %2362 = vmatprep.subr.mxu0 0.0
        %2363 = vmatpush1.msra.mxu0 0.0
        %2364 = vmatprep.subr.mxu0 0.0
        %2365 = vmatpush1.msra.mxu0 0.0
        %2366 = vmatprep.subr.mxu0 0.0
        %2367 = vmatpush1.msra.mxu0 0.0
        %2368 = vmatprep.subr.mxu0 0.0
        %2369 = vmatpush1.msra.mxu0 0.0
        %2370 = vmatprep.subr.mxu0 0.0
        %2371 = vmatpush1.msra.mxu0 0.0
        %2372 = vmatprep.subr.mxu0 0.0
        %2373 = vmatpush1.msra.mxu0 0.0
        %2374 = vmatprep.subr.mxu0 0.0
        %2375 = vmatpush1.msra.mxu0 0.0
        %2376 = vmatprep.subr.mxu0 0.0
        %2377 = vmatpush1.msra.mxu0 0.0
        %2378 = vmatprep.subr.mxu0 0.0
        %2379 = vmatpush1.msra.mxu0 0.0
        %2380 = vmatprep.subr.mxu0 0.0
        %2381 = vmatpush1.msra.mxu0 0.0
        %2382 = vmatprep.subr.mxu0 0.0
        %2383 = vmatpush1.msra.mxu0 0.0
        %2384 = vmatprep.subr.mxu0 0.0
        %2385 = vmatpush1.msra.mxu0 0.0
        %2386 = vmatprep.subr.mxu0 0.0
        %2387 = vmatpush1.msra.mxu0 0.0
        %2388 = vmatprep.subr.mxu0 0.0
        %2389 = vmatpush1.msra.mxu0 0.0
        %2390 = vmatprep.subr.mxu0 0.0
        %2391 = vmatpush1.msra.mxu0 0.0
        %2392 = vmatprep.subr.mxu0 0.0
        %2393 = vmatpush1.msra.mxu0 0.0
        %2394 = vmatprep.subr.mxu0 0.0
        %2395 = vmatpush1.msra.mxu0 0.0
        %2396 = vmatprep.subr.mxu0 0.0
        %2397 = vmatpush1.msra.mxu0 0.0
        %2398 = vmatprep.subr.mxu0 0.0
        %2399 = vmatpush1.msra.mxu0 0.0
        %2400 = vmatprep.mubr.f32.mxu0 0.0
        %v2401 = vand.u32 %v2031, 4294901760
        %2402 = vmatmul.mubr.f32.gmra.mrb[0].mxu0 %v2401
        %v2403 = vpop.f32.mrb[0].mxu0
        %v2404 = vadd.f32 %v2330, %v2403
        %v2405 = vpop.f32.mrb[0].mxu0
        %2406 = vdwg.mxu0
        %2407 = vmatprep.subr.mxu0 0.0
        %v2408 = vand.u32 %v2028, 4294901760
        %2409 = vmatpush1.msra.mxu0 %v2408
        %2410 = vmatprep.subr.mxu0 0.0
        %2411 = vmatpush1.msra.mxu0 0.0
        %2412 = vmatprep.subr.mxu0 0.0
        %2413 = vmatpush1.msra.mxu0 0.0
        %2414 = vmatprep.subr.mxu0 0.0
        %2415 = vmatpush1.msra.mxu0 0.0
        %2416 = vmatprep.subr.mxu0 0.0
        %2417 = vmatpush1.msra.mxu0 0.0
        %2418 = vmatprep.subr.mxu0 0.0
        %2419 = vmatpush1.msra.mxu0 0.0
        %2420 = vmatprep.subr.mxu0 0.0
        %2421 = vmatpush1.msra.mxu0 0.0
        %2422 = vmatprep.subr.mxu0 0.0
        %2423 = vmatpush1.msra.mxu0 0.0
        %2424 = vmatprep.subr.mxu0 0.0
        %2425 = vmatpush1.msra.mxu0 0.0
        %2426 = vmatprep.subr.mxu0 0.0
        %2427 = vmatpush1.msra.mxu0 0.0
        %2428 = vmatprep.subr.mxu0 0.0
        %2429 = vmatpush1.msra.mxu0 0.0
        %2430 = vmatprep.subr.mxu0 0.0
        %2431 = vmatpush1.msra.mxu0 0.0
        %2432 = vmatprep.subr.mxu0 0.0
        %2433 = vmatpush1.msra.mxu0 0.0
        %2434 = vmatprep.subr.mxu0 0.0
        %2435 = vmatpush1.msra.mxu0 0.0
        %2436 = vmatprep.subr.mxu0 0.0
        %2437 = vmatpush1.msra.mxu0 0.0
        %2438 = vmatprep.subr.mxu0 0.0
        %2439 = vmatpush1.msra.mxu0 0.0
        %2440 = vmatprep.subr.mxu0 0.0
        %2441 = vmatpush1.msra.mxu0 0.0
        %2442 = vmatprep.subr.mxu0 0.0
        %2443 = vmatpush1.msra.mxu0 0.0
        %2444 = vmatprep.subr.mxu0 0.0
        %2445 = vmatpush1.msra.mxu0 0.0
        %2446 = vmatprep.subr.mxu0 0.0
        %2447 = vmatpush1.msra.mxu0 0.0
        %2448 = vmatprep.subr.mxu0 0.0
        %2449 = vmatpush1.msra.mxu0 0.0
        %2450 = vmatprep.subr.mxu0 0.0
        %2451 = vmatpush1.msra.mxu0 0.0
        %2452 = vmatprep.subr.mxu0 0.0
        %2453 = vmatpush1.msra.mxu0 0.0
        %2454 = vmatprep.subr.mxu0 0.0
        %2455 = vmatpush1.msra.mxu0 0.0
        %2456 = vmatprep.subr.mxu0 0.0
        %2457 = vmatpush1.msra.mxu0 0.0
        %2458 = vmatprep.subr.mxu0 0.0
        %2459 = vmatpush1.msra.mxu0 0.0
        %2460 = vmatprep.subr.mxu0 0.0
        %2461 = vmatpush1.msra.mxu0 0.0
        %2462 = vmatprep.subr.mxu0 0.0
        %2463 = vmatpush1.msra.mxu0 0.0
        %2464 = vmatprep.subr.mxu0 0.0
        %2465 = vmatpush1.msra.mxu0 0.0
        %2466 = vmatprep.subr.mxu0 0.0
        %2467 = vmatpush1.msra.mxu0 0.0
        %2468 = vmatprep.subr.mxu0 0.0
        %2469 = vmatpush1.msra.mxu0 0.0
        %2470 = vmatprep.subr.mxu0 0.0
        %2471 = vmatpush1.msra.mxu0 0.0
        %2472 = vmatprep.mubr.f32.mxu0 0.0
        %v2473 = vand.u32 %v2031, 4294901760
        %2474 = vmatmul.mubr.f32.gmra.mrb[0].mxu0 %v2473
        %v2475 = vpop.f32.mrb[0].mxu0
        %v2476 = vadd.f32 %v2404, %v2475
        %v2477 = vpop.f32.mrb[0].mxu0
        %2478 = vdwg.mxu0
        %2479 = vst.msk [vmem:[#allocation2] sm:$0xff] %vm1562, %v2476
        %2480 = vrot.lane.b32.xlu0 %v1056, 120
        %v2481 = vpop.permute.xlu0 %2480
        %2482 = vrot.lane.b32.xlu0 %v1553, 120
        %v2483 = vpop.permute.xlu0 %2482
        %v2484 = vsel %vm1562, %v2481, 0
        %v2486 = vsel %vm1562, %v2483, 0
        %2488 = vmatprep.subr.mxu0 0.0
        %v2489 = vand.u32 %v2486, 4294901760
        %2490 = vmatpush1.xpose.msra.mxu0 %v2489
        %2491 = vmatprep.subr.mxu0 0.0
        %2492 = vmatpush1.xpose.msra.mxu0 0.0
        %2493 = vmatprep.subr.mxu0 0.0
        %2494 = vmatpush1.xpose.msra.mxu0 0.0
        %2495 = vmatprep.subr.mxu0 0.0
        %2496 = vmatpush1.xpose.msra.mxu0 0.0
        %2497 = vmatprep.subr.mxu0 0.0
        %2498 = vmatpush1.xpose.msra.mxu0 0.0
        %2499 = vmatprep.subr.mxu0 0.0
        %2500 = vmatpush1.xpose.msra.mxu0 0.0
        %2501 = vmatprep.subr.mxu0 0.0
        %2502 = vmatpush1.xpose.msra.mxu0 0.0
        %2503 = vmatprep.subr.mxu0 0.0
        %2504 = vmatpush1.xpose.msra.mxu0 0.0
        %2505 = vmatprep.subr.mxu0 0.0
        %2506 = vmatpush1.xpose.msra.mxu0 0.0
        %2507 = vmatprep.subr.mxu0 0.0
        %2508 = vmatpush1.xpose.msra.mxu0 0.0
        %2509 = vmatprep.subr.mxu0 0.0
        %2510 = vmatpush1.xpose.msra.mxu0 0.0
        %2511 = vmatprep.subr.mxu0 0.0
        %2512 = vmatpush1.xpose.msra.mxu0 0.0
        %2513 = vmatprep.subr.mxu0 0.0
        %2514 = vmatpush1.xpose.msra.mxu0 0.0
        %2515 = vmatprep.subr.mxu0 0.0
        %2516 = vmatpush1.xpose.msra.mxu0 0.0
        %2517 = vmatprep.subr.mxu0 0.0
        %2518 = vmatpush1.xpose.msra.mxu0 0.0
        %2519 = vmatprep.subr.mxu0 0.0
        %2520 = vmatpush1.xpose.msra.mxu0 0.0
        %2521 = vmatprep.subr.mxu0 0.0
        %2522 = vmatpush1.xpose.msra.mxu0 0.0
        %2523 = vmatprep.subr.mxu0 0.0
        %2524 = vmatpush1.xpose.msra.mxu0 0.0
        %2525 = vmatprep.subr.mxu0 0.0
        %2526 = vmatpush1.xpose.msra.mxu0 0.0
        %2527 = vmatprep.subr.mxu0 0.0
        %2528 = vmatpush1.xpose.msra.mxu0 0.0
        %2529 = vmatprep.subr.mxu0 0.0
        %2530 = vmatpush1.xpose.msra.mxu0 0.0
        %2531 = vmatprep.subr.mxu0 0.0
        %2532 = vmatpush1.xpose.msra.mxu0 0.0
        %2533 = vmatprep.subr.mxu0 0.0
        %2534 = vmatpush1.xpose.msra.mxu0 0.0
        %2535 = vmatprep.subr.mxu0 0.0
        %2536 = vmatpush1.xpose.msra.mxu0 0.0
        %2537 = vmatprep.subr.mxu0 0.0
        %2538 = vmatpush1.xpose.msra.mxu0 0.0
        %2539 = vmatprep.subr.mxu0 0.0
        %2540 = vmatpush1.xpose.msra.mxu0 0.0
        %2541 = vmatprep.subr.mxu0 0.0
        %2542 = vmatpush1.xpose.msra.mxu0 0.0
        %2543 = vmatprep.subr.mxu0 0.0
        %2544 = vmatpush1.xpose.msra.mxu0 0.0
        %2545 = vmatprep.subr.mxu0 0.0
        %2546 = vmatpush1.xpose.msra.mxu0 0.0
        %2547 = vmatprep.subr.mxu0 0.0
        %2548 = vmatpush1.xpose.msra.mxu0 0.0
        %2549 = vmatprep.subr.mxu0 0.0
        %2550 = vmatpush1.xpose.msra.mxu0 0.0
        %2551 = vmatprep.subr.mxu0 0.0
        %2552 = vmatpush1.xpose.msra.mxu0 0.0
        %2553 = vmatprep.mubr.f32.mxu0 0.0
        %v2554 = vand.u32 %v2484, 4294901760
        %v2555 = vsub.f32 %v2484, %v2554
        %v2556 = vand.u32 %v2555, 4294901760
        %v2557 = vsub.f32 %v2555, %v2556
        %v2558 = vand.u32 %v2557, 4294901760
        %2559 = vmatmul.mubr.f32.gmra.mrb[0].mxu0 %v2558
        %v2560 = vpop.f32.mrb[0].mxu0
        %v2561 = vadd.f32 %v1560, %v2560
        %v2562 = vpop.f32.mrb[0].mxu0
        %2563 = vdwg.mxu0
        %2564 = vmatprep.subr.mxu0 0.0
        %v2565 = vand.u32 %v2486, 4294901760
        %v2566 = vsub.f32 %v2486, %v2565
        %v2567 = vand.u32 %v2566, 4294901760
        %v2568 = vsub.f32 %v2566, %v2567
        %v2569 = vand.u32 %v2568, 4294901760
        %2570 = vmatpush1.xpose.msra.mxu0 %v2569
        %2571 = vmatprep.subr.mxu0 0.0
        %2572 = vmatpush1.xpose.msra.mxu0 0.0
        %2573 = vmatprep.subr.mxu0 0.0
        %2574 = vmatpush1.xpose.msra.mxu0 0.0
        %2575 = vmatprep.subr.mxu0 0.0
        %2576 = vmatpush1.xpose.msra.mxu0 0.0
        %2577 = vmatprep.subr.mxu0 0.0
        %2578 = vmatpush1.xpose.msra.mxu0 0.0
        %2579 = vmatprep.subr.mxu0 0.0
        %2580 = vmatpush1.xpose.msra.mxu0 0.0
        %2581 = vmatprep.subr.mxu0 0.0
        %2582 = vmatpush1.xpose.msra.mxu0 0.0
        %2583 = vmatprep.subr.mxu0 0.0
        %2584 = vmatpush1.xpose.msra.mxu0 0.0
        %2585 = vmatprep.subr.mxu0 0.0
        %2586 = vmatpush1.xpose.msra.mxu0 0.0
        %2587 = vmatprep.subr.mxu0 0.0
        %2588 = vmatpush1.xpose.msra.mxu0 0.0
        %2589 = vmatprep.subr.mxu0 0.0
        %2590 = vmatpush1.xpose.msra.mxu0 0.0
        %2591 = vmatprep.subr.mxu0 0.0
        %2592 = vmatpush1.xpose.msra.mxu0 0.0
        %2593 = vmatprep.subr.mxu0 0.0
        %2594 = vmatpush1.xpose.msra.mxu0 0.0
        %2595 = vmatprep.subr.mxu0 0.0
        %2596 = vmatpush1.xpose.msra.mxu0 0.0
        %2597 = vmatprep.subr.mxu0 0.0
        %2598 = vmatpush1.xpose.msra.mxu0 0.0
        %2599 = vmatprep.subr.mxu0 0.0
        %2600 = vmatpush1.xpose.msra.mxu0 0.0
        %2601 = vmatprep.subr.mxu0 0.0
        %2602 = vmatpush1.xpose.msra.mxu0 0.0
        %2603 = vmatprep.subr.mxu0 0.0
        %2604 = vmatpush1.xpose.msra.mxu0 0.0
        %2605 = vmatprep.subr.mxu0 0.0
        %2606 = vmatpush1.xpose.msra.mxu0 0.0
        %2607 = vmatprep.subr.mxu0 0.0
        %2608 = vmatpush1.xpose.msra.mxu0 0.0
        %2609 = vmatprep.subr.mxu0 0.0
        %2610 = vmatpush1.xpose.msra.mxu0 0.0
        %2611 = vmatprep.subr.mxu0 0.0
        %2612 = vmatpush1.xpose.msra.mxu0 0.0
        %2613 = vmatprep.subr.mxu0 0.0
        %2614 = vmatpush1.xpose.msra.mxu0 0.0
        %2615 = vmatprep.subr.mxu0 0.0
        %2616 = vmatpush1.xpose.msra.mxu0 0.0
        %2617 = vmatprep.subr.mxu0 0.0
        %2618 = vmatpush1.xpose.msra.mxu0 0.0
        %2619 = vmatprep.subr.mxu0 0.0
        %2620 = vmatpush1.xpose.msra.mxu0 0.0
        %2621 = vmatprep.subr.mxu0 0.0
        %2622 = vmatpush1.xpose.msra.mxu0 0.0
        %2623 = vmatprep.subr.mxu0 0.0
        %2624 = vmatpush1.xpose.msra.mxu0 0.0
        %2625 = vmatprep.subr.mxu0 0.0
        %2626 = vmatpush1.xpose.msra.mxu0 0.0
        %2627 = vmatprep.subr.mxu0 0.0
        %2628 = vmatpush1.xpose.msra.mxu0 0.0
        %2629 = vmatprep.subr.mxu0 0.0
        %2630 = vmatpush1.xpose.msra.mxu0 0.0
        %2631 = vmatprep.subr.mxu0 0.0
        %2632 = vmatpush1.xpose.msra.mxu0 0.0
        %2633 = vmatprep.mubr.f32.mxu0 0.0
        %v2634 = vand.u32 %v2484, 4294901760
        %2635 = vmatmul.mubr.f32.gmra.mrb[0].mxu0 %v2634
        %v2636 = vpop.f32.mrb[0].mxu0
        %v2637 = vadd.f32 %v2561, %v2636
        %v2638 = vpop.f32.mrb[0].mxu0
        %2639 = vdwg.mxu0
        %2640 = vmatprep.subr.mxu0 0.0
        %v2641 = vand.u32 %v2486, 4294901760
        %v2642 = vsub.f32 %v2486, %v2641
        %2643 = vmatpush1.xpose.msra.mxu0 %v2642
        %2644 = vmatprep.subr.mxu0 0.0
        %2645 = vmatpush1.xpose.msra.mxu0 0.0
        %2646 = vmatprep.subr.mxu0 0.0
        %2647 = vmatpush1.xpose.msra.mxu0 0.0
        %2648 = vmatprep.subr.mxu0 0.0
        %2649 = vmatpush1.xpose.msra.mxu0 0.0
        %2650 = vmatprep.subr.mxu0 0.0
        %2651 = vmatpush1.xpose.msra.mxu0 0.0
        %2652 = vmatprep.subr.mxu0 0.0
        %2653 = vmatpush1.xpose.msra.mxu0 0.0
        %2654 = vmatprep.subr.mxu0 0.0
        %2655 = vmatpush1.xpose.msra.mxu0 0.0
        %2656 = vmatprep.subr.mxu0 0.0
        %2657 = vmatpush1.xpose.msra.mxu0 0.0
        %2658 = vmatprep.subr.mxu0 0.0
        %2659 = vmatpush1.xpose.msra.mxu0 0.0
        %2660 = vmatprep.subr.mxu0 0.0
        %2661 = vmatpush1.xpose.msra.mxu0 0.0
        %2662 = vmatprep.subr.mxu0 0.0
        %2663 = vmatpush1.xpose.msra.mxu0 0.0
        %2664 = vmatprep.subr.mxu0 0.0
        %2665 = vmatpush1.xpose.msra.mxu0 0.0
        %2666 = vmatprep.subr.mxu0 0.0
        %2667 = vmatpush1.xpose.msra.mxu0 0.0
        %2668 = vmatprep.subr.mxu0 0.0
        %2669 = vmatpush1.xpose.msra.mxu0 0.0
        %2670 = vmatprep.subr.mxu0 0.0
        %2671 = vmatpush1.xpose.msra.mxu0 0.0
        %2672 = vmatprep.subr.mxu0 0.0
        %2673 = vmatpush1.xpose.msra.mxu0 0.0
        %2674 = vmatprep.subr.mxu0 0.0
        %2675 = vmatpush1.xpose.msra.mxu0 0.0
        %2676 = vmatprep.subr.mxu0 0.0
        %2677 = vmatpush1.xpose.msra.mxu0 0.0
        %2678 = vmatprep.subr.mxu0 0.0
        %2679 = vmatpush1.xpose.msra.mxu0 0.0
        %2680 = vmatprep.subr.mxu0 0.0
        %2681 = vmatpush1.xpose.msra.mxu0 0.0
        %2682 = vmatprep.subr.mxu0 0.0
        %2683 = vmatpush1.xpose.msra.mxu0 0.0
        %2684 = vmatprep.subr.mxu0 0.0
        %2685 = vmatpush1.xpose.msra.mxu0 0.0
        %2686 = vmatprep.subr.mxu0 0.0
        %2687 = vmatpush1.xpose.msra.mxu0 0.0
        %2688 = vmatprep.subr.mxu0 0.0
        %2689 = vmatpush1.xpose.msra.mxu0 0.0
        %2690 = vmatprep.subr.mxu0 0.0
        %2691 = vmatpush1.xpose.msra.mxu0 0.0
        %2692 = vmatprep.subr.mxu0 0.0
        %2693 = vmatpush1.xpose.msra.mxu0 0.0
        %2694 = vmatprep.subr.mxu0 0.0
        %2695 = vmatpush1.xpose.msra.mxu0 0.0
        %2696 = vmatprep.subr.mxu0 0.0
        %2697 = vmatpush1.xpose.msra.mxu0 0.0
        %2698 = vmatprep.subr.mxu0 0.0
        %2699 = vmatpush1.xpose.msra.mxu0 0.0
        %2700 = vmatprep.subr.mxu0 0.0
        %2701 = vmatpush1.xpose.msra.mxu0 0.0
        %2702 = vmatprep.subr.mxu0 0.0
        %2703 = vmatpush1.xpose.msra.mxu0 0.0
        %2704 = vmatprep.subr.mxu0 0.0
        %2705 = vmatpush1.xpose.msra.mxu0 0.0
        %2706 = vmatprep.mubr.f32.mxu0 0.0
        %v2707 = vand.u32 %v2484, 4294901760
        %v2708 = vsub.f32 %v2484, %v2707
        %2709 = vmatmul.mubr.f32.gmra.mrb[0].mxu0 %v2708
        %v2710 = vpop.f32.mrb[0].mxu0
        %v2711 = vadd.f32 %v2637, %v2710
        %v2712 = vpop.f32.mrb[0].mxu0
        %2713 = vdwg.mxu0
        %2714 = vmatprep.subr.mxu0 0.0
        %v2715 = vand.u32 %v2486, 4294901760
        %2716 = vmatpush1.xpose.msra.mxu0 %v2715
        %2717 = vmatprep.subr.mxu0 0.0
        %2718 = vmatpush1.xpose.msra.mxu0 0.0
        %2719 = vmatprep.subr.mxu0 0.0
        %2720 = vmatpush1.xpose.msra.mxu0 0.0
        %2721 = vmatprep.subr.mxu0 0.0
        %2722 = vmatpush1.xpose.msra.mxu0 0.0
        %2723 = vmatprep.subr.mxu0 0.0
        %2724 = vmatpush1.xpose.msra.mxu0 0.0
        %2725 = vmatprep.subr.mxu0 0.0
        %2726 = vmatpush1.xpose.msra.mxu0 0.0
        %2727 = vmatprep.subr.mxu0 0.0
        %2728 = vmatpush1.xpose.msra.mxu0 0.0
        %2729 = vmatprep.subr.mxu0 0.0
        %2730 = vmatpush1.xpose.msra.mxu0 0.0
        %2731 = vmatprep.subr.mxu0 0.0
        %2732 = vmatpush1.xpose.msra.mxu0 0.0
        %2733 = vmatprep.subr.mxu0 0.0
        %2734 = vmatpush1.xpose.msra.mxu0 0.0
        %2735 = vmatprep.subr.mxu0 0.0
        %2736 = vmatpush1.xpose.msra.mxu0 0.0
        %2737 = vmatprep.subr.mxu0 0.0
        %2738 = vmatpush1.xpose.msra.mxu0 0.0
        %2739 = vmatprep.subr.mxu0 0.0
        %2740 = vmatpush1.xpose.msra.mxu0 0.0
        %2741 = vmatprep.subr.mxu0 0.0
        %2742 = vmatpush1.xpose.msra.mxu0 0.0
        %2743 = vmatprep.subr.mxu0 0.0
        %2744 = vmatpush1.xpose.msra.mxu0 0.0
        %2745 = vmatprep.subr.mxu0 0.0
        %2746 = vmatpush1.xpose.msra.mxu0 0.0
        %2747 = vmatprep.subr.mxu0 0.0
        %2748 = vmatpush1.xpose.msra.mxu0 0.0
        %2749 = vmatprep.subr.mxu0 0.0
        %2750 = vmatpush1.xpose.msra.mxu0 0.0
        %2751 = vmatprep.subr.mxu0 0.0
        %2752 = vmatpush1.xpose.msra.mxu0 0.0
        %2753 = vmatprep.subr.mxu0 0.0
        %2754 = vmatpush1.xpose.msra.mxu0 0.0
        %2755 = vmatprep.subr.mxu0 0.0
        %2756 = vmatpush1.xpose.msra.mxu0 0.0
        %2757 = vmatprep.subr.mxu0 0.0
        %2758 = vmatpush1.xpose.msra.mxu0 0.0
        %2759 = vmatprep.subr.mxu0 0.0
        %2760 = vmatpush1.xpose.msra.mxu0 0.0
        %2761 = vmatprep.subr.mxu0 0.0
        %2762 = vmatpush1.xpose.msra.mxu0 0.0
        %2763 = vmatprep.subr.mxu0 0.0
        %2764 = vmatpush1.xpose.msra.mxu0 0.0
        %2765 = vmatprep.subr.mxu0 0.0
        %2766 = vmatpush1.xpose.msra.mxu0 0.0
        %2767 = vmatprep.subr.mxu0 0.0
        %2768 = vmatpush1.xpose.msra.mxu0 0.0
        %2769 = vmatprep.subr.mxu0 0.0
        %2770 = vmatpush1.xpose.msra.mxu0 0.0
        %2771 = vmatprep.subr.mxu0 0.0
        %2772 = vmatpush1.xpose.msra.mxu0 0.0
        %2773 = vmatprep.subr.mxu0 0.0
        %2774 = vmatpush1.xpose.msra.mxu0 0.0
        %2775 = vmatprep.subr.mxu0 0.0
        %2776 = vmatpush1.xpose.msra.mxu0 0.0
        %2777 = vmatprep.subr.mxu0 0.0
        %2778 = vmatpush1.xpose.msra.mxu0 0.0
        %2779 = vmatprep.mubr.f32.mxu0 0.0
        %v2780 = vand.u32 %v2484, 4294901760
        %v2781 = vsub.f32 %v2484, %v2780
        %v2782 = vand.u32 %v2781, 4294901760
        %2783 = vmatmul.mubr.f32.gmra.mrb[0].mxu0 %v2782
        %v2784 = vpop.f32.mrb[0].mxu0
        %v2785 = vadd.f32 %v2711, %v2784
        %v2786 = vpop.f32.mrb[0].mxu0
        %2787 = vdwg.mxu0
        %2788 = vmatprep.subr.mxu0 0.0
        %v2789 = vand.u32 %v2486, 4294901760
        %v2790 = vsub.f32 %v2486, %v2789
        %v2791 = vand.u32 %v2790, 4294901760
        %2792 = vmatpush1.xpose.msra.mxu0 %v2791
        %2793 = vmatprep.subr.mxu0 0.0
        %2794 = vmatpush1.xpose.msra.mxu0 0.0
        %2795 = vmatprep.subr.mxu0 0.0
        %2796 = vmatpush1.xpose.msra.mxu0 0.0
        %2797 = vmatprep.subr.mxu0 0.0
        %2798 = vmatpush1.xpose.msra.mxu0 0.0
        %2799 = vmatprep.subr.mxu0 0.0
        %2800 = vmatpush1.xpose.msra.mxu0 0.0
        %2801 = vmatprep.subr.mxu0 0.0
        %2802 = vmatpush1.xpose.msra.mxu0 0.0
        %2803 = vmatprep.subr.mxu0 0.0
        %2804 = vmatpush1.xpose.msra.mxu0 0.0
        %2805 = vmatprep.subr.mxu0 0.0
        %2806 = vmatpush1.xpose.msra.mxu0 0.0
        %2807 = vmatprep.subr.mxu0 0.0
        %2808 = vmatpush1.xpose.msra.mxu0 0.0
        %2809 = vmatprep.subr.mxu0 0.0
        %2810 = vmatpush1.xpose.msra.mxu0 0.0
        %2811 = vmatprep.subr.mxu0 0.0
        %2812 = vmatpush1.xpose.msra.mxu0 0.0
        %2813 = vmatprep.subr.mxu0 0.0
        %2814 = vmatpush1.xpose.msra.mxu0 0.0
        %2815 = vmatprep.subr.mxu0 0.0
        %2816 = vmatpush1.xpose.msra.mxu0 0.0
        %2817 = vmatprep.subr.mxu0 0.0
        %2818 = vmatpush1.xpose.msra.mxu0 0.0
        %2819 = vmatprep.subr.mxu0 0.0
        %2820 = vmatpush1.xpose.msra.mxu0 0.0
        %2821 = vmatprep.subr.mxu0 0.0
        %2822 = vmatpush1.xpose.msra.mxu0 0.0
        %2823 = vmatprep.subr.mxu0 0.0
        %2824 = vmatpush1.xpose.msra.mxu0 0.0
        %2825 = vmatprep.subr.mxu0 0.0
        %2826 = vmatpush1.xpose.msra.mxu0 0.0
        %2827 = vmatprep.subr.mxu0 0.0
        %2828 = vmatpush1.xpose.msra.mxu0 0.0
        %2829 = vmatprep.subr.mxu0 0.0
        %2830 = vmatpush1.xpose.msra.mxu0 0.0
        %2831 = vmatprep.subr.mxu0 0.0
        %2832 = vmatpush1.xpose.msra.mxu0 0.0
        %2833 = vmatprep.subr.mxu0 0.0
        %2834 = vmatpush1.xpose.msra.mxu0 0.0
        %2835 = vmatprep.subr.mxu0 0.0
        %2836 = vmatpush1.xpose.msra.mxu0 0.0
        %2837 = vmatprep.subr.mxu0 0.0
        %2838 = vmatpush1.xpose.msra.mxu0 0.0
        %2839 = vmatprep.subr.mxu0 0.0
        %2840 = vmatpush1.xpose.msra.mxu0 0.0
        %2841 = vmatprep.subr.mxu0 0.0
        %2842 = vmatpush1.xpose.msra.mxu0 0.0
        %2843 = vmatprep.subr.mxu0 0.0
        %2844 = vmatpush1.xpose.msra.mxu0 0.0
        %2845 = vmatprep.subr.mxu0 0.0
        %2846 = vmatpush1.xpose.msra.mxu0 0.0
        %2847 = vmatprep.subr.mxu0 0.0
        %2848 = vmatpush1.xpose.msra.mxu0 0.0
        %2849 = vmatprep.subr.mxu0 0.0
        %2850 = vmatpush1.xpose.msra.mxu0 0.0
        %2851 = vmatprep.subr.mxu0 0.0
        %2852 = vmatpush1.xpose.msra.mxu0 0.0
        %2853 = vmatprep.subr.mxu0 0.0
        %2854 = vmatpush1.xpose.msra.mxu0 0.0
        %2855 = vmatprep.mubr.f32.mxu0 0.0
        %v2856 = vand.u32 %v2484, 4294901760
        %2857 = vmatmul.mubr.f32.gmra.mrb[0].mxu0 %v2856
        %v2858 = vpop.f32.mrb[0].mxu0
        %v2859 = vadd.f32 %v2785, %v2858
        %v2860 = vpop.f32.mrb[0].mxu0
        %2861 = vdwg.mxu0
        %2862 = vmatprep.subr.mxu0 0.0
        %v2863 = vand.u32 %v2486, 4294901760
        %2864 = vmatpush1.xpose.msra.mxu0 %v2863
        %2865 = vmatprep.subr.mxu0 0.0
        %2866 = vmatpush1.xpose.msra.mxu0 0.0
        %2867 = vmatprep.subr.mxu0 0.0
        %2868 = vmatpush1.xpose.msra.mxu0 0.0
        %2869 = vmatprep.subr.mxu0 0.0
        %2870 = vmatpush1.xpose.msra.mxu0 0.0
        %2871 = vmatprep.subr.mxu0 0.0
        %2872 = vmatpush1.xpose.msra.mxu0 0.0
        %2873 = vmatprep.subr.mxu0 0.0
        %2874 = vmatpush1.xpose.msra.mxu0 0.0
        %2875 = vmatprep.subr.mxu0 0.0
        %2876 = vmatpush1.xpose.msra.mxu0 0.0
        %2877 = vmatprep.subr.mxu0 0.0
        %2878 = vmatpush1.xpose.msra.mxu0 0.0
        %2879 = vmatprep.subr.mxu0 0.0
        %2880 = vmatpush1.xpose.msra.mxu0 0.0
        %2881 = vmatprep.subr.mxu0 0.0
        %2882 = vmatpush1.xpose.msra.mxu0 0.0
        %2883 = vmatprep.subr.mxu0 0.0
        %2884 = vmatpush1.xpose.msra.mxu0 0.0
        %2885 = vmatprep.subr.mxu0 0.0
        %2886 = vmatpush1.xpose.msra.mxu0 0.0
        %2887 = vmatprep.subr.mxu0 0.0
        %2888 = vmatpush1.xpose.msra.mxu0 0.0
        %2889 = vmatprep.subr.mxu0 0.0
        %2890 = vmatpush1.xpose.msra.mxu0 0.0
        %2891 = vmatprep.subr.mxu0 0.0
        %2892 = vmatpush1.xpose.msra.mxu0 0.0
        %2893 = vmatprep.subr.mxu0 0.0
        %2894 = vmatpush1.xpose.msra.mxu0 0.0
        %2895 = vmatprep.subr.mxu0 0.0
        %2896 = vmatpush1.xpose.msra.mxu0 0.0
        %2897 = vmatprep.subr.mxu0 0.0
        %2898 = vmatpush1.xpose.msra.mxu0 0.0
        %2899 = vmatprep.subr.mxu0 0.0
        %2900 = vmatpush1.xpose.msra.mxu0 0.0
        %2901 = vmatprep.subr.mxu0 0.0
        %2902 = vmatpush1.xpose.msra.mxu0 0.0
        %2903 = vmatprep.subr.mxu0 0.0
        %2904 = vmatpush1.xpose.msra.mxu0 0.0
        %2905 = vmatprep.subr.mxu0 0.0
        %2906 = vmatpush1.xpose.msra.mxu0 0.0
        %2907 = vmatprep.subr.mxu0 0.0
        %2908 = vmatpush1.xpose.msra.mxu0 0.0
        %2909 = vmatprep.subr.mxu0 0.0
        %2910 = vmatpush1.xpose.msra.mxu0 0.0
        %2911 = vmatprep.subr.mxu0 0.0
        %2912 = vmatpush1.xpose.msra.mxu0 0.0
        %2913 = vmatprep.subr.mxu0 0.0
        %2914 = vmatpush1.xpose.msra.mxu0 0.0
        %2915 = vmatprep.subr.mxu0 0.0
        %2916 = vmatpush1.xpose.msra.mxu0 0.0
        %2917 = vmatprep.subr.mxu0 0.0
        %2918 = vmatpush1.xpose.msra.mxu0 0.0
        %2919 = vmatprep.subr.mxu0 0.0
        %2920 = vmatpush1.xpose.msra.mxu0 0.0
        %2921 = vmatprep.subr.mxu0 0.0
        %2922 = vmatpush1.xpose.msra.mxu0 0.0
        %2923 = vmatprep.subr.mxu0 0.0
        %2924 = vmatpush1.xpose.msra.mxu0 0.0
        %2925 = vmatprep.subr.mxu0 0.0
        %2926 = vmatpush1.xpose.msra.mxu0 0.0
        %2927 = vmatprep.mubr.f32.mxu0 0.0
        %v2928 = vand.u32 %v2484, 4294901760
        %2929 = vmatmul.mubr.f32.gmra.mrb[0].mxu0 %v2928
        %v2930 = vpop.f32.mrb[0].mxu0
        %v2931 = vadd.f32 %v2859, %v2930
        %v2932 = vpop.f32.mrb[0].mxu0
        %2933 = vdwg.mxu0
        %v2934 = vsel %vm1562, %v2931, -inf
        %2935 = vmax.xlane.f32.xlu0 %v2934
        %v2936 = vpop.xlane.xlu0 %2935
        %v2937 = vsub.f32 %v2931, %v2936
        %v2938 = vmul.f32 %v2937, 1.442695
        %v2939 = vpow.pop %v2938
        %v2940 = vsel %vm1562, %v2939, 0.0
        %2941 = vadd.xlane.f32.xlu0 %v2940
        %v2942 = vpop.xlane.xlu0 %2941
        %v2943 = vrcp.pop %v2942
        %v2944 = vmul.f32 %v2939, %v2943
        %s2945 = scalar_lea.vmem %s549, 8 [#allocation13]
        %2946 = vst.msk [vmem:[%s2945] sm:$0xff] %vm1562, %v2944
        %2947 = vrot.lane.b32.xlu0 %v1553, 88
        %v2948 = vpop.permute.xlu0 %2947
        %v2951 = vsel %vm1562, %v2944, 0
        %2953 = vmatprep.subr.mxu0 0.0
        %v2954 = vand.u32 %v2948, 4294901760
        %2955 = vmatpush1.msra.mxu0 %v2954
        %2956 = vmatprep.subr.mxu0 0.0
        %2957 = vmatpush1.msra.mxu0 0.0
        %2958 = vmatprep.subr.mxu0 0.0
        %2959 = vmatpush1.msra.mxu0 0.0
        %2960 = vmatprep.subr.mxu0 0.0
        %2961 = vmatpush1.msra.mxu0 0.0
        %2962 = vmatprep.subr.mxu0 0.0
        %2963 = vmatpush1.msra.mxu0 0.0
        %2964 = vmatprep.subr.mxu0 0.0
        %2965 = vmatpush1.msra.mxu0 0.0
        %2966 = vmatprep.subr.mxu0 0.0
        %2967 = vmatpush1.msra.mxu0 0.0
        %2968 = vmatprep.subr.mxu0 0.0
        %2969 = vmatpush1.msra.mxu0 0.0
        %2970 = vmatprep.subr.mxu0 0.0
        %2971 = vmatpush1.msra.mxu0 0.0
        %2972 = vmatprep.subr.mxu0 0.0
        %2973 = vmatpush1.msra.mxu0 0.0
        %2974 = vmatprep.subr.mxu0 0.0
        %2975 = vmatpush1.msra.mxu0 0.0
        %2976 = vmatprep.subr.mxu0 0.0
        %2977 = vmatpush1.msra.mxu0 0.0
        %2978 = vmatprep.subr.mxu0 0.0
        %2979 = vmatpush1.msra.mxu0 0.0
        %2980 = vmatprep.subr.mxu0 0.0
        %2981 = vmatpush1.msra.mxu0 0.0
        %2982 = vmatprep.subr.mxu0 0.0
        %2983 = vmatpush1.msra.mxu0 0.0
        %2984 = vmatprep.subr.mxu0 0.0
        %2985 = vmatpush1.msra.mxu0 0.0
        %2986 = vmatprep.subr.mxu0 0.0
        %2987 = vmatpush1.msra.mxu0 0.0
        %2988 = vmatprep.subr.mxu0 0.0
        %2989 = vmatpush1.msra.mxu0 0.0
        %2990 = vmatprep.subr.mxu0 0.0
        %2991 = vmatpush1.msra.mxu0 0.0
        %2992 = vmatprep.subr.mxu0 0.0
        %2993 = vmatpush1.msra.mxu0 0.0
        %2994 = vmatprep.subr.mxu0 0.0
        %2995 = vmatpush1.msra.mxu0 0.0
        %2996 = vmatprep.subr.mxu0 0.0
        %2997 = vmatpush1.msra.mxu0 0.0
        %2998 = vmatprep.subr.mxu0 0.0
        %2999 = vmatpush1.msra.mxu0 0.0
        %3000 = vmatprep.subr.mxu0 0.0
        %3001 = vmatpush1.msra.mxu0 0.0
        %3002 = vmatprep.subr.mxu0 0.0
        %3003 = vmatpush1.msra.mxu0 0.0
        %3004 = vmatprep.subr.mxu0 0.0
        %3005 = vmatpush1.msra.mxu0 0.0
        %3006 = vmatprep.subr.mxu0 0.0
        %3007 = vmatpush1.msra.mxu0 0.0
        %3008 = vmatprep.subr.mxu0 0.0
        %3009 = vmatpush1.msra.mxu0 0.0
        %3010 = vmatprep.subr.mxu0 0.0
        %3011 = vmatpush1.msra.mxu0 0.0
        %3012 = vmatprep.subr.mxu0 0.0
        %3013 = vmatpush1.msra.mxu0 0.0
        %3014 = vmatprep.subr.mxu0 0.0
        %3015 = vmatpush1.msra.mxu0 0.0
        %3016 = vmatprep.subr.mxu0 0.0
        %3017 = vmatpush1.msra.mxu0 0.0
        %3018 = vmatprep.mubr.f32.mxu0 0.0
        %v3019 = vand.u32 %v2951, 4294901760
        %v3020 = vsub.f32 %v2951, %v3019
        %v3021 = vand.u32 %v3020, 4294901760
        %v3022 = vsub.f32 %v3020, %v3021
        %v3023 = vand.u32 %v3022, 4294901760
        %3024 = vmatmul.mubr.f32.gmra.mrb[0].mxu0 %v3023
        %v3025 = vpop.f32.mrb[0].mxu0
        %v3026 = vadd.f32 0.0, %v3025
        %v3027 = vpop.f32.mrb[0].mxu0
        %3028 = vdwg.mxu0
        %3029 = vmatprep.subr.mxu0 0.0
        %v3030 = vand.u32 %v2948, 4294901760
        %v3031 = vsub.f32 %v2948, %v3030
        %v3032 = vand.u32 %v3031, 4294901760
        %v3033 = vsub.f32 %v3031, %v3032
        %v3034 = vand.u32 %v3033, 4294901760
        %3035 = vmatpush1.msra.mxu0 %v3034
        %3036 = vmatprep.subr.mxu0 0.0
        %3037 = vmatpush1.msra.mxu0 0.0
        %3038 = vmatprep.subr.mxu0 0.0
        %3039 = vmatpush1.msra.mxu0 0.0
        %3040 = vmatprep.subr.mxu0 0.0
        %3041 = vmatpush1.msra.mxu0 0.0
        %3042 = vmatprep.subr.mxu0 0.0
        %3043 = vmatpush1.msra.mxu0 0.0
        %3044 = vmatprep.subr.mxu0 0.0
        %3045 = vmatpush1.msra.mxu0 0.0
        %3046 = vmatprep.subr.mxu0 0.0
        %3047 = vmatpush1.msra.mxu0 0.0
        %3048 = vmatprep.subr.mxu0 0.0
        %3049 = vmatpush1.msra.mxu0 0.0
        %3050 = vmatprep.subr.mxu0 0.0
        %3051 = vmatpush1.msra.mxu0 0.0
        %3052 = vmatprep.subr.mxu0 0.0
        %3053 = vmatpush1.msra.mxu0 0.0
        %3054 = vmatprep.subr.mxu0 0.0
        %3055 = vmatpush1.msra.mxu0 0.0
        %3056 = vmatprep.subr.mxu0 0.0
        %3057 = vmatpush1.msra.mxu0 0.0
        %3058 = vmatprep.subr.mxu0 0.0
        %3059 = vmatpush1.msra.mxu0 0.0
        %3060 = vmatprep.subr.mxu0 0.0
        %3061 = vmatpush1.msra.mxu0 0.0
        %3062 = vmatprep.subr.mxu0 0.0
        %3063 = vmatpush1.msra.mxu0 0.0
        %3064 = vmatprep.subr.mxu0 0.0
        %3065 = vmatpush1.msra.mxu0 0.0
        %3066 = vmatprep.subr.mxu0 0.0
        %3067 = vmatpush1.msra.mxu0 0.0
        %3068 = vmatprep.subr.mxu0 0.0
        %3069 = vmatpush1.msra.mxu0 0.0
        %3070 = vmatprep.subr.mxu0 0.0
        %3071 = vmatpush1.msra.mxu0 0.0
        %3072 = vmatprep.subr.mxu0 0.0
        %3073 = vmatpush1.msra.mxu0 0.0
        %3074 = vmatprep.subr.mxu0 0.0
        %3075 = vmatpush1.msra.mxu0 0.0
        %3076 = vmatprep.subr.mxu0 0.0
        %3077 = vmatpush1.msra.mxu0 0.0
        %3078 = vmatprep.subr.mxu0 0.0
        %3079 = vmatpush1.msra.mxu0 0.0
        %3080 = vmatprep.subr.mxu0 0.0
        %3081 = vmatpush1.msra.mxu0 0.0
        %3082 = vmatprep.subr.mxu0 0.0
        %3083 = vmatpush1.msra.mxu0 0.0
        %3084 = vmatprep.subr.mxu0 0.0
        %3085 = vmatpush1.msra.mxu0 0.0
        %3086 = vmatprep.subr.mxu0 0.0
        %3087 = vmatpush1.msra.mxu0 0.0
        %3088 = vmatprep.subr.mxu0 0.0
        %3089 = vmatpush1.msra.mxu0 0.0
        %3090 = vmatprep.subr.mxu0 0.0
        %3091 = vmatpush1.msra.mxu0 0.0
        %3092 = vmatprep.subr.mxu0 0.0
        %3093 = vmatpush1.msra.mxu0 0.0
        %3094 = vmatprep.subr.mxu0 0.0
        %3095 = vmatpush1.msra.mxu0 0.0
        %3096 = vmatprep.subr.mxu0 0.0
        %3097 = vmatpush1.msra.mxu0 0.0
        %3098 = vmatprep.mubr.f32.mxu0 0.0
        %v3099 = vand.u32 %v2951, 4294901760
        %3100 = vmatmul.mubr.f32.gmra.mrb[0].mxu0 %v3099
        %v3101 = vpop.f32.mrb[0].mxu0
        %v3102 = vadd.f32 %v3026, %v3101
        %v3103 = vpop.f32.mrb[0].mxu0
        %3104 = vdwg.mxu0
        %3105 = vmatprep.subr.mxu0 0.0
        %v3106 = vand.u32 %v2948, 4294901760
        %v3107 = vsub.f32 %v2948, %v3106
        %3108 = vmatpush1.msra.mxu0 %v3107
        %3109 = vmatprep.subr.mxu0 0.0
        %3110 = vmatpush1.msra.mxu0 0.0
        %3111 = vmatprep.subr.mxu0 0.0
        %3112 = vmatpush1.msra.mxu0 0.0
        %3113 = vmatprep.subr.mxu0 0.0
        %3114 = vmatpush1.msra.mxu0 0.0
        %3115 = vmatprep.subr.mxu0 0.0
        %3116 = vmatpush1.msra.mxu0 0.0
        %3117 = vmatprep.subr.mxu0 0.0
        %3118 = vmatpush1.msra.mxu0 0.0
        %3119 = vmatprep.subr.mxu0 0.0
        %3120 = vmatpush1.msra.mxu0 0.0
        %3121 = vmatprep.subr.mxu0 0.0
        %3122 = vmatpush1.msra.mxu0 0.0
        %3123 = vmatprep.subr.mxu0 0.0
        %3124 = vmatpush1.msra.mxu0 0.0
        %3125 = vmatprep.subr.mxu0 0.0
        %3126 = vmatpush1.msra.mxu0 0.0
        %3127 = vmatprep.subr.mxu0 0.0
        %3128 = vmatpush1.msra.mxu0 0.0
        %3129 = vmatprep.subr.mxu0 0.0
        %3130 = vmatpush1.msra.mxu0 0.0
        %3131 = vmatprep.subr.mxu0 0.0
        %3132 = vmatpush1.msra.mxu0 0.0
        %3133 = vmatprep.subr.mxu0 0.0
        %3134 = vmatpush1.msra.mxu0 0.0
        %3135 = vmatprep.subr.mxu0 0.0
        %3136 = vmatpush1.msra.mxu0 0.0
        %3137 = vmatprep.subr.mxu0 0.0
        %3138 = vmatpush1.msra.mxu0 0.0
        %3139 = vmatprep.subr.mxu0 0.0
        %3140 = vmatpush1.msra.mxu0 0.0
        %3141 = vmatprep.subr.mxu0 0.0
        %3142 = vmatpush1.msra.mxu0 0.0
        %3143 = vmatprep.subr.mxu0 0.0
        %3144 = vmatpush1.msra.mxu0 0.0
        %3145 = vmatprep.subr.mxu0 0.0
        %3146 = vmatpush1.msra.mxu0 0.0
        %3147 = vmatprep.subr.mxu0 0.0
        %3148 = vmatpush1.msra.mxu0 0.0
        %3149 = vmatprep.subr.mxu0 0.0
        %3150 = vmatpush1.msra.mxu0 0.0
        %3151 = vmatprep.subr.mxu0 0.0
        %3152 = vmatpush1.msra.mxu0 0.0
        %3153 = vmatprep.subr.mxu0 0.0
        %3154 = vmatpush1.msra.mxu0 0.0
        %3155 = vmatprep.subr.mxu0 0.0
        %3156 = vmatpush1.msra.mxu0 0.0
        %3157 = vmatprep.subr.mxu0 0.0
        %3158 = vmatpush1.msra.mxu0 0.0
        %3159 = vmatprep.subr.mxu0 0.0
        %3160 = vmatpush1.msra.mxu0 0.0
        %3161 = vmatprep.subr.mxu0 0.0
        %3162 = vmatpush1.msra.mxu0 0.0
        %3163 = vmatprep.subr.mxu0 0.0
        %3164 = vmatpush1.msra.mxu0 0.0
        %3165 = vmatprep.subr.mxu0 0.0
        %3166 = vmatpush1.msra.mxu0 0.0
        %3167 = vmatprep.subr.mxu0 0.0
        %3168 = vmatpush1.msra.mxu0 0.0
        %3169 = vmatprep.subr.mxu0 0.0
        %3170 = vmatpush1.msra.mxu0 0.0
        %3171 = vmatprep.mubr.f32.mxu0 0.0
        %v3172 = vand.u32 %v2951, 4294901760
        %v3173 = vsub.f32 %v2951, %v3172
        %3174 = vmatmul.mubr.f32.gmra.mrb[0].mxu0 %v3173
        %v3175 = vpop.f32.mrb[0].mxu0
        %v3176 = vadd.f32 %v3102, %v3175
        %v3177 = vpop.f32.mrb[0].mxu0
        %3178 = vdwg.mxu0
        %3179 = vmatprep.subr.mxu0 0.0
        %v3180 = vand.u32 %v2948, 4294901760
        %3181 = vmatpush1.msra.mxu0 %v3180
        %3182 = vmatprep.subr.mxu0 0.0
        %3183 = vmatpush1.msra.mxu0 0.0
        %3184 = vmatprep.subr.mxu0 0.0
        %3185 = vmatpush1.msra.mxu0 0.0
        %3186 = vmatprep.subr.mxu0 0.0
        %3187 = vmatpush1.msra.mxu0 0.0
        %3188 = vmatprep.subr.mxu0 0.0
        %3189 = vmatpush1.msra.mxu0 0.0
        %3190 = vmatprep.subr.mxu0 0.0
        %3191 = vmatpush1.msra.mxu0 0.0
        %3192 = vmatprep.subr.mxu0 0.0
        %3193 = vmatpush1.msra.mxu0 0.0
        %3194 = vmatprep.subr.mxu0 0.0
        %3195 = vmatpush1.msra.mxu0 0.0
        %3196 = vmatprep.subr.mxu0 0.0
        %3197 = vmatpush1.msra.mxu0 0.0
        %3198 = vmatprep.subr.mxu0 0.0
        %3199 = vmatpush1.msra.mxu0 0.0
        %3200 = vmatprep.subr.mxu0 0.0
        %3201 = vmatpush1.msra.mxu0 0.0
        %3202 = vmatprep.subr.mxu0 0.0
        %3203 = vmatpush1.msra.mxu0 0.0
        %3204 = vmatprep.subr.mxu0 0.0
        %3205 = vmatpush1.msra.mxu0 0.0
        %3206 = vmatprep.subr.mxu0 0.0
        %3207 = vmatpush1.msra.mxu0 0.0
        %3208 = vmatprep.subr.mxu0 0.0
        %3209 = vmatpush1.msra.mxu0 0.0
        %3210 = vmatprep.subr.mxu0 0.0
        %3211 = vmatpush1.msra.mxu0 0.0
        %3212 = vmatprep.subr.mxu0 0.0
        %3213 = vmatpush1.msra.mxu0 0.0
        %3214 = vmatprep.subr.mxu0 0.0
        %3215 = vmatpush1.msra.mxu0 0.0
        %3216 = vmatprep.subr.mxu0 0.0
        %3217 = vmatpush1.msra.mxu0 0.0
        %3218 = vmatprep.subr.mxu0 0.0
        %3219 = vmatpush1.msra.mxu0 0.0
        %3220 = vmatprep.subr.mxu0 0.0
        %3221 = vmatpush1.msra.mxu0 0.0
        %3222 = vmatprep.subr.mxu0 0.0
        %3223 = vmatpush1.msra.mxu0 0.0
        %3224 = vmatprep.subr.mxu0 0.0
        %3225 = vmatpush1.msra.mxu0 0.0
        %3226 = vmatprep.subr.mxu0 0.0
        %3227 = vmatpush1.msra.mxu0 0.0
        %3228 = vmatprep.subr.mxu0 0.0
        %3229 = vmatpush1.msra.mxu0 0.0
        %3230 = vmatprep.subr.mxu0 0.0
        %3231 = vmatpush1.msra.mxu0 0.0
        %3232 = vmatprep.subr.mxu0 0.0
        %3233 = vmatpush1.msra.mxu0 0.0
        %3234 = vmatprep.subr.mxu0 0.0
        %3235 = vmatpush1.msra.mxu0 0.0
        %3236 = vmatprep.subr.mxu0 0.0
        %3237 = vmatpush1.msra.mxu0 0.0
        %3238 = vmatprep.subr.mxu0 0.0
        %3239 = vmatpush1.msra.mxu0 0.0
        %3240 = vmatprep.subr.mxu0 0.0
        %3241 = vmatpush1.msra.mxu0 0.0
        %3242 = vmatprep.subr.mxu0 0.0
        %3243 = vmatpush1.msra.mxu0 0.0
        %3244 = vmatprep.mubr.f32.mxu0 0.0
        %v3245 = vand.u32 %v2951, 4294901760
        %v3246 = vsub.f32 %v2951, %v3245
        %v3247 = vand.u32 %v3246, 4294901760
        %3248 = vmatmul.mubr.f32.gmra.mrb[0].mxu0 %v3247
        %v3249 = vpop.f32.mrb[0].mxu0
        %v3250 = vadd.f32 %v3176, %v3249
        %v3251 = vpop.f32.mrb[0].mxu0
        %3252 = vdwg.mxu0
        %3253 = vmatprep.subr.mxu0 0.0
        %v3254 = vand.u32 %v2948, 4294901760
        %v3255 = vsub.f32 %v2948, %v3254
        %v3256 = vand.u32 %v3255, 4294901760
        %3257 = vmatpush1.msra.mxu0 %v3256
        %3258 = vmatprep.subr.mxu0 0.0
        %3259 = vmatpush1.msra.mxu0 0.0
        %3260 = vmatprep.subr.mxu0 0.0
        %3261 = vmatpush1.msra.mxu0 0.0
        %3262 = vmatprep.subr.mxu0 0.0
        %3263 = vmatpush1.msra.mxu0 0.0
        %3264 = vmatprep.subr.mxu0 0.0
        %3265 = vmatpush1.msra.mxu0 0.0
        %3266 = vmatprep.subr.mxu0 0.0
        %3267 = vmatpush1.msra.mxu0 0.0
        %3268 = vmatprep.subr.mxu0 0.0
        %3269 = vmatpush1.msra.mxu0 0.0
        %3270 = vmatprep.subr.mxu0 0.0
        %3271 = vmatpush1.msra.mxu0 0.0
        %3272 = vmatprep.subr.mxu0 0.0
        %3273 = vmatpush1.msra.mxu0 0.0
        %3274 = vmatprep.subr.mxu0 0.0
        %3275 = vmatpush1.msra.mxu0 0.0
        %3276 = vmatprep.subr.mxu0 0.0
        %3277 = vmatpush1.msra.mxu0 0.0
        %3278 = vmatprep.subr.mxu0 0.0
        %3279 = vmatpush1.msra.mxu0 0.0
        %3280 = vmatprep.subr.mxu0 0.0
        %3281 = vmatpush1.msra.mxu0 0.0
        %3282 = vmatprep.subr.mxu0 0.0
        %3283 = vmatpush1.msra.mxu0 0.0
        %3284 = vmatprep.subr.mxu0 0.0
        %3285 = vmatpush1.msra.mxu0 0.0
        %3286 = vmatprep.subr.mxu0 0.0
        %3287 = vmatpush1.msra.mxu0 0.0
        %3288 = vmatprep.subr.mxu0 0.0
        %3289 = vmatpush1.msra.mxu0 0.0
        %3290 = vmatprep.subr.mxu0 0.0
        %3291 = vmatpush1.msra.mxu0 0.0
        %3292 = vmatprep.subr.mxu0 0.0
        %3293 = vmatpush1.msra.mxu0 0.0
        %3294 = vmatprep.subr.mxu0 0.0
        %3295 = vmatpush1.msra.mxu0 0.0
        %3296 = vmatprep.subr.mxu0 0.0
        %3297 = vmatpush1.msra.mxu0 0.0
        %3298 = vmatprep.subr.mxu0 0.0
        %3299 = vmatpush1.msra.mxu0 0.0
        %3300 = vmatprep.subr.mxu0 0.0
        %3301 = vmatpush1.msra.mxu0 0.0
        %3302 = vmatprep.subr.mxu0 0.0
        %3303 = vmatpush1.msra.mxu0 0.0
        %3304 = vmatprep.subr.mxu0 0.0
        %3305 = vmatpush1.msra.mxu0 0.0
        %3306 = vmatprep.subr.mxu0 0.0
        %3307 = vmatpush1.msra.mxu0 0.0
        %3308 = vmatprep.subr.mxu0 0.0
        %3309 = vmatpush1.msra.mxu0 0.0
        %3310 = vmatprep.subr.mxu0 0.0
        %3311 = vmatpush1.msra.mxu0 0.0
        %3312 = vmatprep.subr.mxu0 0.0
        %3313 = vmatpush1.msra.mxu0 0.0
        %3314 = vmatprep.subr.mxu0 0.0
        %3315 = vmatpush1.msra.mxu0 0.0
        %3316 = vmatprep.subr.mxu0 0.0
        %3317 = vmatpush1.msra.mxu0 0.0
        %3318 = vmatprep.subr.mxu0 0.0
        %3319 = vmatpush1.msra.mxu0 0.0
        %3320 = vmatprep.mubr.f32.mxu0 0.0
        %v3321 = vand.u32 %v2951, 4294901760
        %3322 = vmatmul.mubr.f32.gmra.mrb[0].mxu0 %v3321
        %v3323 = vpop.f32.mrb[0].mxu0
        %v3324 = vadd.f32 %v3250, %v3323
        %v3325 = vpop.f32.mrb[0].mxu0
        %3326 = vdwg.mxu0
        %3327 = vmatprep.subr.mxu0 0.0
        %v3328 = vand.u32 %v2948, 4294901760
        %3329 = vmatpush1.msra.mxu0 %v3328
        %3330 = vmatprep.subr.mxu0 0.0
        %3331 = vmatpush1.msra.mxu0 0.0
        %3332 = vmatprep.subr.mxu0 0.0
        %3333 = vmatpush1.msra.mxu0 0.0
        %3334 = vmatprep.subr.mxu0 0.0
        %3335 = vmatpush1.msra.mxu0 0.0
        %3336 = vmatprep.subr.mxu0 0.0
        %3337 = vmatpush1.msra.mxu0 0.0
        %3338 = vmatprep.subr.mxu0 0.0
        %3339 = vmatpush1.msra.mxu0 0.0
        %3340 = vmatprep.subr.mxu0 0.0
        %3341 = vmatpush1.msra.mxu0 0.0
        %3342 = vmatprep.subr.mxu0 0.0
        %3343 = vmatpush1.msra.mxu0 0.0
        %3344 = vmatprep.subr.mxu0 0.0
        %3345 = vmatpush1.msra.mxu0 0.0
        %3346 = vmatprep.subr.mxu0 0.0
        %3347 = vmatpush1.msra.mxu0 0.0
        %3348 = vmatprep.subr.mxu0 0.0
        %3349 = vmatpush1.msra.mxu0 0.0
        %3350 = vmatprep.subr.mxu0 0.0
        %3351 = vmatpush1.msra.mxu0 0.0
        %3352 = vmatprep.subr.mxu0 0.0
        %3353 = vmatpush1.msra.mxu0 0.0
        %3354 = vmatprep.subr.mxu0 0.0
        %3355 = vmatpush1.msra.mxu0 0.0
        %3356 = vmatprep.subr.mxu0 0.0
        %3357 = vmatpush1.msra.mxu0 0.0
        %3358 = vmatprep.subr.mxu0 0.0
        %3359 = vmatpush1.msra.mxu0 0.0
        %3360 = vmatprep.subr.mxu0 0.0
        %3361 = vmatpush1.msra.mxu0 0.0
        %3362 = vmatprep.subr.mxu0 0.0
        %3363 = vmatpush1.msra.mxu0 0.0
        %3364 = vmatprep.subr.mxu0 0.0
        %3365 = vmatpush1.msra.mxu0 0.0
        %3366 = vmatprep.subr.mxu0 0.0
        %3367 = vmatpush1.msra.mxu0 0.0
        %3368 = vmatprep.subr.mxu0 0.0
        %3369 = vmatpush1.msra.mxu0 0.0
        %3370 = vmatprep.subr.mxu0 0.0
        %3371 = vmatpush1.msra.mxu0 0.0
        %3372 = vmatprep.subr.mxu0 0.0
        %3373 = vmatpush1.msra.mxu0 0.0
        %3374 = vmatprep.subr.mxu0 0.0
        %3375 = vmatpush1.msra.mxu0 0.0
        %3376 = vmatprep.subr.mxu0 0.0
        %3377 = vmatpush1.msra.mxu0 0.0
        %3378 = vmatprep.subr.mxu0 0.0
        %3379 = vmatpush1.msra.mxu0 0.0
        %3380 = vmatprep.subr.mxu0 0.0
        %3381 = vmatpush1.msra.mxu0 0.0
        %3382 = vmatprep.subr.mxu0 0.0
        %3383 = vmatpush1.msra.mxu0 0.0
        %3384 = vmatprep.subr.mxu0 0.0
        %3385 = vmatpush1.msra.mxu0 0.0
        %3386 = vmatprep.subr.mxu0 0.0
        %3387 = vmatpush1.msra.mxu0 0.0
        %3388 = vmatprep.subr.mxu0 0.0
        %3389 = vmatpush1.msra.mxu0 0.0
        %3390 = vmatprep.subr.mxu0 0.0
        %3391 = vmatpush1.msra.mxu0 0.0
        %3392 = vmatprep.mubr.f32.mxu0 0.0
        %v3393 = vand.u32 %v2951, 4294901760
        %3394 = vmatmul.mubr.f32.gmra.mrb[0].mxu0 %v3393
        %v3395 = vpop.f32.mrb[0].mxu0
        %v3396 = vadd.f32 %v3324, %v3395
        %v3397 = vpop.f32.mrb[0].mxu0
        %3398 = vdwg.mxu0
        %3400 = vrot.lane.b32.xlu0 %v3396, 8
        %v3401 = vpop.permute.xlu0 %3400
        %vm3403 = vcmask 130112
        %3404 = vst.msk [vmem:[#allocation2] sm:$0xff] %vm3403, %v3401
        %3405 = vrot.lane.b32.xlu0 %v1056, 112
        %v3406 = vpop.permute.xlu0 %3405
        %3407 = vrot.lane.b32.xlu0 %v1553, 112
        %v3408 = vpop.permute.xlu0 %3407
        %v3409 = vsel %vm1562, %v3406, 0
        %v3411 = vsel %vm1562, %v3408, 0
        %3413 = vmatprep.subr.mxu0 0.0
        %v3414 = vand.u32 %v3411, 4294901760
        %3415 = vmatpush1.xpose.msra.mxu0 %v3414
        %3416 = vmatprep.subr.mxu0 0.0
        %3417 = vmatpush1.xpose.msra.mxu0 0.0
        %3418 = vmatprep.subr.mxu0 0.0
        %3419 = vmatpush1.xpose.msra.mxu0 0.0
        %3420 = vmatprep.subr.mxu0 0.0
        %3421 = vmatpush1.xpose.msra.mxu0 0.0
        %3422 = vmatprep.subr.mxu0 0.0
        %3423 = vmatpush1.xpose.msra.mxu0 0.0
        %3424 = vmatprep.subr.mxu0 0.0
        %3425 = vmatpush1.xpose.msra.mxu0 0.0
        %3426 = vmatprep.subr.mxu0 0.0
        %3427 = vmatpush1.xpose.msra.mxu0 0.0
        %3428 = vmatprep.subr.mxu0 0.0
        %3429 = vmatpush1.xpose.msra.mxu0 0.0
        %3430 = vmatprep.subr.mxu0 0.0
        %3431 = vmatpush1.xpose.msra.mxu0 0.0
        %3432 = vmatprep.subr.mxu0 0.0
        %3433 = vmatpush1.xpose.msra.mxu0 0.0
        %3434 = vmatprep.subr.mxu0 0.0
        %3435 = vmatpush1.xpose.msra.mxu0 0.0
        %3436 = vmatprep.subr.mxu0 0.0
        %3437 = vmatpush1.xpose.msra.mxu0 0.0
        %3438 = vmatprep.subr.mxu0 0.0
        %3439 = vmatpush1.xpose.msra.mxu0 0.0
        %3440 = vmatprep.subr.mxu0 0.0
        %3441 = vmatpush1.xpose.msra.mxu0 0.0
        %3442 = vmatprep.subr.mxu0 0.0
        %3443 = vmatpush1.xpose.msra.mxu0 0.0
        %3444 = vmatprep.subr.mxu0 0.0
        %3445 = vmatpush1.xpose.msra.mxu0 0.0
        %3446 = vmatprep.subr.mxu0 0.0
        %3447 = vmatpush1.xpose.msra.mxu0 0.0
        %3448 = vmatprep.subr.mxu0 0.0
        %3449 = vmatpush1.xpose.msra.mxu0 0.0
        %3450 = vmatprep.subr.mxu0 0.0
        %3451 = vmatpush1.xpose.msra.mxu0 0.0
        %3452 = vmatprep.subr.mxu0 0.0
        %3453 = vmatpush1.xpose.msra.mxu0 0.0
        %3454 = vmatprep.subr.mxu0 0.0
        %3455 = vmatpush1.xpose.msra.mxu0 0.0
        %3456 = vmatprep.subr.mxu0 0.0
        %3457 = vmatpush1.xpose.msra.mxu0 0.0
        %3458 = vmatprep.subr.mxu0 0.0
        %3459 = vmatpush1.xpose.msra.mxu0 0.0
        %3460 = vmatprep.subr.mxu0 0.0
        %3461 = vmatpush1.xpose.msra.mxu0 0.0
        %3462 = vmatprep.subr.mxu0 0.0
        %3463 = vmatpush1.xpose.msra.mxu0 0.0
        %3464 = vmatprep.subr.mxu0 0.0
        %3465 = vmatpush1.xpose.msra.mxu0 0.0
        %3466 = vmatprep.subr.mxu0 0.0
        %3467 = vmatpush1.xpose.msra.mxu0 0.0
        %3468 = vmatprep.subr.mxu0 0.0
        %3469 = vmatpush1.xpose.msra.mxu0 0.0
        %3470 = vmatprep.subr.mxu0 0.0
        %3471 = vmatpush1.xpose.msra.mxu0 0.0
        %3472 = vmatprep.subr.mxu0 0.0
        %3473 = vmatpush1.xpose.msra.mxu0 0.0
        %3474 = vmatprep.subr.mxu0 0.0
        %3475 = vmatpush1.xpose.msra.mxu0 0.0
        %3476 = vmatprep.subr.mxu0 0.0
        %3477 = vmatpush1.xpose.msra.mxu0 0.0
        %3478 = vmatprep.mubr.f32.mxu0 0.0
        %v3479 = vand.u32 %v3409, 4294901760
        %v3480 = vsub.f32 %v3409, %v3479
        %v3481 = vand.u32 %v3480, 4294901760
        %v3482 = vsub.f32 %v3480, %v3481
        %v3483 = vand.u32 %v3482, 4294901760
        %3484 = vmatmul.mubr.f32.gmra.mrb[0].mxu0 %v3483
        %v3485 = vpop.f32.mrb[0].mxu0
        %v3486 = vadd.f32 %v1560, %v3485
        %v3487 = vpop.f32.mrb[0].mxu0
        %3488 = vdwg.mxu0
        %3489 = vmatprep.subr.mxu0 0.0
        %v3490 = vand.u32 %v3411, 4294901760
        %v3491 = vsub.f32 %v3411, %v3490
        %v3492 = vand.u32 %v3491, 4294901760
        %v3493 = vsub.f32 %v3491, %v3492
        %v3494 = vand.u32 %v3493, 4294901760
        %3495 = vmatpush1.xpose.msra.mxu0 %v3494
        %3496 = vmatprep.subr.mxu0 0.0
        %3497 = vmatpush1.xpose.msra.mxu0 0.0
        %3498 = vmatprep.subr.mxu0 0.0
        %3499 = vmatpush1.xpose.msra.mxu0 0.0
        %3500 = vmatprep.subr.mxu0 0.0
        %3501 = vmatpush1.xpose.msra.mxu0 0.0
        %3502 = vmatprep.subr.mxu0 0.0
        %3503 = vmatpush1.xpose.msra.mxu0 0.0
        %3504 = vmatprep.subr.mxu0 0.0
        %3505 = vmatpush1.xpose.msra.mxu0 0.0
        %3506 = vmatprep.subr.mxu0 0.0
        %3507 = vmatpush1.xpose.msra.mxu0 0.0
        %3508 = vmatprep.subr.mxu0 0.0
        %3509 = vmatpush1.xpose.msra.mxu0 0.0
        %3510 = vmatprep.subr.mxu0 0.0
        %3511 = vmatpush1.xpose.msra.mxu0 0.0
        %3512 = vmatprep.subr.mxu0 0.0
        %3513 = vmatpush1.xpose.msra.mxu0 0.0
        %3514 = vmatprep.subr.mxu0 0.0
        %3515 = vmatpush1.xpose.msra.mxu0 0.0
        %3516 = vmatprep.subr.mxu0 0.0
        %3517 = vmatpush1.xpose.msra.mxu0 0.0
        %3518 = vmatprep.subr.mxu0 0.0
        %3519 = vmatpush1.xpose.msra.mxu0 0.0
        %3520 = vmatprep.subr.mxu0 0.0
        %3521 = vmatpush1.xpose.msra.mxu0 0.0
        %3522 = vmatprep.subr.mxu0 0.0
        %3523 = vmatpush1.xpose.msra.mxu0 0.0
        %3524 = vmatprep.subr.mxu0 0.0
        %3525 = vmatpush1.xpose.msra.mxu0 0.0
        %3526 = vmatprep.subr.mxu0 0.0
        %3527 = vmatpush1.xpose.msra.mxu0 0.0
        %3528 = vmatprep.subr.mxu0 0.0
        %3529 = vmatpush1.xpose.msra.mxu0 0.0
        %3530 = vmatprep.subr.mxu0 0.0
        %3531 = vmatpush1.xpose.msra.mxu0 0.0
        %3532 = vmatprep.subr.mxu0 0.0
        %3533 = vmatpush1.xpose.msra.mxu0 0.0
        %3534 = vmatprep.subr.mxu0 0.0
        %3535 = vmatpush1.xpose.msra.mxu0 0.0
        %3536 = vmatprep.subr.mxu0 0.0
        %3537 = vmatpush1.xpose.msra.mxu0 0.0
        %3538 = vmatprep.subr.mxu0 0.0
        %3539 = vmatpush1.xpose.msra.mxu0 0.0
        %3540 = vmatprep.subr.mxu0 0.0
        %3541 = vmatpush1.xpose.msra.mxu0 0.0
        %3542 = vmatprep.subr.mxu0 0.0
        %3543 = vmatpush1.xpose.msra.mxu0 0.0
        %3544 = vmatprep.subr.mxu0 0.0
        %3545 = vmatpush1.xpose.msra.mxu0 0.0
        %3546 = vmatprep.subr.mxu0 0.0
        %3547 = vmatpush1.xpose.msra.mxu0 0.0
        %3548 = vmatprep.subr.mxu0 0.0
        %3549 = vmatpush1.xpose.msra.mxu0 0.0
        %3550 = vmatprep.subr.mxu0 0.0
        %3551 = vmatpush1.xpose.msra.mxu0 0.0
        %3552 = vmatprep.subr.mxu0 0.0
        %3553 = vmatpush1.xpose.msra.mxu0 0.0
        %3554 = vmatprep.subr.mxu0 0.0
        %3555 = vmatpush1.xpose.msra.mxu0 0.0
        %3556 = vmatprep.subr.mxu0 0.0
        %3557 = vmatpush1.xpose.msra.mxu0 0.0
        %3558 = vmatprep.mubr.f32.mxu0 0.0
        %v3559 = vand.u32 %v3409, 4294901760
        %3560 = vmatmul.mubr.f32.gmra.mrb[0].mxu0 %v3559
        %v3561 = vpop.f32.mrb[0].mxu0
        %v3562 = vadd.f32 %v3486, %v3561
        %v3563 = vpop.f32.mrb[0].mxu0
        %3564 = vdwg.mxu0
        %3565 = vmatprep.subr.mxu0 0.0
        %v3566 = vand.u32 %v3411, 4294901760
        %v3567 = vsub.f32 %v3411, %v3566
        %3568 = vmatpush1.xpose.msra.mxu0 %v3567
        %3569 = vmatprep.subr.mxu0 0.0
        %3570 = vmatpush1.xpose.msra.mxu0 0.0
        %3571 = vmatprep.subr.mxu0 0.0
        %3572 = vmatpush1.xpose.msra.mxu0 0.0
        %3573 = vmatprep.subr.mxu0 0.0
        %3574 = vmatpush1.xpose.msra.mxu0 0.0
        %3575 = vmatprep.subr.mxu0 0.0
        %3576 = vmatpush1.xpose.msra.mxu0 0.0
        %3577 = vmatprep.subr.mxu0 0.0
        %3578 = vmatpush1.xpose.msra.mxu0 0.0
        %3579 = vmatprep.subr.mxu0 0.0
        %3580 = vmatpush1.xpose.msra.mxu0 0.0
        %3581 = vmatprep.subr.mxu0 0.0
        %3582 = vmatpush1.xpose.msra.mxu0 0.0
        %3583 = vmatprep.subr.mxu0 0.0
        %3584 = vmatpush1.xpose.msra.mxu0 0.0
        %3585 = vmatprep.subr.mxu0 0.0
        %3586 = vmatpush1.xpose.msra.mxu0 0.0
        %3587 = vmatprep.subr.mxu0 0.0
        %3588 = vmatpush1.xpose.msra.mxu0 0.0
        %3589 = vmatprep.subr.mxu0 0.0
        %3590 = vmatpush1.xpose.msra.mxu0 0.0
        %3591 = vmatprep.subr.mxu0 0.0
        %3592 = vmatpush1.xpose.msra.mxu0 0.0
        %3593 = vmatprep.subr.mxu0 0.0
        %3594 = vmatpush1.xpose.msra.mxu0 0.0
        %3595 = vmatprep.subr.mxu0 0.0
        %3596 = vmatpush1.xpose.msra.mxu0 0.0
        %3597 = vmatprep.subr.mxu0 0.0
        %3598 = vmatpush1.xpose.msra.mxu0 0.0
        %3599 = vmatprep.subr.mxu0 0.0
        %3600 = vmatpush1.xpose.msra.mxu0 0.0
        %3601 = vmatprep.subr.mxu0 0.0
        %3602 = vmatpush1.xpose.msra.mxu0 0.0
        %3603 = vmatprep.subr.mxu0 0.0
        %3604 = vmatpush1.xpose.msra.mxu0 0.0
        %3605 = vmatprep.subr.mxu0 0.0
        %3606 = vmatpush1.xpose.msra.mxu0 0.0
        %3607 = vmatprep.subr.mxu0 0.0
        %3608 = vmatpush1.xpose.msra.mxu0 0.0
        %3609 = vmatprep.subr.mxu0 0.0
        %3610 = vmatpush1.xpose.msra.mxu0 0.0
        %3611 = vmatprep.subr.mxu0 0.0
        %3612 = vmatpush1.xpose.msra.mxu0 0.0
        %3613 = vmatprep.subr.mxu0 0.0
        %3614 = vmatpush1.xpose.msra.mxu0 0.0
        %3615 = vmatprep.subr.mxu0 0.0
        %3616 = vmatpush1.xpose.msra.mxu0 0.0
        %3617 = vmatprep.subr.mxu0 0.0
        %3618 = vmatpush1.xpose.msra.mxu0 0.0
        %3619 = vmatprep.subr.mxu0 0.0
        %3620 = vmatpush1.xpose.msra.mxu0 0.0
        %3621 = vmatprep.subr.mxu0 0.0
        %3622 = vmatpush1.xpose.msra.mxu0 0.0
        %3623 = vmatprep.subr.mxu0 0.0
        %3624 = vmatpush1.xpose.msra.mxu0 0.0
        %3625 = vmatprep.subr.mxu0 0.0
        %3626 = vmatpush1.xpose.msra.mxu0 0.0
        %3627 = vmatprep.subr.mxu0 0.0
        %3628 = vmatpush1.xpose.msra.mxu0 0.0
        %3629 = vmatprep.subr.mxu0 0.0
        %3630 = vmatpush1.xpose.msra.mxu0 0.0
        %3631 = vmatprep.mubr.f32.mxu0 0.0
        %v3632 = vand.u32 %v3409, 4294901760
        %v3633 = vsub.f32 %v3409, %v3632
        %3634 = vmatmul.mubr.f32.gmra.mrb[0].mxu0 %v3633
        %v3635 = vpop.f32.mrb[0].mxu0
        %v3636 = vadd.f32 %v3562, %v3635
        %v3637 = vpop.f32.mrb[0].mxu0
        %3638 = vdwg.mxu0
        %3639 = vmatprep.subr.mxu0 0.0
        %v3640 = vand.u32 %v3411, 4294901760
        %3641 = vmatpush1.xpose.msra.mxu0 %v3640
        %3642 = vmatprep.subr.mxu0 0.0
        %3643 = vmatpush1.xpose.msra.mxu0 0.0
        %3644 = vmatprep.subr.mxu0 0.0
        %3645 = vmatpush1.xpose.msra.mxu0 0.0
        %3646 = vmatprep.subr.mxu0 0.0
        %3647 = vmatpush1.xpose.msra.mxu0 0.0
        %3648 = vmatprep.subr.mxu0 0.0
        %3649 = vmatpush1.xpose.msra.mxu0 0.0
        %3650 = vmatprep.subr.mxu0 0.0
        %3651 = vmatpush1.xpose.msra.mxu0 0.0
        %3652 = vmatprep.subr.mxu0 0.0
        %3653 = vmatpush1.xpose.msra.mxu0 0.0
        %3654 = vmatprep.subr.mxu0 0.0
        %3655 = vmatpush1.xpose.msra.mxu0 0.0
        %3656 = vmatprep.subr.mxu0 0.0
        %3657 = vmatpush1.xpose.msra.mxu0 0.0
        %3658 = vmatprep.subr.mxu0 0.0
        %3659 = vmatpush1.xpose.msra.mxu0 0.0
        %3660 = vmatprep.subr.mxu0 0.0
        %3661 = vmatpush1.xpose.msra.mxu0 0.0
        %3662 = vmatprep.subr.mxu0 0.0
        %3663 = vmatpush1.xpose.msra.mxu0 0.0
        %3664 = vmatprep.subr.mxu0 0.0
        %3665 = vmatpush1.xpose.msra.mxu0 0.0
        %3666 = vmatprep.subr.mxu0 0.0
        %3667 = vmatpush1.xpose.msra.mxu0 0.0
        %3668 = vmatprep.subr.mxu0 0.0
        %3669 = vmatpush1.xpose.msra.mxu0 0.0
        %3670 = vmatprep.subr.mxu0 0.0
        %3671 = vmatpush1.xpose.msra.mxu0 0.0
        %3672 = vmatprep.subr.mxu0 0.0
        %3673 = vmatpush1.xpose.msra.mxu0 0.0
        %3674 = vmatprep.subr.mxu0 0.0
        %3675 = vmatpush1.xpose.msra.mxu0 0.0
        %3676 = vmatprep.subr.mxu0 0.0
        %3677 = vmatpush1.xpose.msra.mxu0 0.0
        %3678 = vmatprep.subr.mxu0 0.0
        %3679 = vmatpush1.xpose.msra.mxu0 0.0
        %3680 = vmatprep.subr.mxu0 0.0
        %3681 = vmatpush1.xpose.msra.mxu0 0.0
        %3682 = vmatprep.subr.mxu0 0.0
        %3683 = vmatpush1.xpose.msra.mxu0 0.0
        %3684 = vmatprep.subr.mxu0 0.0
        %3685 = vmatpush1.xpose.msra.mxu0 0.0
        %3686 = vmatprep.subr.mxu0 0.0
        %3687 = vmatpush1.xpose.msra.mxu0 0.0
        %3688 = vmatprep.subr.mxu0 0.0
        %3689 = vmatpush1.xpose.msra.mxu0 0.0
        %3690 = vmatprep.subr.mxu0 0.0
        %3691 = vmatpush1.xpose.msra.mxu0 0.0
        %3692 = vmatprep.subr.mxu0 0.0
        %3693 = vmatpush1.xpose.msra.mxu0 0.0
        %3694 = vmatprep.subr.mxu0 0.0
        %3695 = vmatpush1.xpose.msra.mxu0 0.0
        %3696 = vmatprep.subr.mxu0 0.0
        %3697 = vmatpush1.xpose.msra.mxu0 0.0
        %3698 = vmatprep.subr.mxu0 0.0
        %3699 = vmatpush1.xpose.msra.mxu0 0.0
        %3700 = vmatprep.subr.mxu0 0.0
        %3701 = vmatpush1.xpose.msra.mxu0 0.0
        %3702 = vmatprep.subr.mxu0 0.0
        %3703 = vmatpush1.xpose.msra.mxu0 0.0
        %3704 = vmatprep.mubr.f32.mxu0 0.0
        %v3705 = vand.u32 %v3409, 4294901760
        %v3706 = vsub.f32 %v3409, %v3705
        %v3707 = vand.u32 %v3706, 4294901760
        %3708 = vmatmul.mubr.f32.gmra.mrb[0].mxu0 %v3707
        %v3709 = vpop.f32.mrb[0].mxu0
        %v3710 = vadd.f32 %v3636, %v3709
        %v3711 = vpop.f32.mrb[0].mxu0
        %3712 = vdwg.mxu0
        %3713 = vmatprep.subr.mxu0 0.0
        %v3714 = vand.u32 %v3411, 4294901760
        %v3715 = vsub.f32 %v3411, %v3714
        %v3716 = vand.u32 %v3715, 4294901760
        %3717 = vmatpush1.xpose.msra.mxu0 %v3716
        %3718 = vmatprep.subr.mxu0 0.0
        %3719 = vmatpush1.xpose.msra.mxu0 0.0
        %3720 = vmatprep.subr.mxu0 0.0
        %3721 = vmatpush1.xpose.msra.mxu0 0.0
        %3722 = vmatprep.subr.mxu0 0.0
        %3723 = vmatpush1.xpose.msra.mxu0 0.0
        %3724 = vmatprep.subr.mxu0 0.0
        %3725 = vmatpush1.xpose.msra.mxu0 0.0
        %3726 = vmatprep.subr.mxu0 0.0
        %3727 = vmatpush1.xpose.msra.mxu0 0.0
        %3728 = vmatprep.subr.mxu0 0.0
        %3729 = vmatpush1.xpose.msra.mxu0 0.0
        %3730 = vmatprep.subr.mxu0 0.0
        %3731 = vmatpush1.xpose.msra.mxu0 0.0
        %3732 = vmatprep.subr.mxu0 0.0
        %3733 = vmatpush1.xpose.msra.mxu0 0.0
        %3734 = vmatprep.subr.mxu0 0.0
        %3735 = vmatpush1.xpose.msra.mxu0 0.0
        %3736 = vmatprep.subr.mxu0 0.0
        %3737 = vmatpush1.xpose.msra.mxu0 0.0
        %3738 = vmatprep.subr.mxu0 0.0
        %3739 = vmatpush1.xpose.msra.mxu0 0.0
        %3740 = vmatprep.subr.mxu0 0.0
        %3741 = vmatpush1.xpose.msra.mxu0 0.0
        %3742 = vmatprep.subr.mxu0 0.0
        %3743 = vmatpush1.xpose.msra.mxu0 0.0
        %3744 = vmatprep.subr.mxu0 0.0
        %3745 = vmatpush1.xpose.msra.mxu0 0.0
        %3746 = vmatprep.subr.mxu0 0.0
        %3747 = vmatpush1.xpose.msra.mxu0 0.0
        %3748 = vmatprep.subr.mxu0 0.0
        %3749 = vmatpush1.xpose.msra.mxu0 0.0
        %3750 = vmatprep.subr.mxu0 0.0
        %3751 = vmatpush1.xpose.msra.mxu0 0.0
        %3752 = vmatprep.subr.mxu0 0.0
        %3753 = vmatpush1.xpose.msra.mxu0 0.0
        %3754 = vmatprep.subr.mxu0 0.0
        %3755 = vmatpush1.xpose.msra.mxu0 0.0
        %3756 = vmatprep.subr.mxu0 0.0
        %3757 = vmatpush1.xpose.msra.mxu0 0.0
        %3758 = vmatprep.subr.mxu0 0.0
        %3759 = vmatpush1.xpose.msra.mxu0 0.0
        %3760 = vmatprep.subr.mxu0 0.0
        %3761 = vmatpush1.xpose.msra.mxu0 0.0
        %3762 = vmatprep.subr.mxu0 0.0
        %3763 = vmatpush1.xpose.msra.mxu0 0.0
        %3764 = vmatprep.subr.mxu0 0.0
        %3765 = vmatpush1.xpose.msra.mxu0 0.0
        %3766 = vmatprep.subr.mxu0 0.0
        %3767 = vmatpush1.xpose.msra.mxu0 0.0
        %3768 = vmatprep.subr.mxu0 0.0
        %3769 = vmatpush1.xpose.msra.mxu0 0.0
        %3770 = vmatprep.subr.mxu0 0.0
        %3771 = vmatpush1.xpose.msra.mxu0 0.0
        %3772 = vmatprep.subr.mxu0 0.0
        %3773 = vmatpush1.xpose.msra.mxu0 0.0
        %3774 = vmatprep.subr.mxu0 0.0
        %3775 = vmatpush1.xpose.msra.mxu0 0.0
        %3776 = vmatprep.subr.mxu0 0.0
        %3777 = vmatpush1.xpose.msra.mxu0 0.0
        %3778 = vmatprep.subr.mxu0 0.0
        %3779 = vmatpush1.xpose.msra.mxu0 0.0
        %3780 = vmatprep.mubr.f32.mxu0 0.0
        %v3781 = vand.u32 %v3409, 4294901760
        %3782 = vmatmul.mubr.f32.gmra.mrb[0].mxu0 %v3781
        %v3783 = vpop.f32.mrb[0].mxu0
        %v3784 = vadd.f32 %v3710, %v3783
        %v3785 = vpop.f32.mrb[0].mxu0
        %3786 = vdwg.mxu0
        %3787 = vmatprep.subr.mxu0 0.0
        %v3788 = vand.u32 %v3411, 4294901760
        %3789 = vmatpush1.xpose.msra.mxu0 %v3788
        %3790 = vmatprep.subr.mxu0 0.0
        %3791 = vmatpush1.xpose.msra.mxu0 0.0
        %3792 = vmatprep.subr.mxu0 0.0
        %3793 = vmatpush1.xpose.msra.mxu0 0.0
        %3794 = vmatprep.subr.mxu0 0.0
        %3795 = vmatpush1.xpose.msra.mxu0 0.0
        %3796 = vmatprep.subr.mxu0 0.0
        %3797 = vmatpush1.xpose.msra.mxu0 0.0
        %3798 = vmatprep.subr.mxu0 0.0
        %3799 = vmatpush1.xpose.msra.mxu0 0.0
        %3800 = vmatprep.subr.mxu0 0.0
        %3801 = vmatpush1.xpose.msra.mxu0 0.0
        %3802 = vmatprep.subr.mxu0 0.0
        %3803 = vmatpush1.xpose.msra.mxu0 0.0
        %3804 = vmatprep.subr.mxu0 0.0
        %3805 = vmatpush1.xpose.msra.mxu0 0.0
        %3806 = vmatprep.subr.mxu0 0.0
        %3807 = vmatpush1.xpose.msra.mxu0 0.0
        %3808 = vmatprep.subr.mxu0 0.0
        %3809 = vmatpush1.xpose.msra.mxu0 0.0
        %3810 = vmatprep.subr.mxu0 0.0
        %3811 = vmatpush1.xpose.msra.mxu0 0.0
        %3812 = vmatprep.subr.mxu0 0.0
        %3813 = vmatpush1.xpose.msra.mxu0 0.0
        %3814 = vmatprep.subr.mxu0 0.0
        %3815 = vmatpush1.xpose.msra.mxu0 0.0
        %3816 = vmatprep.subr.mxu0 0.0
        %3817 = vmatpush1.xpose.msra.mxu0 0.0
        %3818 = vmatprep.subr.mxu0 0.0
        %3819 = vmatpush1.xpose.msra.mxu0 0.0
        %3820 = vmatprep.subr.mxu0 0.0
        %3821 = vmatpush1.xpose.msra.mxu0 0.0
        %3822 = vmatprep.subr.mxu0 0.0
        %3823 = vmatpush1.xpose.msra.mxu0 0.0
        %3824 = vmatprep.subr.mxu0 0.0
        %3825 = vmatpush1.xpose.msra.mxu0 0.0
        %3826 = vmatprep.subr.mxu0 0.0
        %3827 = vmatpush1.xpose.msra.mxu0 0.0
        %3828 = vmatprep.subr.mxu0 0.0
        %3829 = vmatpush1.xpose.msra.mxu0 0.0
        %3830 = vmatprep.subr.mxu0 0.0
        %3831 = vmatpush1.xpose.msra.mxu0 0.0
        %3832 = vmatprep.subr.mxu0 0.0
        %3833 = vmatpush1.xpose.msra.mxu0 0.0
        %3834 = vmatprep.subr.mxu0 0.0
        %3835 = vmatpush1.xpose.msra.mxu0 0.0
        %3836 = vmatprep.subr.mxu0 0.0
        %3837 = vmatpush1.xpose.msra.mxu0 0.0
        %3838 = vmatprep.subr.mxu0 0.0
        %3839 = vmatpush1.xpose.msra.mxu0 0.0
        %3840 = vmatprep.subr.mxu0 0.0
        %3841 = vmatpush1.xpose.msra.mxu0 0.0
        %3842 = vmatprep.subr.mxu0 0.0
        %3843 = vmatpush1.xpose.msra.mxu0 0.0
        %3844 = vmatprep.subr.mxu0 0.0
        %3845 = vmatpush1.xpose.msra.mxu0 0.0
        %3846 = vmatprep.subr.mxu0 0.0
        %3847 = vmatpush1.xpose.msra.mxu0 0.0
        %3848 = vmatprep.subr.mxu0 0.0
        %3849 = vmatpush1.xpose.msra.mxu0 0.0
        %3850 = vmatprep.subr.mxu0 0.0
        %3851 = vmatpush1.xpose.msra.mxu0 0.0
        %3852 = vmatprep.mubr.f32.mxu0 0.0
        %v3853 = vand.u32 %v3409, 4294901760
        %3854 = vmatmul.mubr.f32.gmra.mrb[0].mxu0 %v3853
        %v3855 = vpop.f32.mrb[0].mxu0
        %v3856 = vadd.f32 %v3784, %v3855
        %v3857 = vpop.f32.mrb[0].mxu0
        %3858 = vdwg.mxu0
        %v3859 = vsel %vm1562, %v3856, -inf
        %3860 = vmax.xlane.f32.xlu0 %v3859
        %v3861 = vpop.xlane.xlu0 %3860
        %v3862 = vsub.f32 %v3856, %v3861
        %v3863 = vmul.f32 %v3862, 1.442695
        %v3864 = vpow.pop %v3863
        %v3865 = vsel %vm1562, %v3864, 0.0
        %3866 = vadd.xlane.f32.xlu0 %v3865
        %v3867 = vpop.xlane.xlu0 %3866
        %v3868 = vrcp.pop %v3867
        %v3869 = vmul.f32 %v3864, %v3868
        %s3870 = scalar_lea.vmem %s549, 16 [#allocation13]
        %3871 = vst.msk [vmem:[%s3870] sm:$0xff] %vm1562, %v3869
        %3872 = vrot.lane.b32.xlu0 %v1553, 80
        %v3873 = vpop.permute.xlu0 %3872
        %v3876 = vsel %vm1562, %v3869, 0
        %3878 = vmatprep.subr.mxu0 0.0
        %v3879 = vand.u32 %v3873, 4294901760
        %3880 = vmatpush1.msra.mxu0 %v3879
        %3881 = vmatprep.subr.mxu0 0.0
        %3882 = vmatpush1.msra.mxu0 0.0
        %3883 = vmatprep.subr.mxu0 0.0
        %3884 = vmatpush1.msra.mxu0 0.0
        %3885 = vmatprep.subr.mxu0 0.0
        %3886 = vmatpush1.msra.mxu0 0.0
        %3887 = vmatprep.subr.mxu0 0.0
        %3888 = vmatpush1.msra.mxu0 0.0
        %3889 = vmatprep.subr.mxu0 0.0
        %3890 = vmatpush1.msra.mxu0 0.0
        %3891 = vmatprep.subr.mxu0 0.0
        %3892 = vmatpush1.msra.mxu0 0.0
        %3893 = vmatprep.subr.mxu0 0.0
        %3894 = vmatpush1.msra.mxu0 0.0
        %3895 = vmatprep.subr.mxu0 0.0
        %3896 = vmatpush1.msra.mxu0 0.0
        %3897 = vmatprep.subr.mxu0 0.0
        %3898 = vmatpush1.msra.mxu0 0.0
        %3899 = vmatprep.subr.mxu0 0.0
        %3900 = vmatpush1.msra.mxu0 0.0
        %3901 = vmatprep.subr.mxu0 0.0
        %3902 = vmatpush1.msra.mxu0 0.0
        %3903 = vmatprep.subr.mxu0 0.0
        %3904 = vmatpush1.msra.mxu0 0.0
        %3905 = vmatprep.subr.mxu0 0.0
        %3906 = vmatpush1.msra.mxu0 0.0
        %3907 = vmatprep.subr.mxu0 0.0
        %3908 = vmatpush1.msra.mxu0 0.0
        %3909 = vmatprep.subr.mxu0 0.0
        %3910 = vmatpush1.msra.mxu0 0.0
        %3911 = vmatprep.subr.mxu0 0.0
        %3912 = vmatpush1.msra.mxu0 0.0
        %3913 = vmatprep.subr.mxu0 0.0
        %3914 = vmatpush1.msra.mxu0 0.0
        %3915 = vmatprep.subr.mxu0 0.0
        %3916 = vmatpush1.msra.mxu0 0.0
        %3917 = vmatprep.subr.mxu0 0.0
        %3918 = vmatpush1.msra.mxu0 0.0
        %3919 = vmatprep.subr.mxu0 0.0
        %3920 = vmatpush1.msra.mxu0 0.0
        %3921 = vmatprep.subr.mxu0 0.0
        %3922 = vmatpush1.msra.mxu0 0.0
        %3923 = vmatprep.subr.mxu0 0.0
        %3924 = vmatpush1.msra.mxu0 0.0
        %3925 = vmatprep.subr.mxu0 0.0
        %3926 = vmatpush1.msra.mxu0 0.0
        %3927 = vmatprep.subr.mxu0 0.0
        %3928 = vmatpush1.msra.mxu0 0.0
        %3929 = vmatprep.subr.mxu0 0.0
        %3930 = vmatpush1.msra.mxu0 0.0
        %3931 = vmatprep.subr.mxu0 0.0
        %3932 = vmatpush1.msra.mxu0 0.0
        %3933 = vmatprep.subr.mxu0 0.0
        %3934 = vmatpush1.msra.mxu0 0.0
        %3935 = vmatprep.subr.mxu0 0.0
        %3936 = vmatpush1.msra.mxu0 0.0
        %3937 = vmatprep.subr.mxu0 0.0
        %3938 = vmatpush1.msra.mxu0 0.0
        %3939 = vmatprep.subr.mxu0 0.0
        %3940 = vmatpush1.msra.mxu0 0.0
        %3941 = vmatprep.subr.mxu0 0.0
        %3942 = vmatpush1.msra.mxu0 0.0
        %3943 = vmatprep.mubr.f32.mxu0 0.0
        %v3944 = vand.u32 %v3876, 4294901760
        %v3945 = vsub.f32 %v3876, %v3944
        %v3946 = vand.u32 %v3945, 4294901760
        %v3947 = vsub.f32 %v3945, %v3946
        %v3948 = vand.u32 %v3947, 4294901760
        %3949 = vmatmul.mubr.f32.gmra.mrb[0].mxu0 %v3948
        %v3950 = vpop.f32.mrb[0].mxu0
        %v3951 = vadd.f32 0.0, %v3950
        %v3952 = vpop.f32.mrb[0].mxu0
        %3953 = vdwg.mxu0
        %3954 = vmatprep.subr.mxu0 0.0
        %v3955 = vand.u32 %v3873, 4294901760
        %v3956 = vsub.f32 %v3873, %v3955
        %v3957 = vand.u32 %v3956, 4294901760
        %v3958 = vsub.f32 %v3956, %v3957
        %v3959 = vand.u32 %v3958, 4294901760
        %3960 = vmatpush1.msra.mxu0 %v3959
        %3961 = vmatprep.subr.mxu0 0.0
        %3962 = vmatpush1.msra.mxu0 0.0
        %3963 = vmatprep.subr.mxu0 0.0
        %3964 = vmatpush1.msra.mxu0 0.0
        %3965 = vmatprep.subr.mxu0 0.0
        %3966 = vmatpush1.msra.mxu0 0.0
        %3967 = vmatprep.subr.mxu0 0.0
        %3968 = vmatpush1.msra.mxu0 0.0
        %3969 = vmatprep.subr.mxu0 0.0
        %3970 = vmatpush1.msra.mxu0 0.0
        %3971 = vmatprep.subr.mxu0 0.0
        %3972 = vmatpush1.msra.mxu0 0.0
        %3973 = vmatprep.subr.mxu0 0.0
        %3974 = vmatpush1.msra.mxu0 0.0
        %3975 = vmatprep.subr.mxu0 0.0
        %3976 = vmatpush1.msra.mxu0 0.0
        %3977 = vmatprep.subr.mxu0 0.0
        %3978 = vmatpush1.msra.mxu0 0.0
        %3979 = vmatprep.subr.mxu0 0.0
        %3980 = vmatpush1.msra.mxu0 0.0
        %3981 = vmatprep.subr.mxu0 0.0
        %3982 = vmatpush1.msra.mxu0 0.0
        %3983 = vmatprep.subr.mxu0 0.0
        %3984 = vmatpush1.msra.mxu0 0.0
        %3985 = vmatprep.subr.mxu0 0.0
        %3986 = vmatpush1.msra.mxu0 0.0
        %3987 = vmatprep.subr.mxu0 0.0
        %3988 = vmatpush1.msra.mxu0 0.0
        %3989 = vmatprep.subr.mxu0 0.0
        %3990 = vmatpush1.msra.mxu0 0.0
        %3991 = vmatprep.subr.mxu0 0.0
        %3992 = vmatpush1.msra.mxu0 0.0
        %3993 = vmatprep.subr.mxu0 0.0
        %3994 = vmatpush1.msra.mxu0 0.0
        %3995 = vmatprep.subr.mxu0 0.0
        %3996 = vmatpush1.msra.mxu0 0.0
        %3997 = vmatprep.subr.mxu0 0.0
        %3998 = vmatpush1.msra.mxu0 0.0
        %3999 = vmatprep.subr.mxu0 0.0
        %4000 = vmatpush1.msra.mxu0 0.0
        %4001 = vmatprep.subr.mxu0 0.0
        %4002 = vmatpush1.msra.mxu0 0.0
        %4003 = vmatprep.subr.mxu0 0.0
        %4004 = vmatpush1.msra.mxu0 0.0
        %4005 = vmatprep.subr.mxu0 0.0
        %4006 = vmatpush1.msra.mxu0 0.0
        %4007 = vmatprep.subr.mxu0 0.0
        %4008 = vmatpush1.msra.mxu0 0.0
        %4009 = vmatprep.subr.mxu0 0.0
        %4010 = vmatpush1.msra.mxu0 0.0
        %4011 = vmatprep.subr.mxu0 0.0
        %4012 = vmatpush1.msra.mxu0 0.0
        %4013 = vmatprep.subr.mxu0 0.0
        %4014 = vmatpush1.msra.mxu0 0.0
        %4015 = vmatprep.subr.mxu0 0.0
        %4016 = vmatpush1.msra.mxu0 0.0
        %4017 = vmatprep.subr.mxu0 0.0
        %4018 = vmatpush1.msra.mxu0 0.0
        %4019 = vmatprep.subr.mxu0 0.0
        %4020 = vmatpush1.msra.mxu0 0.0
        %4021 = vmatprep.subr.mxu0 0.0
        %4022 = vmatpush1.msra.mxu0 0.0
        %4023 = vmatprep.mubr.f32.mxu0 0.0
        %v4024 = vand.u32 %v3876, 4294901760
        %4025 = vmatmul.mubr.f32.gmra.mrb[0].mxu0 %v4024
        %v4026 = vpop.f32.mrb[0].mxu0
        %v4027 = vadd.f32 %v3951, %v4026
        %v4028 = vpop.f32.mrb[0].mxu0
        %4029 = vdwg.mxu0
        %4030 = vmatprep.subr.mxu0 0.0
        %v4031 = vand.u32 %v3873, 4294901760
        %v4032 = vsub.f32 %v3873, %v4031
        %4033 = vmatpush1.msra.mxu0 %v4032
        %4034 = vmatprep.subr.mxu0 0.0
        %4035 = vmatpush1.msra.mxu0 0.0
        %4036 = vmatprep.subr.mxu0 0.0
        %4037 = vmatpush1.msra.mxu0 0.0
        %4038 = vmatprep.subr.mxu0 0.0
        %4039 = vmatpush1.msra.mxu0 0.0
        %4040 = vmatprep.subr.mxu0 0.0
        %4041 = vmatpush1.msra.mxu0 0.0
        %4042 = vmatprep.subr.mxu0 0.0
        %4043 = vmatpush1.msra.mxu0 0.0
        %4044 = vmatprep.subr.mxu0 0.0
        %4045 = vmatpush1.msra.mxu0 0.0
        %4046 = vmatprep.subr.mxu0 0.0
        %4047 = vmatpush1.msra.mxu0 0.0
        %4048 = vmatprep.subr.mxu0 0.0
        %4049 = vmatpush1.msra.mxu0 0.0
        %4050 = vmatprep.subr.mxu0 0.0
        %4051 = vmatpush1.msra.mxu0 0.0
        %4052 = vmatprep.subr.mxu0 0.0
        %4053 = vmatpush1.msra.mxu0 0.0
        %4054 = vmatprep.subr.mxu0 0.0
        %4055 = vmatpush1.msra.mxu0 0.0
        %4056 = vmatprep.subr.mxu0 0.0
        %4057 = vmatpush1.msra.mxu0 0.0
        %4058 = vmatprep.subr.mxu0 0.0
        %4059 = vmatpush1.msra.mxu0 0.0
        %4060 = vmatprep.subr.mxu0 0.0
        %4061 = vmatpush1.msra.mxu0 0.0
        %4062 = vmatprep.subr.mxu0 0.0
        %4063 = vmatpush1.msra.mxu0 0.0
        %4064 = vmatprep.subr.mxu0 0.0
        %4065 = vmatpush1.msra.mxu0 0.0
        %4066 = vmatprep.subr.mxu0 0.0
        %4067 = vmatpush1.msra.mxu0 0.0
        %4068 = vmatprep.subr.mxu0 0.0
        %4069 = vmatpush1.msra.mxu0 0.0
        %4070 = vmatprep.subr.mxu0 0.0
        %4071 = vmatpush1.msra.mxu0 0.0
        %4072 = vmatprep.subr.mxu0 0.0
        %4073 = vmatpush1.msra.mxu0 0.0
        %4074 = vmatprep.subr.mxu0 0.0
        %4075 = vmatpush1.msra.mxu0 0.0
        %4076 = vmatprep.subr.mxu0 0.0
        %4077 = vmatpush1.msra.mxu0 0.0
        %4078 = vmatprep.subr.mxu0 0.0
        %4079 = vmatpush1.msra.mxu0 0.0
        %4080 = vmatprep.subr.mxu0 0.0
        %4081 = vmatpush1.msra.mxu0 0.0
        %4082 = vmatprep.subr.mxu0 0.0
        %4083 = vmatpush1.msra.mxu0 0.0
        %4084 = vmatprep.subr.mxu0 0.0
        %4085 = vmatpush1.msra.mxu0 0.0
        %4086 = vmatprep.subr.mxu0 0.0
        %4087 = vmatpush1.msra.mxu0 0.0
        %4088 = vmatprep.subr.mxu0 0.0
        %4089 = vmatpush1.msra.mxu0 0.0
        %4090 = vmatprep.subr.mxu0 0.0
        %4091 = vmatpush1.msra.mxu0 0.0
        %4092 = vmatprep.subr.mxu0 0.0
        %4093 = vmatpush1.msra.mxu0 0.0
        %4094 = vmatprep.subr.mxu0 0.0
        %4095 = vmatpush1.msra.mxu0 0.0
        %4096 = vmatprep.mubr.f32.mxu0 0.0
        %v4097 = vand.u32 %v3876, 4294901760
        %v4098 = vsub.f32 %v3876, %v4097
        %4099 = vmatmul.mubr.f32.gmra.mrb[0].mxu0 %v4098
        %v4100 = vpop.f32.mrb[0].mxu0
        %v4101 = vadd.f32 %v4027, %v4100
        %v4102 = vpop.f32.mrb[0].mxu0
        %4103 = vdwg.mxu0
        %4104 = vmatprep.subr.mxu0 0.0
        %v4105 = vand.u32 %v3873, 4294901760
        %4106 = vmatpush1.msra.mxu0 %v4105
        %4107 = vmatprep.subr.mxu0 0.0
        %4108 = vmatpush1.msra.mxu0 0.0
        %4109 = vmatprep.subr.mxu0 0.0
        %4110 = vmatpush1.msra.mxu0 0.0
        %4111 = vmatprep.subr.mxu0 0.0
        %4112 = vmatpush1.msra.mxu0 0.0
        %4113 = vmatprep.subr.mxu0 0.0
        %4114 = vmatpush1.msra.mxu0 0.0
        %4115 = vmatprep.subr.mxu0 0.0
        %4116 = vmatpush1.msra.mxu0 0.0
        %4117 = vmatprep.subr.mxu0 0.0
        %4118 = vmatpush1.msra.mxu0 0.0
        %4119 = vmatprep.subr.mxu0 0.0
        %4120 = vmatpush1.msra.mxu0 0.0
        %4121 = vmatprep.subr.mxu0 0.0
        %4122 = vmatpush1.msra.mxu0 0.0
        %4123 = vmatprep.subr.mxu0 0.0
        %4124 = vmatpush1.msra.mxu0 0.0
        %4125 = vmatprep.subr.mxu0 0.0
        %4126 = vmatpush1.msra.mxu0 0.0
        %4127 = vmatprep.subr.mxu0 0.0
        %4128 = vmatpush1.msra.mxu0 0.0
        %4129 = vmatprep.subr.mxu0 0.0
        %4130 = vmatpush1.msra.mxu0 0.0
        %4131 = vmatprep.subr.mxu0 0.0
        %4132 = vmatpush1.msra.mxu0 0.0
        %4133 = vmatprep.subr.mxu0 0.0
        %4134 = vmatpush1.msra.mxu0 0.0
        %4135 = vmatprep.subr.mxu0 0.0
        %4136 = vmatpush1.msra.mxu0 0.0
        %4137 = vmatprep.subr.mxu0 0.0
        %4138 = vmatpush1.msra.mxu0 0.0
        %4139 = vmatprep.subr.mxu0 0.0
        %4140 = vmatpush1.msra.mxu0 0.0
        %4141 = vmatprep.subr.mxu0 0.0
        %4142 = vmatpush1.msra.mxu0 0.0
        %4143 = vmatprep.subr.mxu0 0.0
        %4144 = vmatpush1.msra.mxu0 0.0
        %4145 = vmatprep.subr.mxu0 0.0
        %4146 = vmatpush1.msra.mxu0 0.0
        %4147 = vmatprep.subr.mxu0 0.0
        %4148 = vmatpush1.msra.mxu0 0.0
        %4149 = vmatprep.subr.mxu0 0.0
        %4150 = vmatpush1.msra.mxu0 0.0
        %4151 = vmatprep.subr.mxu0 0.0
        %4152 = vmatpush1.msra.mxu0 0.0
        %4153 = vmatprep.subr.mxu0 0.0
        %4154 = vmatpush1.msra.mxu0 0.0
        %4155 = vmatprep.subr.mxu0 0.0
        %4156 = vmatpush1.msra.mxu0 0.0
        %4157 = vmatprep.subr.mxu0 0.0
        %4158 = vmatpush1.msra.mxu0 0.0
        %4159 = vmatprep.subr.mxu0 0.0
        %4160 = vmatpush1.msra.mxu0 0.0
        %4161 = vmatprep.subr.mxu0 0.0
        %4162 = vmatpush1.msra.mxu0 0.0
        %4163 = vmatprep.subr.mxu0 0.0
        %4164 = vmatpush1.msra.mxu0 0.0
        %4165 = vmatprep.subr.mxu0 0.0
        %4166 = vmatpush1.msra.mxu0 0.0
        %4167 = vmatprep.subr.mxu0 0.0
        %4168 = vmatpush1.msra.mxu0 0.0
        %4169 = vmatprep.mubr.f32.mxu0 0.0
        %v4170 = vand.u32 %v3876, 4294901760
        %v4171 = vsub.f32 %v3876, %v4170
        %v4172 = vand.u32 %v4171, 4294901760
        %4173 = vmatmul.mubr.f32.gmra.mrb[0].mxu0 %v4172
        %v4174 = vpop.f32.mrb[0].mxu0
        %v4175 = vadd.f32 %v4101, %v4174
        %v4176 = vpop.f32.mrb[0].mxu0
        %4177 = vdwg.mxu0
        %4178 = vmatprep.subr.mxu0 0.0
        %v4179 = vand.u32 %v3873, 4294901760
        %v4180 = vsub.f32 %v3873, %v4179
        %v4181 = vand.u32 %v4180, 4294901760
        %4182 = vmatpush1.msra.mxu0 %v4181
        %4183 = vmatprep.subr.mxu0 0.0
        %4184 = vmatpush1.msra.mxu0 0.0
        %4185 = vmatprep.subr.mxu0 0.0
        %4186 = vmatpush1.msra.mxu0 0.0
        %4187 = vmatprep.subr.mxu0 0.0
        %4188 = vmatpush1.msra.mxu0 0.0
        %4189 = vmatprep.subr.mxu0 0.0
        %4190 = vmatpush1.msra.mxu0 0.0
        %4191 = vmatprep.subr.mxu0 0.0
        %4192 = vmatpush1.msra.mxu0 0.0
        %4193 = vmatprep.subr.mxu0 0.0
        %4194 = vmatpush1.msra.mxu0 0.0
        %4195 = vmatprep.subr.mxu0 0.0
        %4196 = vmatpush1.msra.mxu0 0.0
        %4197 = vmatprep.subr.mxu0 0.0
        %4198 = vmatpush1.msra.mxu0 0.0
        %4199 = vmatprep.subr.mxu0 0.0
        %4200 = vmatpush1.msra.mxu0 0.0
        %4201 = vmatprep.subr.mxu0 0.0
        %4202 = vmatpush1.msra.mxu0 0.0
        %4203 = vmatprep.subr.mxu0 0.0
        %4204 = vmatpush1.msra.mxu0 0.0
        %4205 = vmatprep.subr.mxu0 0.0
        %4206 = vmatpush1.msra.mxu0 0.0
        %4207 = vmatprep.subr.mxu0 0.0
        %4208 = vmatpush1.msra.mxu0 0.0
        %4209 = vmatprep.subr.mxu0 0.0
        %4210 = vmatpush1.msra.mxu0 0.0
        %4211 = vmatprep.subr.mxu0 0.0
        %4212 = vmatpush1.msra.mxu0 0.0
        %4213 = vmatprep.subr.mxu0 0.0
        %4214 = vmatpush1.msra.mxu0 0.0
        %4215 = vmatprep.subr.mxu0 0.0
        %4216 = vmatpush1.msra.mxu0 0.0
        %4217 = vmatprep.subr.mxu0 0.0
        %4218 = vmatpush1.msra.mxu0 0.0
        %4219 = vmatprep.subr.mxu0 0.0
        %4220 = vmatpush1.msra.mxu0 0.0
        %4221 = vmatprep.subr.mxu0 0.0
        %4222 = vmatpush1.msra.mxu0 0.0
        %4223 = vmatprep.subr.mxu0 0.0
        %4224 = vmatpush1.msra.mxu0 0.0
        %4225 = vmatprep.subr.mxu0 0.0
        %4226 = vmatpush1.msra.mxu0 0.0
        %4227 = vmatprep.subr.mxu0 0.0
        %4228 = vmatpush1.msra.mxu0 0.0
        %4229 = vmatprep.subr.mxu0 0.0
        %4230 = vmatpush1.msra.mxu0 0.0
        %4231 = vmatprep.subr.mxu0 0.0
        %4232 = vmatpush1.msra.mxu0 0.0
        %4233 = vmatprep.subr.mxu0 0.0
        %4234 = vmatpush1.msra.mxu0 0.0
        %4235 = vmatprep.subr.mxu0 0.0
        %4236 = vmatpush1.msra.mxu0 0.0
        %4237 = vmatprep.subr.mxu0 0.0
        %4238 = vmatpush1.msra.mxu0 0.0
        %4239 = vmatprep.subr.mxu0 0.0
        %4240 = vmatpush1.msra.mxu0 0.0
        %4241 = vmatprep.subr.mxu0 0.0
        %4242 = vmatpush1.msra.mxu0 0.0
        %4243 = vmatprep.subr.mxu0 0.0
        %4244 = vmatpush1.msra.mxu0 0.0
        %4245 = vmatprep.mubr.f32.mxu0 0.0
        %v4246 = vand.u32 %v3876, 4294901760
        %4247 = vmatmul.mubr.f32.gmra.mrb[0].mxu0 %v4246
        %v4248 = vpop.f32.mrb[0].mxu0
        %v4249 = vadd.f32 %v4175, %v4248
        %v4250 = vpop.f32.mrb[0].mxu0
        %4251 = vdwg.mxu0
        %4252 = vmatprep.subr.mxu0 0.0
        %v4253 = vand.u32 %v3873, 4294901760
        %4254 = vmatpush1.msra.mxu0 %v4253
        %4255 = vmatprep.subr.mxu0 0.0
        %4256 = vmatpush1.msra.mxu0 0.0
        %4257 = vmatprep.subr.mxu0 0.0
        %4258 = vmatpush1.msra.mxu0 0.0
        %4259 = vmatprep.subr.mxu0 0.0
        %4260 = vmatpush1.msra.mxu0 0.0
        %4261 = vmatprep.subr.mxu0 0.0
        %4262 = vmatpush1.msra.mxu0 0.0
        %4263 = vmatprep.subr.mxu0 0.0
        %4264 = vmatpush1.msra.mxu0 0.0
        %4265 = vmatprep.subr.mxu0 0.0
        %4266 = vmatpush1.msra.mxu0 0.0
        %4267 = vmatprep.subr.mxu0 0.0
        %4268 = vmatpush1.msra.mxu0 0.0
        %4269 = vmatprep.subr.mxu0 0.0
        %4270 = vmatpush1.msra.mxu0 0.0
        %4271 = vmatprep.subr.mxu0 0.0
        %4272 = vmatpush1.msra.mxu0 0.0
        %4273 = vmatprep.subr.mxu0 0.0
        %4274 = vmatpush1.msra.mxu0 0.0
        %4275 = vmatprep.subr.mxu0 0.0
        %4276 = vmatpush1.msra.mxu0 0.0
        %4277 = vmatprep.subr.mxu0 0.0
        %4278 = vmatpush1.msra.mxu0 0.0
        %4279 = vmatprep.subr.mxu0 0.0
        %4280 = vmatpush1.msra.mxu0 0.0
        %4281 = vmatprep.subr.mxu0 0.0
        %4282 = vmatpush1.msra.mxu0 0.0
        %4283 = vmatprep.subr.mxu0 0.0
        %4284 = vmatpush1.msra.mxu0 0.0
        %4285 = vmatprep.subr.mxu0 0.0
        %4286 = vmatpush1.msra.mxu0 0.0
        %4287 = vmatprep.subr.mxu0 0.0
        %4288 = vmatpush1.msra.mxu0 0.0
        %4289 = vmatprep.subr.mxu0 0.0
        %4290 = vmatpush1.msra.mxu0 0.0
        %4291 = vmatprep.subr.mxu0 0.0
        %4292 = vmatpush1.msra.mxu0 0.0
        %4293 = vmatprep.subr.mxu0 0.0
        %4294 = vmatpush1.msra.mxu0 0.0
        %4295 = vmatprep.subr.mxu0 0.0
        %4296 = vmatpush1.msra.mxu0 0.0
        %4297 = vmatprep.subr.mxu0 0.0
        %4298 = vmatpush1.msra.mxu0 0.0
        %4299 = vmatprep.subr.mxu0 0.0
        %4300 = vmatpush1.msra.mxu0 0.0
        %4301 = vmatprep.subr.mxu0 0.0
        %4302 = vmatpush1.msra.mxu0 0.0
        %4303 = vmatprep.subr.mxu0 0.0
        %4304 = vmatpush1.msra.mxu0 0.0
        %4305 = vmatprep.subr.mxu0 0.0
        %4306 = vmatpush1.msra.mxu0 0.0
        %4307 = vmatprep.subr.mxu0 0.0
        %4308 = vmatpush1.msra.mxu0 0.0
        %4309 = vmatprep.subr.mxu0 0.0
        %4310 = vmatpush1.msra.mxu0 0.0
        %4311 = vmatprep.subr.mxu0 0.0
        %4312 = vmatpush1.msra.mxu0 0.0
        %4313 = vmatprep.subr.mxu0 0.0
        %4314 = vmatpush1.msra.mxu0 0.0
        %4315 = vmatprep.subr.mxu0 0.0
        %4316 = vmatpush1.msra.mxu0 0.0
        %4317 = vmatprep.mubr.f32.mxu0 0.0
        %v4318 = vand.u32 %v3876, 4294901760
        %4319 = vmatmul.mubr.f32.gmra.mrb[0].mxu0 %v4318
        %v4320 = vpop.f32.mrb[0].mxu0
        %v4321 = vadd.f32 %v4249, %v4320
        %v4322 = vpop.f32.mrb[0].mxu0
        %4323 = vdwg.mxu0
        %4325 = vrot.lane.b32.xlu0 %v4321, 16
        %v4326 = vpop.permute.xlu0 %4325
        %vm4328 = vcmask 195712
        %4329 = vst.msk [vmem:[#allocation2] sm:$0xff] %vm4328, %v4326
        %4330 = vrot.lane.b32.xlu0 %v1056, 104
        %v4331 = vpop.permute.xlu0 %4330
        %4332 = vrot.lane.b32.xlu0 %v1553, 104
        %v4333 = vpop.permute.xlu0 %4332
        %v4334 = vsel %vm1562, %v4331, 0
        %v4336 = vsel %vm1562, %v4333, 0
        %4338 = vmatprep.subr.mxu0 0.0
        %v4339 = vand.u32 %v4336, 4294901760
        %4340 = vmatpush1.xpose.msra.mxu0 %v4339
        %4341 = vmatprep.subr.mxu0 0.0
        %4342 = vmatpush1.xpose.msra.mxu0 0.0
        %4343 = vmatprep.subr.mxu0 0.0
        %4344 = vmatpush1.xpose.msra.mxu0 0.0
        %4345 = vmatprep.subr.mxu0 0.0
        %4346 = vmatpush1.xpose.msra.mxu0 0.0
        %4347 = vmatprep.subr.mxu0 0.0
        %4348 = vmatpush1.xpose.msra.mxu0 0.0
        %4349 = vmatprep.subr.mxu0 0.0
        %4350 = vmatpush1.xpose.msra.mxu0 0.0
        %4351 = vmatprep.subr.mxu0 0.0
        %4352 = vmatpush1.xpose.msra.mxu0 0.0
        %4353 = vmatprep.subr.mxu0 0.0
        %4354 = vmatpush1.xpose.msra.mxu0 0.0
        %4355 = vmatprep.subr.mxu0 0.0
        %4356 = vmatpush1.xpose.msra.mxu0 0.0
        %4357 = vmatprep.subr.mxu0 0.0
        %4358 = vmatpush1.xpose.msra.mxu0 0.0
        %4359 = vmatprep.subr.mxu0 0.0
        %4360 = vmatpush1.xpose.msra.mxu0 0.0
        %4361 = vmatprep.subr.mxu0 0.0
        %4362 = vmatpush1.xpose.msra.mxu0 0.0
        %4363 = vmatprep.subr.mxu0 0.0
        %4364 = vmatpush1.xpose.msra.mxu0 0.0
        %4365 = vmatprep.subr.mxu0 0.0
        %4366 = vmatpush1.xpose.msra.mxu0 0.0
        %4367 = vmatprep.subr.mxu0 0.0
        %4368 = vmatpush1.xpose.msra.mxu0 0.0
        %4369 = vmatprep.subr.mxu0 0.0
        %4370 = vmatpush1.xpose.msra.mxu0 0.0
        %4371 = vmatprep.subr.mxu0 0.0
        %4372 = vmatpush1.xpose.msra.mxu0 0.0
        %4373 = vmatprep.subr.mxu0 0.0
        %4374 = vmatpush1.xpose.msra.mxu0 0.0
        %4375 = vmatprep.subr.mxu0 0.0
        %4376 = vmatpush1.xpose.msra.mxu0 0.0
        %4377 = vmatprep.subr.mxu0 0.0
        %4378 = vmatpush1.xpose.msra.mxu0 0.0
        %4379 = vmatprep.subr.mxu0 0.0
        %4380 = vmatpush1.xpose.msra.mxu0 0.0
        %4381 = vmatprep.subr.mxu0 0.0
        %4382 = vmatpush1.xpose.msra.mxu0 0.0
        %4383 = vmatprep.subr.mxu0 0.0
        %4384 = vmatpush1.xpose.msra.mxu0 0.0
        %4385 = vmatprep.subr.mxu0 0.0
        %4386 = vmatpush1.xpose.msra.mxu0 0.0
        %4387 = vmatprep.subr.mxu0 0.0
        %4388 = vmatpush1.xpose.msra.mxu0 0.0
        %4389 = vmatprep.subr.mxu0 0.0
        %4390 = vmatpush1.xpose.msra.mxu0 0.0
        %4391 = vmatprep.subr.mxu0 0.0
        %4392 = vmatpush1.xpose.msra.mxu0 0.0
        %4393 = vmatprep.subr.mxu0 0.0
        %4394 = vmatpush1.xpose.msra.mxu0 0.0
        %4395 = vmatprep.subr.mxu0 0.0
        %4396 = vmatpush1.xpose.msra.mxu0 0.0
        %4397 = vmatprep.subr.mxu0 0.0
        %4398 = vmatpush1.xpose.msra.mxu0 0.0
        %4399 = vmatprep.subr.mxu0 0.0
        %4400 = vmatpush1.xpose.msra.mxu0 0.0
        %4401 = vmatprep.subr.mxu0 0.0
        %4402 = vmatpush1.xpose.msra.mxu0 0.0
        %4403 = vmatprep.mubr.f32.mxu0 0.0
        %v4404 = vand.u32 %v4334, 4294901760
        %v4405 = vsub.f32 %v4334, %v4404
        %v4406 = vand.u32 %v4405, 4294901760
        %v4407 = vsub.f32 %v4405, %v4406
        %v4408 = vand.u32 %v4407, 4294901760
        %4409 = vmatmul.mubr.f32.gmra.mrb[0].mxu0 %v4408
        %v4410 = vpop.f32.mrb[0].mxu0
        %v4411 = vadd.f32 %v1560, %v4410
        %v4412 = vpop.f32.mrb[0].mxu0
        %4413 = vdwg.mxu0
        %4414 = vmatprep.subr.mxu0 0.0
        %v4415 = vand.u32 %v4336, 4294901760
        %v4416 = vsub.f32 %v4336, %v4415
        %v4417 = vand.u32 %v4416, 4294901760
        %v4418 = vsub.f32 %v4416, %v4417
        %v4419 = vand.u32 %v4418, 4294901760
        %4420 = vmatpush1.xpose.msra.mxu0 %v4419
        %4421 = vmatprep.subr.mxu0 0.0
        %4422 = vmatpush1.xpose.msra.mxu0 0.0
        %4423 = vmatprep.subr.mxu0 0.0
        %4424 = vmatpush1.xpose.msra.mxu0 0.0
        %4425 = vmatprep.subr.mxu0 0.0
        %4426 = vmatpush1.xpose.msra.mxu0 0.0
        %4427 = vmatprep.subr.mxu0 0.0
        %4428 = vmatpush1.xpose.msra.mxu0 0.0
        %4429 = vmatprep.subr.mxu0 0.0
        %4430 = vmatpush1.xpose.msra.mxu0 0.0
        %4431 = vmatprep.subr.mxu0 0.0
        %4432 = vmatpush1.xpose.msra.mxu0 0.0
        %4433 = vmatprep.subr.mxu0 0.0
        %4434 = vmatpush1.xpose.msra.mxu0 0.0
        %4435 = vmatprep.subr.mxu0 0.0
        %4436 = vmatpush1.xpose.msra.mxu0 0.0
        %4437 = vmatprep.subr.mxu0 0.0
        %4438 = vmatpush1.xpose.msra.mxu0 0.0
        %4439 = vmatprep.subr.mxu0 0.0
        %4440 = vmatpush1.xpose.msra.mxu0 0.0
        %4441 = vmatprep.subr.mxu0 0.0
        %4442 = vmatpush1.xpose.msra.mxu0 0.0
        %4443 = vmatprep.subr.mxu0 0.0
        %4444 = vmatpush1.xpose.msra.mxu0 0.0
        %4445 = vmatprep.subr.mxu0 0.0
        %4446 = vmatpush1.xpose.msra.mxu0 0.0
        %4447 = vmatprep.subr.mxu0 0.0
        %4448 = vmatpush1.xpose.msra.mxu0 0.0
        %4449 = vmatprep.subr.mxu0 0.0
        %4450 = vmatpush1.xpose.msra.mxu0 0.0
        %4451 = vmatprep.subr.mxu0 0.0
        %4452 = vmatpush1.xpose.msra.mxu0 0.0
        %4453 = vmatprep.subr.mxu0 0.0
        %4454 = vmatpush1.xpose.msra.mxu0 0.0
        %4455 = vmatprep.subr.mxu0 0.0
        %4456 = vmatpush1.xpose.msra.mxu0 0.0
        %4457 = vmatprep.subr.mxu0 0.0
        %4458 = vmatpush1.xpose.msra.mxu0 0.0
        %4459 = vmatprep.subr.mxu0 0.0
        %4460 = vmatpush1.xpose.msra.mxu0 0.0
        %4461 = vmatprep.subr.mxu0 0.0
        %4462 = vmatpush1.xpose.msra.mxu0 0.0
        %4463 = vmatprep.subr.mxu0 0.0
        %4464 = vmatpush1.xpose.msra.mxu0 0.0
        %4465 = vmatprep.subr.mxu0 0.0
        %4466 = vmatpush1.xpose.msra.mxu0 0.0
        %4467 = vmatprep.subr.mxu0 0.0
        %4468 = vmatpush1.xpose.msra.mxu0 0.0
        %4469 = vmatprep.subr.mxu0 0.0
        %4470 = vmatpush1.xpose.msra.mxu0 0.0
        %4471 = vmatprep.subr.mxu0 0.0
        %4472 = vmatpush1.xpose.msra.mxu0 0.0
        %4473 = vmatprep.subr.mxu0 0.0
        %4474 = vmatpush1.xpose.msra.mxu0 0.0
        %4475 = vmatprep.subr.mxu0 0.0
        %4476 = vmatpush1.xpose.msra.mxu0 0.0
        %4477 = vmatprep.subr.mxu0 0.0
        %4478 = vmatpush1.xpose.msra.mxu0 0.0
        %4479 = vmatprep.subr.mxu0 0.0
        %4480 = vmatpush1.xpose.msra.mxu0 0.0
        %4481 = vmatprep.subr.mxu0 0.0
        %4482 = vmatpush1.xpose.msra.mxu0 0.0
        %4483 = vmatprep.mubr.f32.mxu0 0.0
        %v4484 = vand.u32 %v4334, 4294901760
        %4485 = vmatmul.mubr.f32.gmra.mrb[0].mxu0 %v4484
        %v4486 = vpop.f32.mrb[0].mxu0
        %v4487 = vadd.f32 %v4411, %v4486
        %v4488 = vpop.f32.mrb[0].mxu0
        %4489 = vdwg.mxu0
        %4490 = vmatprep.subr.mxu0 0.0
        %v4491 = vand.u32 %v4336, 4294901760
        %v4492 = vsub.f32 %v4336, %v4491
        %4493 = vmatpush1.xpose.msra.mxu0 %v4492
        %4494 = vmatprep.subr.mxu0 0.0
        %4495 = vmatpush1.xpose.msra.mxu0 0.0
        %4496 = vmatprep.subr.mxu0 0.0
        %4497 = vmatpush1.xpose.msra.mxu0 0.0
        %4498 = vmatprep.subr.mxu0 0.0
        %4499 = vmatpush1.xpose.msra.mxu0 0.0
        %4500 = vmatprep.subr.mxu0 0.0
        %4501 = vmatpush1.xpose.msra.mxu0 0.0
        %4502 = vmatprep.subr.mxu0 0.0
        %4503 = vmatpush1.xpose.msra.mxu0 0.0
        %4504 = vmatprep.subr.mxu0 0.0
        %4505 = vmatpush1.xpose.msra.mxu0 0.0
        %4506 = vmatprep.subr.mxu0 0.0
        %4507 = vmatpush1.xpose.msra.mxu0 0.0
        %4508 = vmatprep.subr.mxu0 0.0
        %4509 = vmatpush1.xpose.msra.mxu0 0.0
        %4510 = vmatprep.subr.mxu0 0.0
        %4511 = vmatpush1.xpose.msra.mxu0 0.0
        %4512 = vmatprep.subr.mxu0 0.0
        %4513 = vmatpush1.xpose.msra.mxu0 0.0
        %4514 = vmatprep.subr.mxu0 0.0
        %4515 = vmatpush1.xpose.msra.mxu0 0.0
        %4516 = vmatprep.subr.mxu0 0.0
        %4517 = vmatpush1.xpose.msra.mxu0 0.0
        %4518 = vmatprep.subr.mxu0 0.0
        %4519 = vmatpush1.xpose.msra.mxu0 0.0
        %4520 = vmatprep.subr.mxu0 0.0
        %4521 = vmatpush1.xpose.msra.mxu0 0.0
        %4522 = vmatprep.subr.mxu0 0.0
        %4523 = vmatpush1.xpose.msra.mxu0 0.0
        %4524 = vmatprep.subr.mxu0 0.0
        %4525 = vmatpush1.xpose.msra.mxu0 0.0
        %4526 = vmatprep.subr.mxu0 0.0
        %4527 = vmatpush1.xpose.msra.mxu0 0.0
        %4528 = vmatprep.subr.mxu0 0.0
        %4529 = vmatpush1.xpose.msra.mxu0 0.0
        %4530 = vmatprep.subr.mxu0 0.0
        %4531 = vmatpush1.xpose.msra.mxu0 0.0
        %4532 = vmatprep.subr.mxu0 0.0
        %4533 = vmatpush1.xpose.msra.mxu0 0.0
        %4534 = vmatprep.subr.mxu0 0.0
        %4535 = vmatpush1.xpose.msra.mxu0 0.0
        %4536 = vmatprep.subr.mxu0 0.0
        %4537 = vmatpush1.xpose.msra.mxu0 0.0
        %4538 = vmatprep.subr.mxu0 0.0
        %4539 = vmatpush1.xpose.msra.mxu0 0.0
        %4540 = vmatprep.subr.mxu0 0.0
        %4541 = vmatpush1.xpose.msra.mxu0 0.0
        %4542 = vmatprep.subr.mxu0 0.0
        %4543 = vmatpush1.xpose.msra.mxu0 0.0
        %4544 = vmatprep.subr.mxu0 0.0
        %4545 = vmatpush1.xpose.msra.mxu0 0.0
        %4546 = vmatprep.subr.mxu0 0.0
        %4547 = vmatpush1.xpose.msra.mxu0 0.0
        %4548 = vmatprep.subr.mxu0 0.0
        %4549 = vmatpush1.xpose.msra.mxu0 0.0
        %4550 = vmatprep.subr.mxu0 0.0
        %4551 = vmatpush1.xpose.msra.mxu0 0.0
        %4552 = vmatprep.subr.mxu0 0.0
        %4553 = vmatpush1.xpose.msra.mxu0 0.0
        %4554 = vmatprep.subr.mxu0 0.0
        %4555 = vmatpush1.xpose.msra.mxu0 0.0
        %4556 = vmatprep.mubr.f32.mxu0 0.0
        %v4557 = vand.u32 %v4334, 4294901760
        %v4558 = vsub.f32 %v4334, %v4557
        %4559 = vmatmul.mubr.f32.gmra.mrb[0].mxu0 %v4558
        %v4560 = vpop.f32.mrb[0].mxu0
        %v4561 = vadd.f32 %v4487, %v4560
        %v4562 = vpop.f32.mrb[0].mxu0
        %4563 = vdwg.mxu0
        %4564 = vmatprep.subr.mxu0 0.0
        %v4565 = vand.u32 %v4336, 4294901760
        %4566 = vmatpush1.xpose.msra.mxu0 %v4565
        %4567 = vmatprep.subr.mxu0 0.0
        %4568 = vmatpush1.xpose.msra.mxu0 0.0
        %4569 = vmatprep.subr.mxu0 0.0
        %4570 = vmatpush1.xpose.msra.mxu0 0.0
        %4571 = vmatprep.subr.mxu0 0.0
        %4572 = vmatpush1.xpose.msra.mxu0 0.0
        %4573 = vmatprep.subr.mxu0 0.0
        %4574 = vmatpush1.xpose.msra.mxu0 0.0
        %4575 = vmatprep.subr.mxu0 0.0
        %4576 = vmatpush1.xpose.msra.mxu0 0.0
        %4577 = vmatprep.subr.mxu0 0.0
        %4578 = vmatpush1.xpose.msra.mxu0 0.0
        %4579 = vmatprep.subr.mxu0 0.0
        %4580 = vmatpush1.xpose.msra.mxu0 0.0
        %4581 = vmatprep.subr.mxu0 0.0
        %4582 = vmatpush1.xpose.msra.mxu0 0.0
        %4583 = vmatprep.subr.mxu0 0.0
        %4584 = vmatpush1.xpose.msra.mxu0 0.0
        %4585 = vmatprep.subr.mxu0 0.0
        %4586 = vmatpush1.xpose.msra.mxu0 0.0
        %4587 = vmatprep.subr.mxu0 0.0
        %4588 = vmatpush1.xpose.msra.mxu0 0.0
        %4589 = vmatprep.subr.mxu0 0.0
        %4590 = vmatpush1.xpose.msra.mxu0 0.0
        %4591 = vmatprep.subr.mxu0 0.0
        %4592 = vmatpush1.xpose.msra.mxu0 0.0
        %4593 = vmatprep.subr.mxu0 0.0
        %4594 = vmatpush1.xpose.msra.mxu0 0.0
        %4595 = vmatprep.subr.mxu0 0.0
        %4596 = vmatpush1.xpose.msra.mxu0 0.0
        %4597 = vmatprep.subr.mxu0 0.0
        %4598 = vmatpush1.xpose.msra.mxu0 0.0
        %4599 = vmatprep.subr.mxu0 0.0
        %4600 = vmatpush1.xpose.msra.mxu0 0.0
        %4601 = vmatprep.subr.mxu0 0.0
        %4602 = vmatpush1.xpose.msra.mxu0 0.0
        %4603 = vmatprep.subr.mxu0 0.0
        %4604 = vmatpush1.xpose.msra.mxu0 0.0
        %4605 = vmatprep.subr.mxu0 0.0
        %4606 = vmatpush1.xpose.msra.mxu0 0.0
        %4607 = vmatprep.subr.mxu0 0.0
        %4608 = vmatpush1.xpose.msra.mxu0 0.0
        %4609 = vmatprep.subr.mxu0 0.0
        %4610 = vmatpush1.xpose.msra.mxu0 0.0
        %4611 = vmatprep.subr.mxu0 0.0
        %4612 = vmatpush1.xpose.msra.mxu0 0.0
        %4613 = vmatprep.subr.mxu0 0.0
        %4614 = vmatpush1.xpose.msra.mxu0 0.0
        %4615 = vmatprep.subr.mxu0 0.0
        %4616 = vmatpush1.xpose.msra.mxu0 0.0
        %4617 = vmatprep.subr.mxu0 0.0
        %4618 = vmatpush1.xpose.msra.mxu0 0.0
        %4619 = vmatprep.subr.mxu0 0.0
        %4620 = vmatpush1.xpose.msra.mxu0 0.0
        %4621 = vmatprep.subr.mxu0 0.0
        %4622 = vmatpush1.xpose.msra.mxu0 0.0
        %4623 = vmatprep.subr.mxu0 0.0
        %4624 = vmatpush1.xpose.msra.mxu0 0.0
        %4625 = vmatprep.subr.mxu0 0.0
        %4626 = vmatpush1.xpose.msra.mxu0 0.0
        %4627 = vmatprep.subr.mxu0 0.0
        %4628 = vmatpush1.xpose.msra.mxu0 0.0
        %4629 = vmatprep.mubr.f32.mxu0 0.0
        %v4630 = vand.u32 %v4334, 4294901760
        %v4631 = vsub.f32 %v4334, %v4630
        %v4632 = vand.u32 %v4631, 4294901760
        %4633 = vmatmul.mubr.f32.gmra.mrb[0].mxu0 %v4632
        %v4634 = vpop.f32.mrb[0].mxu0
        %v4635 = vadd.f32 %v4561, %v4634
        %v4636 = vpop.f32.mrb[0].mxu0
        %4637 = vdwg.mxu0
        %4638 = vmatprep.subr.mxu0 0.0
        %v4639 = vand.u32 %v4336, 4294901760
        %v4640 = vsub.f32 %v4336, %v4639
        %v4641 = vand.u32 %v4640, 4294901760
        %4642 = vmatpush1.xpose.msra.mxu0 %v4641
        %4643 = vmatprep.subr.mxu0 0.0
        %4644 = vmatpush1.xpose.msra.mxu0 0.0
        %4645 = vmatprep.subr.mxu0 0.0
        %4646 = vmatpush1.xpose.msra.mxu0 0.0
        %4647 = vmatprep.subr.mxu0 0.0
        %4648 = vmatpush1.xpose.msra.mxu0 0.0
        %4649 = vmatprep.subr.mxu0 0.0
        %4650 = vmatpush1.xpose.msra.mxu0 0.0
        %4651 = vmatprep.subr.mxu0 0.0
        %4652 = vmatpush1.xpose.msra.mxu0 0.0
        %4653 = vmatprep.subr.mxu0 0.0
        %4654 = vmatpush1.xpose.msra.mxu0 0.0
        %4655 = vmatprep.subr.mxu0 0.0
        %4656 = vmatpush1.xpose.msra.mxu0 0.0
        %4657 = vmatprep.subr.mxu0 0.0
        %4658 = vmatpush1.xpose.msra.mxu0 0.0
        %4659 = vmatprep.subr.mxu0 0.0
        %4660 = vmatpush1.xpose.msra.mxu0 0.0
        %4661 = vmatprep.subr.mxu0 0.0
        %4662 = vmatpush1.xpose.msra.mxu0 0.0
        %4663 = vmatprep.subr.mxu0 0.0
        %4664 = vmatpush1.xpose.msra.mxu0 0.0
        %4665 = vmatprep.subr.mxu0 0.0
        %4666 = vmatpush1.xpose.msra.mxu0 0.0
        %4667 = vmatprep.subr.mxu0 0.0
        %4668 = vmatpush1.xpose.msra.mxu0 0.0
        %4669 = vmatprep.subr.mxu0 0.0
        %4670 = vmatpush1.xpose.msra.mxu0 0.0
        %4671 = vmatprep.subr.mxu0 0.0
        %4672 = vmatpush1.xpose.msra.mxu0 0.0
        %4673 = vmatprep.subr.mxu0 0.0
        %4674 = vmatpush1.xpose.msra.mxu0 0.0
        %4675 = vmatprep.subr.mxu0 0.0
        %4676 = vmatpush1.xpose.msra.mxu0 0.0
        %4677 = vmatprep.subr.mxu0 0.0
        %4678 = vmatpush1.xpose.msra.mxu0 0.0
        %4679 = vmatprep.subr.mxu0 0.0
        %4680 = vmatpush1.xpose.msra.mxu0 0.0
        %4681 = vmatprep.subr.mxu0 0.0
        %4682 = vmatpush1.xpose.msra.mxu0 0.0
        %4683 = vmatprep.subr.mxu0 0.0
        %4684 = vmatpush1.xpose.msra.mxu0 0.0
        %4685 = vmatprep.subr.mxu0 0.0
        %4686 = vmatpush1.xpose.msra.mxu0 0.0
        %4687 = vmatprep.subr.mxu0 0.0
        %4688 = vmatpush1.xpose.msra.mxu0 0.0
        %4689 = vmatprep.subr.mxu0 0.0
        %4690 = vmatpush1.xpose.msra.mxu0 0.0
        %4691 = vmatprep.subr.mxu0 0.0
        %4692 = vmatpush1.xpose.msra.mxu0 0.0
        %4693 = vmatprep.subr.mxu0 0.0
        %4694 = vmatpush1.xpose.msra.mxu0 0.0
        %4695 = vmatprep.subr.mxu0 0.0
        %4696 = vmatpush1.xpose.msra.mxu0 0.0
        %4697 = vmatprep.subr.mxu0 0.0
        %4698 = vmatpush1.xpose.msra.mxu0 0.0
        %4699 = vmatprep.subr.mxu0 0.0
        %4700 = vmatpush1.xpose.msra.mxu0 0.0
        %4701 = vmatprep.subr.mxu0 0.0
        %4702 = vmatpush1.xpose.msra.mxu0 0.0
        %4703 = vmatprep.subr.mxu0 0.0
        %4704 = vmatpush1.xpose.msra.mxu0 0.0
        %4705 = vmatprep.mubr.f32.mxu0 0.0
        %v4706 = vand.u32 %v4334, 4294901760
        %4707 = vmatmul.mubr.f32.gmra.mrb[0].mxu0 %v4706
        %v4708 = vpop.f32.mrb[0].mxu0
        %v4709 = vadd.f32 %v4635, %v4708
        %v4710 = vpop.f32.mrb[0].mxu0
        %4711 = vdwg.mxu0
        %4712 = vmatprep.subr.mxu0 0.0
        %v4713 = vand.u32 %v4336, 4294901760
        %4714 = vmatpush1.xpose.msra.mxu0 %v4713
        %4715 = vmatprep.subr.mxu0 0.0
        %4716 = vmatpush1.xpose.msra.mxu0 0.0
        %4717 = vmatprep.subr.mxu0 0.0
        %4718 = vmatpush1.xpose.msra.mxu0 0.0
        %4719 = vmatprep.subr.mxu0 0.0
        %4720 = vmatpush1.xpose.msra.mxu0 0.0
        %4721 = vmatprep.subr.mxu0 0.0
        %4722 = vmatpush1.xpose.msra.mxu0 0.0
        %4723 = vmatprep.subr.mxu0 0.0
        %4724 = vmatpush1.xpose.msra.mxu0 0.0
        %4725 = vmatprep.subr.mxu0 0.0
        %4726 = vmatpush1.xpose.msra.mxu0 0.0
        %4727 = vmatprep.subr.mxu0 0.0
        %4728 = vmatpush1.xpose.msra.mxu0 0.0
        %4729 = vmatprep.subr.mxu0 0.0
        %4730 = vmatpush1.xpose.msra.mxu0 0.0
        %4731 = vmatprep.subr.mxu0 0.0
        %4732 = vmatpush1.xpose.msra.mxu0 0.0
        %4733 = vmatprep.subr.mxu0 0.0
        %4734 = vmatpush1.xpose.msra.mxu0 0.0
        %4735 = vmatprep.subr.mxu0 0.0
        %4736 = vmatpush1.xpose.msra.mxu0 0.0
        %4737 = vmatprep.subr.mxu0 0.0
        %4738 = vmatpush1.xpose.msra.mxu0 0.0
        %4739 = vmatprep.subr.mxu0 0.0
        %4740 = vmatpush1.xpose.msra.mxu0 0.0
        %4741 = vmatprep.subr.mxu0 0.0
        %4742 = vmatpush1.xpose.msra.mxu0 0.0
        %4743 = vmatprep.subr.mxu0 0.0
        %4744 = vmatpush1.xpose.msra.mxu0 0.0
        %4745 = vmatprep.subr.mxu0 0.0
        %4746 = vmatpush1.xpose.msra.mxu0 0.0
        %4747 = vmatprep.subr.mxu0 0.0
        %4748 = vmatpush1.xpose.msra.mxu0 0.0
        %4749 = vmatprep.subr.mxu0 0.0
        %4750 = vmatpush1.xpose.msra.mxu0 0.0
        %4751 = vmatprep.subr.mxu0 0.0
        %4752 = vmatpush1.xpose.msra.mxu0 0.0
        %4753 = vmatprep.subr.mxu0 0.0
        %4754 = vmatpush1.xpose.msra.mxu0 0.0
        %4755 = vmatprep.subr.mxu0 0.0
        %4756 = vmatpush1.xpose.msra.mxu0 0.0
        %4757 = vmatprep.subr.mxu0 0.0
        %4758 = vmatpush1.xpose.msra.mxu0 0.0
        %4759 = vmatprep.subr.mxu0 0.0
        %4760 = vmatpush1.xpose.msra.mxu0 0.0
        %4761 = vmatprep.subr.mxu0 0.0
        %4762 = vmatpush1.xpose.msra.mxu0 0.0
        %4763 = vmatprep.subr.mxu0 0.0
        %4764 = vmatpush1.xpose.msra.mxu0 0.0
        %4765 = vmatprep.subr.mxu0 0.0
        %4766 = vmatpush1.xpose.msra.mxu0 0.0
        %4767 = vmatprep.subr.mxu0 0.0
        %4768 = vmatpush1.xpose.msra.mxu0 0.0
        %4769 = vmatprep.subr.mxu0 0.0
        %4770 = vmatpush1.xpose.msra.mxu0 0.0
        %4771 = vmatprep.subr.mxu0 0.0
        %4772 = vmatpush1.xpose.msra.mxu0 0.0
        %4773 = vmatprep.subr.mxu0 0.0
        %4774 = vmatpush1.xpose.msra.mxu0 0.0
        %4775 = vmatprep.subr.mxu0 0.0
        %4776 = vmatpush1.xpose.msra.mxu0 0.0
        %4777 = vmatprep.mubr.f32.mxu0 0.0
        %v4778 = vand.u32 %v4334, 4294901760
        %4779 = vmatmul.mubr.f32.gmra.mrb[0].mxu0 %v4778
        %v4780 = vpop.f32.mrb[0].mxu0
        %v4781 = vadd.f32 %v4709, %v4780
        %v4782 = vpop.f32.mrb[0].mxu0
        %4783 = vdwg.mxu0
        %v4784 = vsel %vm1562, %v4781, -inf
        %4785 = vmax.xlane.f32.xlu0 %v4784
        %v4786 = vpop.xlane.xlu0 %4785
        %v4787 = vsub.f32 %v4781, %v4786
        %v4788 = vmul.f32 %v4787, 1.442695
        %v4789 = vpow.pop %v4788
        %v4790 = vsel %vm1562, %v4789, 0.0
        %4791 = vadd.xlane.f32.xlu0 %v4790
        %v4792 = vpop.xlane.xlu0 %4791
        %v4793 = vrcp.pop %v4792
        %v4794 = vmul.f32 %v4789, %v4793
        %s4795 = scalar_lea.vmem %s549, 24 [#allocation13]
        %4796 = vst.msk [vmem:[%s4795] sm:$0xff] %vm1562, %v4794
        %4797 = vrot.lane.b32.xlu0 %v1553, 72
        %v4798 = vpop.permute.xlu0 %4797
        %v4801 = vsel %vm1562, %v4794, 0
        %4803 = vmatprep.subr.mxu0 0.0
        %v4804 = vand.u32 %v4798, 4294901760
        %4805 = vmatpush1.msra.mxu0 %v4804
        %4806 = vmatprep.subr.mxu0 0.0
        %4807 = vmatpush1.msra.mxu0 0.0
        %4808 = vmatprep.subr.mxu0 0.0
        %4809 = vmatpush1.msra.mxu0 0.0
        %4810 = vmatprep.subr.mxu0 0.0
        %4811 = vmatpush1.msra.mxu0 0.0
        %4812 = vmatprep.subr.mxu0 0.0
        %4813 = vmatpush1.msra.mxu0 0.0
        %4814 = vmatprep.subr.mxu0 0.0
        %4815 = vmatpush1.msra.mxu0 0.0
        %4816 = vmatprep.subr.mxu0 0.0
        %4817 = vmatpush1.msra.mxu0 0.0
        %4818 = vmatprep.subr.mxu0 0.0
        %4819 = vmatpush1.msra.mxu0 0.0
        %4820 = vmatprep.subr.mxu0 0.0
        %4821 = vmatpush1.msra.mxu0 0.0
        %4822 = vmatprep.subr.mxu0 0.0
        %4823 = vmatpush1.msra.mxu0 0.0
        %4824 = vmatprep.subr.mxu0 0.0
        %4825 = vmatpush1.msra.mxu0 0.0
        %4826 = vmatprep.subr.mxu0 0.0
        %4827 = vmatpush1.msra.mxu0 0.0
        %4828 = vmatprep.subr.mxu0 0.0
        %4829 = vmatpush1.msra.mxu0 0.0
        %4830 = vmatprep.subr.mxu0 0.0
        %4831 = vmatpush1.msra.mxu0 0.0
        %4832 = vmatprep.subr.mxu0 0.0
        %4833 = vmatpush1.msra.mxu0 0.0
        %4834 = vmatprep.subr.mxu0 0.0
        %4835 = vmatpush1.msra.mxu0 0.0
        %4836 = vmatprep.subr.mxu0 0.0
        %4837 = vmatpush1.msra.mxu0 0.0
        %4838 = vmatprep.subr.mxu0 0.0
        %4839 = vmatpush1.msra.mxu0 0.0
        %4840 = vmatprep.subr.mxu0 0.0
        %4841 = vmatpush1.msra.mxu0 0.0
        %4842 = vmatprep.subr.mxu0 0.0
        %4843 = vmatpush1.msra.mxu0 0.0
        %4844 = vmatprep.subr.mxu0 0.0
        %4845 = vmatpush1.msra.mxu0 0.0
        %4846 = vmatprep.subr.mxu0 0.0
        %4847 = vmatpush1.msra.mxu0 0.0
        %4848 = vmatprep.subr.mxu0 0.0
        %4849 = vmatpush1.msra.mxu0 0.0
        %4850 = vmatprep.subr.mxu0 0.0
        %4851 = vmatpush1.msra.mxu0 0.0
        %4852 = vmatprep.subr.mxu0 0.0
        %4853 = vmatpush1.msra.mxu0 0.0
        %4854 = vmatprep.subr.mxu0 0.0
        %4855 = vmatpush1.msra.mxu0 0.0
        %4856 = vmatprep.subr.mxu0 0.0
        %4857 = vmatpush1.msra.mxu0 0.0
        %4858 = vmatprep.subr.mxu0 0.0
        %4859 = vmatpush1.msra.mxu0 0.0
        %4860 = vmatprep.subr.mxu0 0.0
        %4861 = vmatpush1.msra.mxu0 0.0
        %4862 = vmatprep.subr.mxu0 0.0
        %4863 = vmatpush1.msra.mxu0 0.0
        %4864 = vmatprep.subr.mxu0 0.0
        %4865 = vmatpush1.msra.mxu0 0.0
        %4866 = vmatprep.subr.mxu0 0.0
        %4867 = vmatpush1.msra.mxu0 0.0
        %4868 = vmatprep.mubr.f32.mxu0 0.0
        %v4869 = vand.u32 %v4801, 4294901760
        %v4870 = vsub.f32 %v4801, %v4869
        %v4871 = vand.u32 %v4870, 4294901760
        %v4872 = vsub.f32 %v4870, %v4871
        %v4873 = vand.u32 %v4872, 4294901760
        %4874 = vmatmul.mubr.f32.gmra.mrb[0].mxu0 %v4873
        %v4875 = vpop.f32.mrb[0].mxu0
        %v4876 = vadd.f32 0.0, %v4875
        %v4877 = vpop.f32.mrb[0].mxu0
        %4878 = vdwg.mxu0
        %4879 = vmatprep.subr.mxu0 0.0
        %v4880 = vand.u32 %v4798, 4294901760
        %v4881 = vsub.f32 %v4798, %v4880
        %v4882 = vand.u32 %v4881, 4294901760
        %v4883 = vsub.f32 %v4881, %v4882
        %v4884 = vand.u32 %v4883, 4294901760
        %4885 = vmatpush1.msra.mxu0 %v4884
        %4886 = vmatprep.subr.mxu0 0.0
        %4887 = vmatpush1.msra.mxu0 0.0
        %4888 = vmatprep.subr.mxu0 0.0
        %4889 = vmatpush1.msra.mxu0 0.0
        %4890 = vmatprep.subr.mxu0 0.0
        %4891 = vmatpush1.msra.mxu0 0.0
        %4892 = vmatprep.subr.mxu0 0.0
        %4893 = vmatpush1.msra.mxu0 0.0
        %4894 = vmatprep.subr.mxu0 0.0
        %4895 = vmatpush1.msra.mxu0 0.0
        %4896 = vmatprep.subr.mxu0 0.0
        %4897 = vmatpush1.msra.mxu0 0.0
        %4898 = vmatprep.subr.mxu0 0.0
        %4899 = vmatpush1.msra.mxu0 0.0
        %4900 = vmatprep.subr.mxu0 0.0
        %4901 = vmatpush1.msra.mxu0 0.0
        %4902 = vmatprep.subr.mxu0 0.0
        %4903 = vmatpush1.msra.mxu0 0.0
        %4904 = vmatprep.subr.mxu0 0.0
        %4905 = vmatpush1.msra.mxu0 0.0
        %4906 = vmatprep.subr.mxu0 0.0
        %4907 = vmatpush1.msra.mxu0 0.0
        %4908 = vmatprep.subr.mxu0 0.0
        %4909 = vmatpush1.msra.mxu0 0.0
        %4910 = vmatprep.subr.mxu0 0.0
        %4911 = vmatpush1.msra.mxu0 0.0
        %4912 = vmatprep.subr.mxu0 0.0
        %4913 = vmatpush1.msra.mxu0 0.0
        %4914 = vmatprep.subr.mxu0 0.0
        %4915 = vmatpush1.msra.mxu0 0.0
        %4916 = vmatprep.subr.mxu0 0.0
        %4917 = vmatpush1.msra.mxu0 0.0
        %4918 = vmatprep.subr.mxu0 0.0
        %4919 = vmatpush1.msra.mxu0 0.0
        %4920 = vmatprep.subr.mxu0 0.0
        %4921 = vmatpush1.msra.mxu0 0.0
        %4922 = vmatprep.subr.mxu0 0.0
        %4923 = vmatpush1.msra.mxu0 0.0
        %4924 = vmatprep.subr.mxu0 0.0
        %4925 = vmatpush1.msra.mxu0 0.0
        %4926 = vmatprep.subr.mxu0 0.0
        %4927 = vmatpush1.msra.mxu0 0.0
        %4928 = vmatprep.subr.mxu0 0.0
        %4929 = vmatpush1.msra.mxu0 0.0
        %4930 = vmatprep.subr.mxu0 0.0
        %4931 = vmatpush1.msra.mxu0 0.0
        %4932 = vmatprep.subr.mxu0 0.0
        %4933 = vmatpush1.msra.mxu0 0.0
        %4934 = vmatprep.subr.mxu0 0.0
        %4935 = vmatpush1.msra.mxu0 0.0
        %4936 = vmatprep.subr.mxu0 0.0
        %4937 = vmatpush1.msra.mxu0 0.0
        %4938 = vmatprep.subr.mxu0 0.0
        %4939 = vmatpush1.msra.mxu0 0.0
        %4940 = vmatprep.subr.mxu0 0.0
        %4941 = vmatpush1.msra.mxu0 0.0
        %4942 = vmatprep.subr.mxu0 0.0
        %4943 = vmatpush1.msra.mxu0 0.0
        %4944 = vmatprep.subr.mxu0 0.0
        %4945 = vmatpush1.msra.mxu0 0.0
        %4946 = vmatprep.subr.mxu0 0.0
        %4947 = vmatpush1.msra.mxu0 0.0
        %4948 = vmatprep.mubr.f32.mxu0 0.0
        %v4949 = vand.u32 %v4801, 4294901760
        %4950 = vmatmul.mubr.f32.gmra.mrb[0].mxu0 %v4949
        %v4951 = vpop.f32.mrb[0].mxu0
        %v4952 = vadd.f32 %v4876, %v4951
        %v4953 = vpop.f32.mrb[0].mxu0
        %4954 = vdwg.mxu0
        %4955 = vmatprep.subr.mxu0 0.0
        %v4956 = vand.u32 %v4798, 4294901760
        %v4957 = vsub.f32 %v4798, %v4956
        %4958 = vmatpush1.msra.mxu0 %v4957
        %4959 = vmatprep.subr.mxu0 0.0
        %4960 = vmatpush1.msra.mxu0 0.0
        %4961 = vmatprep.subr.mxu0 0.0
        %4962 = vmatpush1.msra.mxu0 0.0
        %4963 = vmatprep.subr.mxu0 0.0
        %4964 = vmatpush1.msra.mxu0 0.0
        %4965 = vmatprep.subr.mxu0 0.0
        %4966 = vmatpush1.msra.mxu0 0.0
        %4967 = vmatprep.subr.mxu0 0.0
        %4968 = vmatpush1.msra.mxu0 0.0
        %4969 = vmatprep.subr.mxu0 0.0
        %4970 = vmatpush1.msra.mxu0 0.0
        %4971 = vmatprep.subr.mxu0 0.0
        %4972 = vmatpush1.msra.mxu0 0.0
        %4973 = vmatprep.subr.mxu0 0.0
        %4974 = vmatpush1.msra.mxu0 0.0
        %4975 = vmatprep.subr.mxu0 0.0
        %4976 = vmatpush1.msra.mxu0 0.0
        %4977 = vmatprep.subr.mxu0 0.0
        %4978 = vmatpush1.msra.mxu0 0.0
        %4979 = vmatprep.subr.mxu0 0.0
        %4980 = vmatpush1.msra.mxu0 0.0
        %4981 = vmatprep.subr.mxu0 0.0
        %4982 = vmatpush1.msra.mxu0 0.0
        %4983 = vmatprep.subr.mxu0 0.0
        %4984 = vmatpush1.msra.mxu0 0.0
        %4985 = vmatprep.subr.mxu0 0.0
        %4986 = vmatpush1.msra.mxu0 0.0
        %4987 = vmatprep.subr.mxu0 0.0
        %4988 = vmatpush1.msra.mxu0 0.0
        %4989 = vmatprep.subr.mxu0 0.0
        %4990 = vmatpush1.msra.mxu0 0.0
        %4991 = vmatprep.subr.mxu0 0.0
        %4992 = vmatpush1.msra.mxu0 0.0
        %4993 = vmatprep.subr.mxu0 0.0
        %4994 = vmatpush1.msra.mxu0 0.0
        %4995 = vmatprep.subr.mxu0 0.0
        %4996 = vmatpush1.msra.mxu0 0.0
        %4997 = vmatprep.subr.mxu0 0.0
        %4998 = vmatpush1.msra.mxu0 0.0
        %4999 = vmatprep.subr.mxu0 0.0
        %5000 = vmatpush1.msra.mxu0 0.0
        %5001 = vmatprep.subr.mxu0 0.0
        %5002 = vmatpush1.msra.mxu0 0.0
        %5003 = vmatprep.subr.mxu0 0.0
        %5004 = vmatpush1.msra.mxu0 0.0
        %5005 = vmatprep.subr.mxu0 0.0
        %5006 = vmatpush1.msra.mxu0 0.0
        %5007 = vmatprep.subr.mxu0 0.0
        %5008 = vmatpush1.msra.mxu0 0.0
        %5009 = vmatprep.subr.mxu0 0.0
        %5010 = vmatpush1.msra.mxu0 0.0
        %5011 = vmatprep.subr.mxu0 0.0
        %5012 = vmatpush1.msra.mxu0 0.0
        %5013 = vmatprep.subr.mxu0 0.0
        %5014 = vmatpush1.msra.mxu0 0.0
        %5015 = vmatprep.subr.mxu0 0.0
        %5016 = vmatpush1.msra.mxu0 0.0
        %5017 = vmatprep.subr.mxu0 0.0
        %5018 = vmatpush1.msra.mxu0 0.0
        %5019 = vmatprep.subr.mxu0 0.0
        %5020 = vmatpush1.msra.mxu0 0.0
        %5021 = vmatprep.mubr.f32.mxu0 0.0
        %v5022 = vand.u32 %v4801, 4294901760
        %v5023 = vsub.f32 %v4801, %v5022
        %5024 = vmatmul.mubr.f32.gmra.mrb[0].mxu0 %v5023
        %v5025 = vpop.f32.mrb[0].mxu0
        %v5026 = vadd.f32 %v4952, %v5025
        %v5027 = vpop.f32.mrb[0].mxu0
        %5028 = vdwg.mxu0
        %5029 = vmatprep.subr.mxu0 0.0
        %v5030 = vand.u32 %v4798, 4294901760
        %5031 = vmatpush1.msra.mxu0 %v5030
        %5032 = vmatprep.subr.mxu0 0.0
        %5033 = vmatpush1.msra.mxu0 0.0
        %5034 = vmatprep.subr.mxu0 0.0
        %5035 = vmatpush1.msra.mxu0 0.0
        %5036 = vmatprep.subr.mxu0 0.0
        %5037 = vmatpush1.msra.mxu0 0.0
        %5038 = vmatprep.subr.mxu0 0.0
        %5039 = vmatpush1.msra.mxu0 0.0
        %5040 = vmatprep.subr.mxu0 0.0
        %5041 = vmatpush1.msra.mxu0 0.0
        %5042 = vmatprep.subr.mxu0 0.0
        %5043 = vmatpush1.msra.mxu0 0.0
        %5044 = vmatprep.subr.mxu0 0.0
        %5045 = vmatpush1.msra.mxu0 0.0
        %5046 = vmatprep.subr.mxu0 0.0
        %5047 = vmatpush1.msra.mxu0 0.0
        %5048 = vmatprep.subr.mxu0 0.0
        %5049 = vmatpush1.msra.mxu0 0.0
        %5050 = vmatprep.subr.mxu0 0.0
        %5051 = vmatpush1.msra.mxu0 0.0
        %5052 = vmatprep.subr.mxu0 0.0
        %5053 = vmatpush1.msra.mxu0 0.0
        %5054 = vmatprep.subr.mxu0 0.0
        %5055 = vmatpush1.msra.mxu0 0.0
        %5056 = vmatprep.subr.mxu0 0.0
        %5057 = vmatpush1.msra.mxu0 0.0
        %5058 = vmatprep.subr.mxu0 0.0
        %5059 = vmatpush1.msra.mxu0 0.0
        %5060 = vmatprep.subr.mxu0 0.0
        %5061 = vmatpush1.msra.mxu0 0.0
        %5062 = vmatprep.subr.mxu0 0.0
        %5063 = vmatpush1.msra.mxu0 0.0
        %5064 = vmatprep.subr.mxu0 0.0
        %5065 = vmatpush1.msra.mxu0 0.0
        %5066 = vmatprep.subr.mxu0 0.0
        %5067 = vmatpush1.msra.mxu0 0.0
        %5068 = vmatprep.subr.mxu0 0.0
        %5069 = vmatpush1.msra.mxu0 0.0
        %5070 = vmatprep.subr.mxu0 0.0
        %5071 = vmatpush1.msra.mxu0 0.0
        %5072 = vmatprep.subr.mxu0 0.0
        %5073 = vmatpush1.msra.mxu0 0.0
        %5074 = vmatprep.subr.mxu0 0.0
        %5075 = vmatpush1.msra.mxu0 0.0
        %5076 = vmatprep.subr.mxu0 0.0
        %5077 = vmatpush1.msra.mxu0 0.0
        %5078 = vmatprep.subr.mxu0 0.0
        %5079 = vmatpush1.msra.mxu0 0.0
        %5080 = vmatprep.subr.mxu0 0.0
        %5081 = vmatpush1.msra.mxu0 0.0
        %5082 = vmatprep.subr.mxu0 0.0
        %5083 = vmatpush1.msra.mxu0 0.0
        %5084 = vmatprep.subr.mxu0 0.0
        %5085 = vmatpush1.msra.mxu0 0.0
        %5086 = vmatprep.subr.mxu0 0.0
        %5087 = vmatpush1.msra.mxu0 0.0
        %5088 = vmatprep.subr.mxu0 0.0
        %5089 = vmatpush1.msra.mxu0 0.0
        %5090 = vmatprep.subr.mxu0 0.0
        %5091 = vmatpush1.msra.mxu0 0.0
        %5092 = vmatprep.subr.mxu0 0.0
        %5093 = vmatpush1.msra.mxu0 0.0
        %5094 = vmatprep.mubr.f32.mxu0 0.0
        %v5095 = vand.u32 %v4801, 4294901760
        %v5096 = vsub.f32 %v4801, %v5095
        %v5097 = vand.u32 %v5096, 4294901760
        %5098 = vmatmul.mubr.f32.gmra.mrb[0].mxu0 %v5097
        %v5099 = vpop.f32.mrb[0].mxu0
        %v5100 = vadd.f32 %v5026, %v5099
        %v5101 = vpop.f32.mrb[0].mxu0
        %5102 = vdwg.mxu0
        %5103 = vmatprep.subr.mxu0 0.0
        %v5104 = vand.u32 %v4798, 4294901760
        %v5105 = vsub.f32 %v4798, %v5104
        %v5106 = vand.u32 %v5105, 4294901760
        %5107 = vmatpush1.msra.mxu0 %v5106
        %5108 = vmatprep.subr.mxu0 0.0
        %5109 = vmatpush1.msra.mxu0 0.0
        %5110 = vmatprep.subr.mxu0 0.0
        %5111 = vmatpush1.msra.mxu0 0.0
        %5112 = vmatprep.subr.mxu0 0.0
        %5113 = vmatpush1.msra.mxu0 0.0
        %5114 = vmatprep.subr.mxu0 0.0
        %5115 = vmatpush1.msra.mxu0 0.0
        %5116 = vmatprep.subr.mxu0 0.0
        %5117 = vmatpush1.msra.mxu0 0.0
        %5118 = vmatprep.subr.mxu0 0.0
        %5119 = vmatpush1.msra.mxu0 0.0
        %5120 = vmatprep.subr.mxu0 0.0
        %5121 = vmatpush1.msra.mxu0 0.0
        %5122 = vmatprep.subr.mxu0 0.0
        %5123 = vmatpush1.msra.mxu0 0.0
        %5124 = vmatprep.subr.mxu0 0.0
        %5125 = vmatpush1.msra.mxu0 0.0
        %5126 = vmatprep.subr.mxu0 0.0
        %5127 = vmatpush1.msra.mxu0 0.0
        %5128 = vmatprep.subr.mxu0 0.0
        %5129 = vmatpush1.msra.mxu0 0.0
        %5130 = vmatprep.subr.mxu0 0.0
        %5131 = vmatpush1.msra.mxu0 0.0
        %5132 = vmatprep.subr.mxu0 0.0
        %5133 = vmatpush1.msra.mxu0 0.0
        %5134 = vmatprep.subr.mxu0 0.0
        %5135 = vmatpush1.msra.mxu0 0.0
        %5136 = vmatprep.subr.mxu0 0.0
        %5137 = vmatpush1.msra.mxu0 0.0
        %5138 = vmatprep.subr.mxu0 0.0
        %5139 = vmatpush1.msra.mxu0 0.0
        %5140 = vmatprep.subr.mxu0 0.0
        %5141 = vmatpush1.msra.mxu0 0.0
        %5142 = vmatprep.subr.mxu0 0.0
        %5143 = vmatpush1.msra.mxu0 0.0
        %5144 = vmatprep.subr.mxu0 0.0
        %5145 = vmatpush1.msra.mxu0 0.0
        %5146 = vmatprep.subr.mxu0 0.0
        %5147 = vmatpush1.msra.mxu0 0.0
        %5148 = vmatprep.subr.mxu0 0.0
        %5149 = vmatpush1.msra.mxu0 0.0
        %5150 = vmatprep.subr.mxu0 0.0
        %5151 = vmatpush1.msra.mxu0 0.0
        %5152 = vmatprep.subr.mxu0 0.0
        %5153 = vmatpush1.msra.mxu0 0.0
        %5154 = vmatprep.subr.mxu0 0.0
        %5155 = vmatpush1.msra.mxu0 0.0
        %5156 = vmatprep.subr.mxu0 0.0
        %5157 = vmatpush1.msra.mxu0 0.0
        %5158 = vmatprep.subr.mxu0 0.0
        %5159 = vmatpush1.msra.mxu0 0.0
        %5160 = vmatprep.subr.mxu0 0.0
        %5161 = vmatpush1.msra.mxu0 0.0
        %5162 = vmatprep.subr.mxu0 0.0
        %5163 = vmatpush1.msra.mxu0 0.0
        %5164 = vmatprep.subr.mxu0 0.0
        %5165 = vmatpush1.msra.mxu0 0.0
        %5166 = vmatprep.subr.mxu0 0.0
        %5167 = vmatpush1.msra.mxu0 0.0
        %5168 = vmatprep.subr.mxu0 0.0
        %5169 = vmatpush1.msra.mxu0 0.0
        %5170 = vmatprep.mubr.f32.mxu0 0.0
        %v5171 = vand.u32 %v4801, 4294901760
        %5172 = vmatmul.mubr.f32.gmra.mrb[0].mxu0 %v5171
        %v5173 = vpop.f32.mrb[0].mxu0
        %v5174 = vadd.f32 %v5100, %v5173
        %v5175 = vpop.f32.mrb[0].mxu0
        %5176 = vdwg.mxu0
        %5177 = vmatprep.subr.mxu0 0.0
        %v5178 = vand.u32 %v4798, 4294901760
        %5179 = vmatpush1.msra.mxu0 %v5178
        %5180 = vmatprep.subr.mxu0 0.0
        %5181 = vmatpush1.msra.mxu0 0.0
        %5182 = vmatprep.subr.mxu0 0.0
        %5183 = vmatpush1.msra.mxu0 0.0
        %5184 = vmatprep.subr.mxu0 0.0
        %5185 = vmatpush1.msra.mxu0 0.0
        %5186 = vmatprep.subr.mxu0 0.0
        %5187 = vmatpush1.msra.mxu0 0.0
        %5188 = vmatprep.subr.mxu0 0.0
        %5189 = vmatpush1.msra.mxu0 0.0
        %5190 = vmatprep.subr.mxu0 0.0
        %5191 = vmatpush1.msra.mxu0 0.0
        %5192 = vmatprep.subr.mxu0 0.0
        %5193 = vmatpush1.msra.mxu0 0.0
        %5194 = vmatprep.subr.mxu0 0.0
        %5195 = vmatpush1.msra.mxu0 0.0
        %5196 = vmatprep.subr.mxu0 0.0
        %5197 = vmatpush1.msra.mxu0 0.0
        %5198 = vmatprep.subr.mxu0 0.0
        %5199 = vmatpush1.msra.mxu0 0.0
        %5200 = vmatprep.subr.mxu0 0.0
        %5201 = vmatpush1.msra.mxu0 0.0
        %5202 = vmatprep.subr.mxu0 0.0
        %5203 = vmatpush1.msra.mxu0 0.0
        %5204 = vmatprep.subr.mxu0 0.0
        %5205 = vmatpush1.msra.mxu0 0.0
        %5206 = vmatprep.subr.mxu0 0.0
        %5207 = vmatpush1.msra.mxu0 0.0
        %5208 = vmatprep.subr.mxu0 0.0
        %5209 = vmatpush1.msra.mxu0 0.0
        %5210 = vmatprep.subr.mxu0 0.0
        %5211 = vmatpush1.msra.mxu0 0.0
        %5212 = vmatprep.subr.mxu0 0.0
        %5213 = vmatpush1.msra.mxu0 0.0
        %5214 = vmatprep.subr.mxu0 0.0
        %5215 = vmatpush1.msra.mxu0 0.0
        %5216 = vmatprep.subr.mxu0 0.0
        %5217 = vmatpush1.msra.mxu0 0.0
        %5218 = vmatprep.subr.mxu0 0.0
        %5219 = vmatpush1.msra.mxu0 0.0
        %5220 = vmatprep.subr.mxu0 0.0
        %5221 = vmatpush1.msra.mxu0 0.0
        %5222 = vmatprep.subr.mxu0 0.0
        %5223 = vmatpush1.msra.mxu0 0.0
        %5224 = vmatprep.subr.mxu0 0.0
        %5225 = vmatpush1.msra.mxu0 0.0
        %5226 = vmatprep.subr.mxu0 0.0
        %5227 = vmatpush1.msra.mxu0 0.0
        %5228 = vmatprep.subr.mxu0 0.0
        %5229 = vmatpush1.msra.mxu0 0.0
        %5230 = vmatprep.subr.mxu0 0.0
        %5231 = vmatpush1.msra.mxu0 0.0
        %5232 = vmatprep.subr.mxu0 0.0
        %5233 = vmatpush1.msra.mxu0 0.0
        %5234 = vmatprep.subr.mxu0 0.0
        %5235 = vmatpush1.msra.mxu0 0.0
        %5236 = vmatprep.subr.mxu0 0.0
        %5237 = vmatpush1.msra.mxu0 0.0
        %5238 = vmatprep.subr.mxu0 0.0
        %5239 = vmatpush1.msra.mxu0 0.0
        %5240 = vmatprep.subr.mxu0 0.0
        %5241 = vmatpush1.msra.mxu0 0.0
        %5242 = vmatprep.mubr.f32.mxu0 0.0
        %v5243 = vand.u32 %v4801, 4294901760
        %5244 = vmatmul.mubr.f32.gmra.mrb[0].mxu0 %v5243
        %v5245 = vpop.f32.mrb[0].mxu0
        %v5246 = vadd.f32 %v5174, %v5245
        %v5247 = vpop.f32.mrb[0].mxu0
        %5248 = vdwg.mxu0
        %5250 = vrot.lane.b32.xlu0 %v5246, 24
        %v5251 = vpop.permute.xlu0 %5250
        %vm5253 = vcmask 261312
        %5254 = vst.msk [vmem:[#allocation2] sm:$0xff] %vm5253, %v5251
        %v5255 = vld [vmem:[#allocation2] sm:$0xff]
        %v5256 = vld [vmem:[#allocation11] sm:$0xff]
        %v5257 = vld [vmem:[#allocation11 + $0x8] sm:$0xff]
        %v5258 = vld [vmem:[#allocation11 + $0x10] sm:$0xff]
        %v5259 = vld [vmem:[#allocation11 + $0x18] sm:$0xff]
        %v5260 = vld [vmem:[%s8] sm:$0x1]
        %v5262 = vlaneseq
        %v5263 = vshrl.u32 %v5262, 7
        %v5264 = vsub.s32 0, %v5263
        %v5265 = vrot.slane %v5260, %v5264
        %v5268 = vsel %vm567, %v5255, 0
        %5270 = vmatprep.subr.mxu0 0.0
        %v5271 = vand.u32 %v5256, 4294901760
        %5272 = vmatpush1.msra.mxu0 %v5271
        %5273 = vmatprep.subr.mxu0 0.0
        %v5274 = vand.u32 %v5257, 4294901760
        %5275 = vmatpush1.msra.mxu0 %v5274
        %5276 = vmatprep.subr.mxu0 0.0
        %v5277 = vand.u32 %v5258, 4294901760
        %5278 = vmatpush1.msra.mxu0 %v5277
        %5279 = vmatprep.subr.mxu0 0.0
        %v5280 = vand.u32 %v5259, 4294901760
        %5281 = vmatpush1.msra.mxu0 %v5280
        %5282 = vmatprep.subr.mxu0 0.0
        %5283 = vmatpush1.msra.mxu0 0.0
        %5284 = vmatprep.subr.mxu0 0.0
        %5285 = vmatpush1.msra.mxu0 0.0
        %5286 = vmatprep.subr.mxu0 0.0
        %5287 = vmatpush1.msra.mxu0 0.0
        %5288 = vmatprep.subr.mxu0 0.0
        %5289 = vmatpush1.msra.mxu0 0.0
        %5290 = vmatprep.subr.mxu0 0.0
        %5291 = vmatpush1.msra.mxu0 0.0
        %5292 = vmatprep.subr.mxu0 0.0
        %5293 = vmatpush1.msra.mxu0 0.0
        %5294 = vmatprep.subr.mxu0 0.0
        %5295 = vmatpush1.msra.mxu0 0.0
        %5296 = vmatprep.subr.mxu0 0.0
        %5297 = vmatpush1.msra.mxu0 0.0
        %5298 = vmatprep.subr.mxu0 0.0
        %5299 = vmatpush1.msra.mxu0 0.0
        %5300 = vmatprep.subr.mxu0 0.0
        %5301 = vmatpush1.msra.mxu0 0.0
        %5302 = vmatprep.subr.mxu0 0.0
        %5303 = vmatpush1.msra.mxu0 0.0
        %5304 = vmatprep.subr.mxu0 0.0
        %5305 = vmatpush1.msra.mxu0 0.0
        %5306 = vmatprep.subr.mxu0 0.0
        %5307 = vmatpush1.msra.mxu0 0.0
        %5308 = vmatprep.subr.mxu0 0.0
        %5309 = vmatpush1.msra.mxu0 0.0
        %5310 = vmatprep.subr.mxu0 0.0
        %5311 = vmatpush1.msra.mxu0 0.0
        %5312 = vmatprep.subr.mxu0 0.0
        %5313 = vmatpush1.msra.mxu0 0.0
        %5314 = vmatprep.subr.mxu0 0.0
        %5315 = vmatpush1.msra.mxu0 0.0
        %5316 = vmatprep.subr.mxu0 0.0
        %5317 = vmatpush1.msra.mxu0 0.0
        %5318 = vmatprep.subr.mxu0 0.0
        %5319 = vmatpush1.msra.mxu0 0.0
        %5320 = vmatprep.subr.mxu0 0.0
        %5321 = vmatpush1.msra.mxu0 0.0
        %5322 = vmatprep.subr.mxu0 0.0
        %5323 = vmatpush1.msra.mxu0 0.0
        %5324 = vmatprep.subr.mxu0 0.0
        %5325 = vmatpush1.msra.mxu0 0.0
        %5326 = vmatprep.subr.mxu0 0.0
        %5327 = vmatpush1.msra.mxu0 0.0
        %5328 = vmatprep.subr.mxu0 0.0
        %5329 = vmatpush1.msra.mxu0 0.0
        %5330 = vmatprep.subr.mxu0 0.0
        %5331 = vmatpush1.msra.mxu0 0.0
        %5332 = vmatprep.subr.mxu0 0.0
        %5333 = vmatpush1.msra.mxu0 0.0
        %5334 = vmatprep.subr.mxu0 0.0
        %5335 = vmatpush1.msra.mxu0 0.0
        %5336 = vmatprep.subr.mxu0 0.0
        %5337 = vmatpush1.msra.mxu0 0.0
        %5338 = vmatprep.mubr.f32.mxu0 0.0
        %v5339 = vand.u32 %v5268, 4294901760
        %v5340 = vsub.f32 %v5268, %v5339
        %v5341 = vand.u32 %v5340, 4294901760
        %v5342 = vsub.f32 %v5340, %v5341
        %v5343 = vand.u32 %v5342, 4294901760
        %5344 = vmatmul.mubr.f32.gmra.mrb[0].mxu0 %v5343
        %v5345 = vpop.f32.mrb[0].mxu0
        %v5346 = vadd.f32 %v5265, %v5345
        %v5347 = vpop.f32.mrb[0].mxu0
        %5348 = vdwg.mxu0
        %5349 = vmatprep.subr.mxu0 0.0
        %v5350 = vand.u32 %v5256, 4294901760
        %v5351 = vsub.f32 %v5256, %v5350
        %v5352 = vand.u32 %v5351, 4294901760
        %v5353 = vsub.f32 %v5351, %v5352
        %v5354 = vand.u32 %v5353, 4294901760
        %5355 = vmatpush1.msra.mxu0 %v5354
        %5356 = vmatprep.subr.mxu0 0.0
        %v5357 = vand.u32 %v5257, 4294901760
        %v5358 = vsub.f32 %v5257, %v5357
        %v5359 = vand.u32 %v5358, 4294901760
        %v5360 = vsub.f32 %v5358, %v5359
        %v5361 = vand.u32 %v5360, 4294901760
        %5362 = vmatpush1.msra.mxu0 %v5361
        %5363 = vmatprep.subr.mxu0 0.0
        %v5364 = vand.u32 %v5258, 4294901760
        %v5365 = vsub.f32 %v5258, %v5364
        %v5366 = vand.u32 %v5365, 4294901760
        %v5367 = vsub.f32 %v5365, %v5366
        %v5368 = vand.u32 %v5367, 4294901760
        %5369 = vmatpush1.msra.mxu0 %v5368
        %5370 = vmatprep.subr.mxu0 0.0
        %v5371 = vand.u32 %v5259, 4294901760
        %v5372 = vsub.f32 %v5259, %v5371
        %v5373 = vand.u32 %v5372, 4294901760
        %v5374 = vsub.f32 %v5372, %v5373
        %v5375 = vand.u32 %v5374, 4294901760
        %5376 = vmatpush1.msra.mxu0 %v5375
        %5377 = vmatprep.subr.mxu0 0.0
        %5378 = vmatpush1.msra.mxu0 0.0
        %5379 = vmatprep.subr.mxu0 0.0
        %5380 = vmatpush1.msra.mxu0 0.0
        %5381 = vmatprep.subr.mxu0 0.0
        %5382 = vmatpush1.msra.mxu0 0.0
        %5383 = vmatprep.subr.mxu0 0.0
        %5384 = vmatpush1.msra.mxu0 0.0
        %5385 = vmatprep.subr.mxu0 0.0
        %5386 = vmatpush1.msra.mxu0 0.0
        %5387 = vmatprep.subr.mxu0 0.0
        %5388 = vmatpush1.msra.mxu0 0.0
        %5389 = vmatprep.subr.mxu0 0.0
        %5390 = vmatpush1.msra.mxu0 0.0
        %5391 = vmatprep.subr.mxu0 0.0
        %5392 = vmatpush1.msra.mxu0 0.0
        %5393 = vmatprep.subr.mxu0 0.0
        %5394 = vmatpush1.msra.mxu0 0.0
        %5395 = vmatprep.subr.mxu0 0.0
        %5396 = vmatpush1.msra.mxu0 0.0
        %5397 = vmatprep.subr.mxu0 0.0
        %5398 = vmatpush1.msra.mxu0 0.0
        %5399 = vmatprep.subr.mxu0 0.0
        %5400 = vmatpush1.msra.mxu0 0.0
        %5401 = vmatprep.subr.mxu0 0.0
        %5402 = vmatpush1.msra.mxu0 0.0
        %5403 = vmatprep.subr.mxu0 0.0
        %5404 = vmatpush1.msra.mxu0 0.0
        %5405 = vmatprep.subr.mxu0 0.0
        %5406 = vmatpush1.msra.mxu0 0.0
        %5407 = vmatprep.subr.mxu0 0.0
        %5408 = vmatpush1.msra.mxu0 0.0
        %5409 = vmatprep.subr.mxu0 0.0
        %5410 = vmatpush1.msra.mxu0 0.0
        %5411 = vmatprep.subr.mxu0 0.0
        %5412 = vmatpush1.msra.mxu0 0.0
        %5413 = vmatprep.subr.mxu0 0.0
        %5414 = vmatpush1.msra.mxu0 0.0
        %5415 = vmatprep.subr.mxu0 0.0
        %5416 = vmatpush1.msra.mxu0 0.0
        %5417 = vmatprep.subr.mxu0 0.0
        %5418 = vmatpush1.msra.mxu0 0.0
        %5419 = vmatprep.subr.mxu0 0.0
        %5420 = vmatpush1.msra.mxu0 0.0
        %5421 = vmatprep.subr.mxu0 0.0
        %5422 = vmatpush1.msra.mxu0 0.0
        %5423 = vmatprep.subr.mxu0 0.0
        %5424 = vmatpush1.msra.mxu0 0.0
        %5425 = vmatprep.subr.mxu0 0.0
        %5426 = vmatpush1.msra.mxu0 0.0
        %5427 = vmatprep.subr.mxu0 0.0
        %5428 = vmatpush1.msra.mxu0 0.0
        %5429 = vmatprep.subr.mxu0 0.0
        %5430 = vmatpush1.msra.mxu0 0.0
        %5431 = vmatprep.subr.mxu0 0.0
        %5432 = vmatpush1.msra.mxu0 0.0
        %5433 = vmatprep.mubr.f32.mxu0 0.0
        %v5434 = vand.u32 %v5268, 4294901760
        %5435 = vmatmul.mubr.f32.gmra.mrb[0].mxu0 %v5434
        %v5436 = vpop.f32.mrb[0].mxu0
        %v5437 = vadd.f32 %v5346, %v5436
        %v5438 = vpop.f32.mrb[0].mxu0
        %5439 = vdwg.mxu0
        %5440 = vmatprep.subr.mxu0 0.0
        %v5441 = vand.u32 %v5256, 4294901760
        %v5442 = vsub.f32 %v5256, %v5441
        %5443 = vmatpush1.msra.mxu0 %v5442
        %5444 = vmatprep.subr.mxu0 0.0
        %v5445 = vand.u32 %v5257, 4294901760
        %v5446 = vsub.f32 %v5257, %v5445
        %5447 = vmatpush1.msra.mxu0 %v5446
        %5448 = vmatprep.subr.mxu0 0.0
        %v5449 = vand.u32 %v5258, 4294901760
        %v5450 = vsub.f32 %v5258, %v5449
        %5451 = vmatpush1.msra.mxu0 %v5450
        %5452 = vmatprep.subr.mxu0 0.0
        %v5453 = vand.u32 %v5259, 4294901760
        %v5454 = vsub.f32 %v5259, %v5453
        %5455 = vmatpush1.msra.mxu0 %v5454
        %5456 = vmatprep.subr.mxu0 0.0
        %5457 = vmatpush1.msra.mxu0 0.0
        %5458 = vmatprep.subr.mxu0 0.0
        %5459 = vmatpush1.msra.mxu0 0.0
        %5460 = vmatprep.subr.mxu0 0.0
        %5461 = vmatpush1.msra.mxu0 0.0
        %5462 = vmatprep.subr.mxu0 0.0
        %5463 = vmatpush1.msra.mxu0 0.0
        %5464 = vmatprep.subr.mxu0 0.0
        %5465 = vmatpush1.msra.mxu0 0.0
        %5466 = vmatprep.subr.mxu0 0.0
        %5467 = vmatpush1.msra.mxu0 0.0
        %5468 = vmatprep.subr.mxu0 0.0
        %5469 = vmatpush1.msra.mxu0 0.0
        %5470 = vmatprep.subr.mxu0 0.0
        %5471 = vmatpush1.msra.mxu0 0.0
        %5472 = vmatprep.subr.mxu0 0.0
        %5473 = vmatpush1.msra.mxu0 0.0
        %5474 = vmatprep.subr.mxu0 0.0
        %5475 = vmatpush1.msra.mxu0 0.0
        %5476 = vmatprep.subr.mxu0 0.0
        %5477 = vmatpush1.msra.mxu0 0.0
        %5478 = vmatprep.subr.mxu0 0.0
        %5479 = vmatpush1.msra.mxu0 0.0
        %5480 = vmatprep.subr.mxu0 0.0
        %5481 = vmatpush1.msra.mxu0 0.0
        %5482 = vmatprep.subr.mxu0 0.0
        %5483 = vmatpush1.msra.mxu0 0.0
        %5484 = vmatprep.subr.mxu0 0.0
        %5485 = vmatpush1.msra.mxu0 0.0
        %5486 = vmatprep.subr.mxu0 0.0
        %5487 = vmatpush1.msra.mxu0 0.0
        %5488 = vmatprep.subr.mxu0 0.0
        %5489 = vmatpush1.msra.mxu0 0.0
        %5490 = vmatprep.subr.mxu0 0.0
        %5491 = vmatpush1.msra.mxu0 0.0
        %5492 = vmatprep.subr.mxu0 0.0
        %5493 = vmatpush1.msra.mxu0 0.0
        %5494 = vmatprep.subr.mxu0 0.0
        %5495 = vmatpush1.msra.mxu0 0.0
        %5496 = vmatprep.subr.mxu0 0.0
        %5497 = vmatpush1.msra.mxu0 0.0
        %5498 = vmatprep.subr.mxu0 0.0
        %5499 = vmatpush1.msra.mxu0 0.0
        %5500 = vmatprep.subr.mxu0 0.0
        %5501 = vmatpush1.msra.mxu0 0.0
        %5502 = vmatprep.subr.mxu0 0.0
        %5503 = vmatpush1.msra.mxu0 0.0
        %5504 = vmatprep.subr.mxu0 0.0
        %5505 = vmatpush1.msra.mxu0 0.0
        %5506 = vmatprep.subr.mxu0 0.0
        %5507 = vmatpush1.msra.mxu0 0.0
        %5508 = vmatprep.subr.mxu0 0.0
        %5509 = vmatpush1.msra.mxu0 0.0
        %5510 = vmatprep.subr.mxu0 0.0
        %5511 = vmatpush1.msra.mxu0 0.0
        %5512 = vmatprep.mubr.f32.mxu0 0.0
        %v5513 = vand.u32 %v5268, 4294901760
        %v5514 = vsub.f32 %v5268, %v5513
        %5515 = vmatmul.mubr.f32.gmra.mrb[0].mxu0 %v5514
        %v5516 = vpop.f32.mrb[0].mxu0
        %v5517 = vadd.f32 %v5437, %v5516
        %v5518 = vpop.f32.mrb[0].mxu0
        %5519 = vdwg.mxu0
        %5520 = vmatprep.subr.mxu0 0.0
        %v5521 = vand.u32 %v5256, 4294901760
        %5522 = vmatpush1.msra.mxu0 %v5521
        %5523 = vmatprep.subr.mxu0 0.0
        %v5524 = vand.u32 %v5257, 4294901760
        %5525 = vmatpush1.msra.mxu0 %v5524
        %5526 = vmatprep.subr.mxu0 0.0
        %v5527 = vand.u32 %v5258, 4294901760
        %5528 = vmatpush1.msra.mxu0 %v5527
        %5529 = vmatprep.subr.mxu0 0.0
        %v5530 = vand.u32 %v5259, 4294901760
        %5531 = vmatpush1.msra.mxu0 %v5530
        %5532 = vmatprep.subr.mxu0 0.0
        %5533 = vmatpush1.msra.mxu0 0.0
        %5534 = vmatprep.subr.mxu0 0.0
        %5535 = vmatpush1.msra.mxu0 0.0
        %5536 = vmatprep.subr.mxu0 0.0
        %5537 = vmatpush1.msra.mxu0 0.0
        %5538 = vmatprep.subr.mxu0 0.0
        %5539 = vmatpush1.msra.mxu0 0.0
        %5540 = vmatprep.subr.mxu0 0.0
        %5541 = vmatpush1.msra.mxu0 0.0
        %5542 = vmatprep.subr.mxu0 0.0
        %5543 = vmatpush1.msra.mxu0 0.0
        %5544 = vmatprep.subr.mxu0 0.0
        %5545 = vmatpush1.msra.mxu0 0.0
        %5546 = vmatprep.subr.mxu0 0.0
        %5547 = vmatpush1.msra.mxu0 0.0
        %5548 = vmatprep.subr.mxu0 0.0
        %5549 = vmatpush1.msra.mxu0 0.0
        %5550 = vmatprep.subr.mxu0 0.0
        %5551 = vmatpush1.msra.mxu0 0.0
        %5552 = vmatprep.subr.mxu0 0.0
        %5553 = vmatpush1.msra.mxu0 0.0
        %5554 = vmatprep.subr.mxu0 0.0
        %5555 = vmatpush1.msra.mxu0 0.0
        %5556 = vmatprep.subr.mxu0 0.0
        %5557 = vmatpush1.msra.mxu0 0.0
        %5558 = vmatprep.subr.mxu0 0.0
        %5559 = vmatpush1.msra.mxu0 0.0
        %5560 = vmatprep.subr.mxu0 0.0
        %5561 = vmatpush1.msra.mxu0 0.0
        %5562 = vmatprep.subr.mxu0 0.0
        %5563 = vmatpush1.msra.mxu0 0.0
        %5564 = vmatprep.subr.mxu0 0.0
        %5565 = vmatpush1.msra.mxu0 0.0
        %5566 = vmatprep.subr.mxu0 0.0
        %5567 = vmatpush1.msra.mxu0 0.0
        %5568 = vmatprep.subr.mxu0 0.0
        %5569 = vmatpush1.msra.mxu0 0.0
        %5570 = vmatprep.subr.mxu0 0.0
        %5571 = vmatpush1.msra.mxu0 0.0
        %5572 = vmatprep.subr.mxu0 0.0
        %5573 = vmatpush1.msra.mxu0 0.0
        %5574 = vmatprep.subr.mxu0 0.0
        %5575 = vmatpush1.msra.mxu0 0.0
        %5576 = vmatprep.subr.mxu0 0.0
        %5577 = vmatpush1.msra.mxu0 0.0
        %5578 = vmatprep.subr.mxu0 0.0
        %5579 = vmatpush1.msra.mxu0 0.0
        %5580 = vmatprep.subr.mxu0 0.0
        %5581 = vmatpush1.msra.mxu0 0.0
        %5582 = vmatprep.subr.mxu0 0.0
        %5583 = vmatpush1.msra.mxu0 0.0
        %5584 = vmatprep.subr.mxu0 0.0
        %5585 = vmatpush1.msra.mxu0 0.0
        %5586 = vmatprep.subr.mxu0 0.0
        %5587 = vmatpush1.msra.mxu0 0.0
        %5588 = vmatprep.mubr.f32.mxu0 0.0
        %v5589 = vand.u32 %v5268, 4294901760
        %v5590 = vsub.f32 %v5268, %v5589
        %v5591 = vand.u32 %v5590, 4294901760
        %5592 = vmatmul.mubr.f32.gmra.mrb[0].mxu0 %v5591
        %v5593 = vpop.f32.mrb[0].mxu0
        %v5594 = vadd.f32 %v5517, %v5593
        %v5595 = vpop.f32.mrb[0].mxu0
        %5596 = vdwg.mxu0
        %5597 = vmatprep.subr.mxu0 0.0
        %v5598 = vand.u32 %v5256, 4294901760
        %v5599 = vsub.f32 %v5256, %v5598
        %v5600 = vand.u32 %v5599, 4294901760
        %5601 = vmatpush1.msra.mxu0 %v5600
        %5602 = vmatprep.subr.mxu0 0.0
        %v5603 = vand.u32 %v5257, 4294901760
        %v5604 = vsub.f32 %v5257, %v5603
        %v5605 = vand.u32 %v5604, 4294901760
        %5606 = vmatpush1.msra.mxu0 %v5605
        %5607 = vmatprep.subr.mxu0 0.0
        %v5608 = vand.u32 %v5258, 4294901760
        %v5609 = vsub.f32 %v5258, %v5608
        %v5610 = vand.u32 %v5609, 4294901760
        %5611 = vmatpush1.msra.mxu0 %v5610
        %5612 = vmatprep.subr.mxu0 0.0
        %v5613 = vand.u32 %v5259, 4294901760
        %v5614 = vsub.f32 %v5259, %v5613
        %v5615 = vand.u32 %v5614, 4294901760
        %5616 = vmatpush1.msra.mxu0 %v5615
        %5617 = vmatprep.subr.mxu0 0.0
        %5618 = vmatpush1.msra.mxu0 0.0
        %5619 = vmatprep.subr.mxu0 0.0
        %5620 = vmatpush1.msra.mxu0 0.0
        %5621 = vmatprep.subr.mxu0 0.0
        %5622 = vmatpush1.msra.mxu0 0.0
        %5623 = vmatprep.subr.mxu0 0.0
        %5624 = vmatpush1.msra.mxu0 0.0
        %5625 = vmatprep.subr.mxu0 0.0
        %5626 = vmatpush1.msra.mxu0 0.0
        %5627 = vmatprep.subr.mxu0 0.0
        %5628 = vmatpush1.msra.mxu0 0.0
        %5629 = vmatprep.subr.mxu0 0.0
        %5630 = vmatpush1.msra.mxu0 0.0
        %5631 = vmatprep.subr.mxu0 0.0
        %5632 = vmatpush1.msra.mxu0 0.0
        %5633 = vmatprep.subr.mxu0 0.0
        %5634 = vmatpush1.msra.mxu0 0.0
        %5635 = vmatprep.subr.mxu0 0.0
        %5636 = vmatpush1.msra.mxu0 0.0
        %5637 = vmatprep.subr.mxu0 0.0
        %5638 = vmatpush1.msra.mxu0 0.0
        %5639 = vmatprep.subr.mxu0 0.0
        %5640 = vmatpush1.msra.mxu0 0.0
        %5641 = vmatprep.subr.mxu0 0.0
        %5642 = vmatpush1.msra.mxu0 0.0
        %5643 = vmatprep.subr.mxu0 0.0
        %5644 = vmatpush1.msra.mxu0 0.0
        %5645 = vmatprep.subr.mxu0 0.0
        %5646 = vmatpush1.msra.mxu0 0.0
        %5647 = vmatprep.subr.mxu0 0.0
        %5648 = vmatpush1.msra.mxu0 0.0
        %5649 = vmatprep.subr.mxu0 0.0
        %5650 = vmatpush1.msra.mxu0 0.0
        %5651 = vmatprep.subr.mxu0 0.0
        %5652 = vmatpush1.msra.mxu0 0.0
        %5653 = vmatprep.subr.mxu0 0.0
        %5654 = vmatpush1.msra.mxu0 0.0
        %5655 = vmatprep.subr.mxu0 0.0
        %5656 = vmatpush1.msra.mxu0 0.0
        %5657 = vmatprep.subr.mxu0 0.0
        %5658 = vmatpush1.msra.mxu0 0.0
        %5659 = vmatprep.subr.mxu0 0.0
        %5660 = vmatpush1.msra.mxu0 0.0
        %5661 = vmatprep.subr.mxu0 0.0
        %5662 = vmatpush1.msra.mxu0 0.0
        %5663 = vmatprep.subr.mxu0 0.0
        %5664 = vmatpush1.msra.mxu0 0.0
        %5665 = vmatprep.subr.mxu0 0.0
        %5666 = vmatpush1.msra.mxu0 0.0
        %5667 = vmatprep.subr.mxu0 0.0
        %5668 = vmatpush1.msra.mxu0 0.0
        %5669 = vmatprep.subr.mxu0 0.0
        %5670 = vmatpush1.msra.mxu0 0.0
        %5671 = vmatprep.subr.mxu0 0.0
        %5672 = vmatpush1.msra.mxu0 0.0
        %5673 = vmatprep.mubr.f32.mxu0 0.0
        %v5674 = vand.u32 %v5268, 4294901760
        %5675 = vmatmul.mubr.f32.gmra.mrb[0].mxu0 %v5674
        %v5676 = vpop.f32.mrb[0].mxu0
        %v5677 = vadd.f32 %v5594, %v5676
        %v5678 = vpop.f32.mrb[0].mxu0
        %5679 = vdwg.mxu0
        %5680 = vmatprep.subr.mxu0 0.0
        %v5681 = vand.u32 %v5256, 4294901760
        %5682 = vmatpush1.msra.mxu0 %v5681
        %5683 = vmatprep.subr.mxu0 0.0
        %v5684 = vand.u32 %v5257, 4294901760
        %5685 = vmatpush1.msra.mxu0 %v5684
        %5686 = vmatprep.subr.mxu0 0.0
        %v5687 = vand.u32 %v5258, 4294901760
        %5688 = vmatpush1.msra.mxu0 %v5687
        %5689 = vmatprep.subr.mxu0 0.0
        %v5690 = vand.u32 %v5259, 4294901760
        %5691 = vmatpush1.msra.mxu0 %v5690
        %5692 = vmatprep.subr.mxu0 0.0
        %5693 = vmatpush1.msra.mxu0 0.0
        %5694 = vmatprep.subr.mxu0 0.0
        %5695 = vmatpush1.msra.mxu0 0.0
        %5696 = vmatprep.subr.mxu0 0.0
        %5697 = vmatpush1.msra.mxu0 0.0
        %5698 = vmatprep.subr.mxu0 0.0
        %5699 = vmatpush1.msra.mxu0 0.0
        %5700 = vmatprep.subr.mxu0 0.0
        %5701 = vmatpush1.msra.mxu0 0.0
        %5702 = vmatprep.subr.mxu0 0.0
        %5703 = vmatpush1.msra.mxu0 0.0
        %5704 = vmatprep.subr.mxu0 0.0
        %5705 = vmatpush1.msra.mxu0 0.0
        %5706 = vmatprep.subr.mxu0 0.0
        %5707 = vmatpush1.msra.mxu0 0.0
        %5708 = vmatprep.subr.mxu0 0.0
        %5709 = vmatpush1.msra.mxu0 0.0
        %5710 = vmatprep.subr.mxu0 0.0
        %5711 = vmatpush1.msra.mxu0 0.0
        %5712 = vmatprep.subr.mxu0 0.0
        %5713 = vmatpush1.msra.mxu0 0.0
        %5714 = vmatprep.subr.mxu0 0.0
        %5715 = vmatpush1.msra.mxu0 0.0
        %5716 = vmatprep.subr.mxu0 0.0
        %5717 = vmatpush1.msra.mxu0 0.0
        %5718 = vmatprep.subr.mxu0 0.0
        %5719 = vmatpush1.msra.mxu0 0.0
        %5720 = vmatprep.subr.mxu0 0.0
        %5721 = vmatpush1.msra.mxu0 0.0
        %5722 = vmatprep.subr.mxu0 0.0
        %5723 = vmatpush1.msra.mxu0 0.0
        %5724 = vmatprep.subr.mxu0 0.0
        %5725 = vmatpush1.msra.mxu0 0.0
        %5726 = vmatprep.subr.mxu0 0.0
        %5727 = vmatpush1.msra.mxu0 0.0
        %5728 = vmatprep.subr.mxu0 0.0
        %5729 = vmatpush1.msra.mxu0 0.0
        %5730 = vmatprep.subr.mxu0 0.0
        %5731 = vmatpush1.msra.mxu0 0.0
        %5732 = vmatprep.subr.mxu0 0.0
        %5733 = vmatpush1.msra.mxu0 0.0
        %5734 = vmatprep.subr.mxu0 0.0
        %5735 = vmatpush1.msra.mxu0 0.0
        %5736 = vmatprep.subr.mxu0 0.0
        %5737 = vmatpush1.msra.mxu0 0.0
        %5738 = vmatprep.subr.mxu0 0.0
        %5739 = vmatpush1.msra.mxu0 0.0
        %5740 = vmatprep.subr.mxu0 0.0
        %5741 = vmatpush1.msra.mxu0 0.0
        %5742 = vmatprep.subr.mxu0 0.0
        %5743 = vmatpush1.msra.mxu0 0.0
        %5744 = vmatprep.subr.mxu0 0.0
        %5745 = vmatpush1.msra.mxu0 0.0
        %5746 = vmatprep.subr.mxu0 0.0
        %5747 = vmatpush1.msra.mxu0 0.0
        %5748 = vmatprep.mubr.f32.mxu0 0.0
        %v5749 = vand.u32 %v5268, 4294901760
        %5750 = vmatmul.mubr.f32.gmra.mrb[0].mxu0 %v5749
        %v5751 = vpop.f32.mrb[0].mxu0
        %v5752 = vadd.f32 %v5677, %v5751
        %v5753 = vpop.f32.mrb[0].mxu0
        %5754 = vdwg.mxu0
        %v5755 = vadd.f32 %v5752, %v553
        %v5756 = vsel %vm567, %v5755, 0.0
        %5757 = vadd.xlane.f32.xlu0 %v5756
        %v5758 = vpop.xlane.xlu0 %5757
        %v5759 = vrcp.pop 32.0
        %v5760 = vmul.f32 %v5758, %v5759
        %v5761 = vsub.f32 %v5755, %v5760
        %v5762 = vmul.f32 %v5761, %v5761
        %v5763 = vsel %vm567, %v5762, 0.0
        %5764 = vadd.xlane.f32.xlu0 %v5763
        %v5765 = vpop.xlane.xlu0 %5764
        %v5766 = vmul.f32 %v5765, %v5759
        %v5767 = vadd.f32 %v5766, 1e-12
        %v5768 = vrsqrt.pop %v5767
        %v5769 = vmul.f32 %v5761, %v5768
        %v5770 = vld [vmem:[%s9] sm:$0x1]
        %v5772 = vlaneseq
        %v5773 = vshrl.u32 %v5772, 7
        %v5774 = vsub.s32 0, %v5773
        %v5775 = vrot.slane %v5770, %v5774
        %v5777 = vmul.f32 %v5775, %v5769
        %v5778 = vld [vmem:[%s10] sm:$0x1]
        %v5780 = vlaneseq
        %v5781 = vshrl.u32 %v5780, 7
        %v5782 = vsub.s32 0, %v5781
        %v5783 = vrot.slane %v5778, %v5782
        %v5785 = vadd.f32 %v5777, %v5783
        %5786 = vst.msk [vmem:[%s542] sm:$0xff] %vm567, %v5785
        %s5787 = sand.u32 %s307, 1
        %s5788 = scalar_lea.sflag [#allocation5], %s5787
        %s5789 = sand.u32 %s307, 1
        %s5790 = smul.addr %s5789, 8
        %s5791 = scalar_lea.vmem [#allocation12], %s5790
        %s5792 = sand.u32 %s335, 1
        %s5793 = scalar_lea.sflag [#allocation14], %s5792
        %s5794 = sand.u32 %s335, 1
        %s5795 = smul.addr %s5794, 32
        %s5796 = scalar_lea.vmem [#allocation13], %s5795
        // Predicated region
        $region85: #{tpu_custom_call.1} parent=63 // pred_check
          %p5797 = pneg %p317
        $region86: #{tpu_custom_call.1} parent=63 // pred_check_branch
          %5799 = sbr.rel (%p5797) target = $region88
        $region87: #{tpu_custom_call.1} parent=63 // pred_region
          %s5801 = ssub.s32 128, 128
          %5802 = vsyncadd %s5788, %s5801
          %s5803 = sadd.s32 %s42, %s41
          %s5804 = smul.addr %s5803, 128
          %s5805 = scalar_lea.hbm %s11, %s5804
          %s5807 = sshll.u32 %s5791, 4
          %s5808 = int_to_ptr.vmem [resolvable:$true] %s5807
          %5810 = dma.vmem_to_hbm [thread:$0]  %s5808, 128, %s5805, %s5788
        $region88: #{tpu_custom_call.1} parent=63 // pred_fallthru
          _
        // Predicated region
        $region89: #{tpu_custom_call.1} parent=63 // pred_check
          %p5811 = pneg %p345
        $region90: #{tpu_custom_call.1} parent=63 // pred_check_branch
          %5813 = sbr.rel (%p5811) target = $region92
        $region91: #{tpu_custom_call.1} parent=63 // pred_region
          %s5815 = ssub.s32 512, 512
          %5816 = vsyncadd %s5793, %s5815
          %s5817 = smul.addr %s41, 4
          %s5818 = sadd.s32 %s42, %s5817
          %s5819 = smul.addr %s5818, 128
          %s5820 = scalar_lea.hbm %s12, %s5819
          %s5821 = sshll.u32 %s5796, 4
          %s5822 = int_to_ptr.vmem [resolvable:$true] %s5821
          %5827 = dma.vmem_to_hbm [thread:$0]  %s5822, 512, %s5820, %s5793, 128, 128, 8
        $region92: #{tpu_custom_call.1} parent=63 // pred_fallthru
          _
      $region64: #{tpu_custom_call.1} parent=5 // pred_fallthru
        _
      %p5828 = scmp.le.s32.totalorder 2, %s32
      // Predicated region
      $region93: #{tpu_custom_call.1} parent=5 // pred_check
        %p5829 = pneg %p5828
      $region94: #{tpu_custom_call.1} parent=5 // pred_check_branch
        %5831 = sbr.rel (%p5829) target = $region96
      $region95: #{tpu_custom_call.1} parent=5 // pred_region
        %s5832 = ssub.s32 %s32, 2
        // Predicated region
        $region97: #{tpu_custom_call.1} parent=95 // pred_check
          %p5833 = pneg %p323
        $region98: #{tpu_custom_call.1} parent=95 // pred_check_branch
          %5835 = sbr.rel (%p5833) target = $region100
        $region99: #{tpu_custom_call.1} parent=95 // pred_region
          %s5836 = sand.u32 %s308, 1
          %s5837 = scalar_lea.sflag [#allocation5], %s5836
          %s5838 = sand.u32 %s308, 1
          %s5839 = smul.addr %s5838, 8
          %s5840 = scalar_lea.vmem [#allocation12], %s5839
          %5841 = dma.done %s5837, 128
        $region100: #{tpu_custom_call.1} parent=95 // pred_fallthru
          _
        // Predicated region
        $region101: #{tpu_custom_call.1} parent=95 // pred_check
          %p5842 = pneg %p351
        $region102: #{tpu_custom_call.1} parent=95 // pred_check_branch
          %5844 = sbr.rel (%p5842) target = $region104
        $region103: #{tpu_custom_call.1} parent=95 // pred_region
          %s5845 = sand.u32 %s336, 1
          %s5846 = scalar_lea.sflag [#allocation14], %s5845
          %s5847 = sand.u32 %s336, 1
          %s5848 = smul.addr %s5847, 32
          %s5849 = scalar_lea.vmem [#allocation13], %s5848
          %5850 = dma.done %s5846, 512
        $region104: #{tpu_custom_call.1} parent=95 // pred_fallthru
          _
      $region96: #{tpu_custom_call.1} parent=5 // pred_fallthru
        _
    $region6: #{tpu_custom_call.1} parent=1 // loop_footer
      %s36 = sadd.s32 1, %s32
    $region7: #{tpu_custom_call.1} parent=1 // loop_footer_branch
      %31 = sbr.rel target = $region3
    $region8: #{tpu_custom_call.1} parent=1 // loop_exit
      _
    %5851 = vsyncpa [#allocation4], 1
    %s5852 = scalar_lea.sflag [#allocation4], 1
    %5853 = vsyncpa %s5852, 1
    %5854 = vsyncpa [#allocation7], 1
    %s5855 = scalar_lea.sflag [#allocation7], 1
    %5856 = vsyncpa %s5855, 1
    %5857 = vsyncpa [#allocation10], 1
    %5858 = vsyncpa [#allocation5], 1
    %s5859 = scalar_lea.sflag [#allocation5], 1
    %5860 = vsyncpa %s5859, 1
    %5861 = vsyncpa [#allocation14], 1
    %s5862 = scalar_lea.sflag [#allocation14], 1
    %5863 = vsyncpa %s5862, 1

</llo_original>
